<compile_context>
chip_gen: v7x
topology: tpu7x:2x2x1
jax: 0.10.0
libtpu: 0.0.40
codegen_flags: <defaults>
</compile_context>

<pallas_src>
import functools

import numpy as np
import jax
import jax.numpy as jnp
from jax.experimental import pallas as pl
from jax.experimental.pallas import tpu as pltpu

# Make both the Pallas matmuls and the XLA reference convs use full f32
# precision so the correctness check can be tight.
jax.config.update("jax_default_matmul_precision", "highest")


# --------------------------------------------------------------------------
# Parameter helpers (plain JAX — deterministic preprocessing, not the forward
# hot path).
# --------------------------------------------------------------------------
def weight_norm(v: jnp.ndarray, g: jnp.ndarray) -> jnp.ndarray:
    """PyTorch nn.utils.weight_norm (dim=0) for a Conv1d weight (Cout, Cin, K)."""
    norm = jnp.sqrt(jnp.sum(v * v, axis=(1, 2), keepdims=True))
    return v * (g.reshape(-1, 1, 1) / norm)


# --------------------------------------------------------------------------
# Pallas kernel: one batch element per grid step, fully fused TCN block.
# --------------------------------------------------------------------------
def _tcn_block_kernel(xp_ref, w1_ref, b1_ref, w2_ref, b2_ref, wr_ref, br_ref,
                      o_ref, h1p_ref, *, K, dilation, pad, L, Lout):
    # xp_ref : (L + 2*pad, Cin)   zero-padded input, channels-last, one sample
    # w1_ref : (K, Cin, Cout)     per-tap conv1 weights ; b1_ref: (1, Cout)
    # w2_ref : (K, Cout, Cout)    per-tap conv2 weights ; b2_ref: (1, Cout)
    # wr_ref : (Cin, Cout)        1x1 residual conv     ; br_ref: (1, Cout)
    # o_ref  : (Lout, Cout)       Lout = L + pad
    # h1p_ref: VMEM scratch (Lout + 2*pad, Cout) f32  (conv1 output, zero-padded)
    cout = w1_ref.shape[2]

    # ---- conv1 (dilated) as K shifted matmuls, f32 accumulation, then ReLU ----
    acc1 = jnp.zeros((Lout, cout), jnp.float32)
    for t in range(K):
        acc1 += jnp.dot(xp_ref[t * dilation: t * dilation + Lout, :],
                        w1_ref[t], preferred_element_type=jnp.float32)
    h1 = jnp.maximum(acc1 + b1_ref[...], 0.0)
    # TODO(synk): dropout is treated as identity (inference semantics); training
    # dropout would need pltpu.prng_seed / prng_random_bits.

    # ---- stage conv1 output into a zero-padded VMEM scratch for conv2 ----
    if pad > 0:
        h1p_ref[0:pad, :] = jnp.zeros((pad, cout), jnp.float32)
        h1p_ref[pad + Lout: Lout + 2 * pad, :] = jnp.zeros((pad, cout), jnp.float32)
    h1p_ref[pad: pad + Lout, :] = h1

    # ---- conv2 (dilated) + ReLU; computing only the first Lout positions is
    #      exactly the chomp `out[:, :, :-pad]` of the module ----
    acc2 = jnp.zeros((Lout, cout), jnp.float32)
    for t in range(K):
        acc2 += jnp.dot(h1p_ref[t * dilation: t * dilation + Lout, :],
                        w2_ref[t], preferred_element_type=jnp.float32)
    out2 = jnp.maximum(acc2 + b2_ref[...], 0.0)

    # ---- residual 1x1 conv on the original (un-padded) x, zero-extended ----
    # xp rows [pad, pad+L) are the real input; rows [pad+L, pad+Lout) are zeros,
    # matching torch's zero-concatenation of the residual (no bias there).
    r = jnp.dot(xp_ref[pad: pad + Lout, :], wr_ref[...],
                preferred_element_type=jnp.float32)
    rows = jax.lax.broadcasted_iota(jnp.int32, r.shape, 0)
    r = jnp.where(rows < L, r + br_ref[...], 0.0)

    o_ref[...] = jnp.maximum(out2 + r, 0.0).astype(o_ref.dtype)


# --------------------------------------------------------------------------
# Wrapper
# --------------------------------------------------------------------------
def tcn_block_forward(x, w1, b1, w2, b2, wr, br, *, kernel_size, dilation):
    """TCNBlock forward.

    x  : (B, Cin, L) float32 (torch Conv1d layout)
    w1 : (Cout, Cin, K), b1: (Cout,)      -- already weight-normed
    w2 : (Cout, Cout, K), b2: (Cout,)     -- already weight-normed
    wr : (Cout, Cin, 1), br: (Cout,)      -- residual 1x1 conv; pass an identity
                                             matrix / zeros when in_ch == out_ch
    returns (B, Cout, L + pad) with pad = (K-1)*dilation, like the torch module.
    """
    B, Cin, L = x.shape
    Cout = w1.shape[0]
    K = kernel_size
    pad = (K - 1) * dilation
    Lout = L + pad           # module's output length (chomped once)
    Lx = L + 2 * pad         # conv1 input length after symmetric zero padding

    # Glue (XLA): channels-last + zero-pad the time axis for conv1's padding.
    x_cl = jnp.transpose(x, (0, 2, 1))                     # (B, L, Cin)
    xp = jnp.pad(x_cl, ((0, 0), (pad, pad), (0, 0)))       # (B, Lx, Cin)

    w1_t = jnp.transpose(w1, (2, 1, 0))                    # (K, Cin, Cout)
    w2_t = jnp.transpose(w2, (2, 1, 0))                    # (K, Cout, Cout)
    wr_t = jnp.transpose(wr[:, :, 0], (1, 0))              # (Cin, Cout)
    b1_r = b1.reshape(1, Cout)
    b2_r = b2.reshape(1, Cout)
    br_r = br.reshape(1, Cout)

    kernel = functools.partial(_tcn_block_kernel, K=K, dilation=dilation,
                               pad=pad, L=L, Lout=Lout)

    out_cl = pl.pallas_call(
        kernel,
        out_shape=jax.ShapeDtypeStruct((B, Lout, Cout), x.dtype),
        grid_spec=pltpu.PrefetchScalarGridSpec(
            num_scalar_prefetch=0,
            grid=(B,),
            in_specs=[
                # one full sample per grid step; batch dim squeezed away
                pl.BlockSpec((pl.Squeezed(), Lx, Cin), lambda b: (b, 0, 0)),
                # weights/biases: constant block index -> stay resident
                pl.BlockSpec((K, Cin, Cout), lambda b: (0, 0, 0)),
                pl.BlockSpec((1, Cout), lambda b: (0, 0)),
                pl.BlockSpec((K, Cout, Cout), lambda b: (0, 0, 0)),
                pl.BlockSpec((1, Cout), lambda b: (0, 0)),
                pl.BlockSpec((Cin, Cout), lambda b: (0, 0)),
                pl.BlockSpec((1, Cout), lambda b: (0, 0)),
            ],
            out_specs=pl.BlockSpec((pl.Squeezed(), Lout, Cout),
                                   lambda b: (b, 0, 0)),
            scratch_shapes=[pltpu.VMEM((Lout + 2 * pad, Cout), jnp.float32)],
        ),
        compiler_params=pltpu.CompilerParams(
            # batch axis is independent -> shard across the 2 TCs on v7x
            dimension_semantics=("parallel",),
        ),
    )(xp, w1_t, b1_r, w2_t, b2_r, wr_t, br_r)

    return jnp.transpose(out_cl, (0, 2, 1))                # (B, Cout, Lout)


# --------------------------------------------------------------------------
# Pure-JAX reference (independent formulation via lax.conv_general_dilated),
# mirroring the torch forward exactly.
# --------------------------------------------------------------------------
def tcn_block_ref(x, w1, b1, w2, b2, wr, br, *, kernel_size, dilation):
    pad = (kernel_size - 1) * dilation
    dn = ("NCH", "OIH", "NCH")

    def dconv(inp, w, b):
        out = jax.lax.conv_general_dilated(
            inp, w, window_strides=(1,), padding=[(pad, pad)],
            rhs_dilation=(dilation,), dimension_numbers=dn)
        return out + b[None, :, None]

    out = jax.nn.relu(dconv(x, w1, b1))          # dropout = identity
    out = jax.nn.relu(dconv(out, w2, b2))        # dropout = identity
    if pad > 0:
        out = out[:, :, : out.shape[2] - pad]    # chomp
    res = jax.lax.conv_general_dilated(
        x, wr, window_strides=(1,), padding=[(0, 0)],
        rhs_dilation=(1,), dimension_numbers=dn) + br[None, :, None]
    if res.shape[2] < out.shape[2]:
        res = jnp.pad(res, ((0, 0), (0, 0), (0, out.shape[2] - res.shape[2])))
    return jax.nn.relu(out + res)


if __name__ == "__main__":
    B, Cin, Cout, L = 2, 4, 32, 16
    K, dilation = 3, 2

    key = jax.random.PRNGKey(0)
    keys = jax.random.split(key, 9)
    x = jax.random.normal(keys[0], (B, Cin, L), dtype=jnp.float32)

    # weight-normed conv weights (v, g) in torch layout (Cout, Cin, K)
    v1 = jax.random.normal(keys[1], (Cout, Cin, K), jnp.float32)
    g1 = jax.random.uniform(keys[2], (Cout,), jnp.float32, minval=0.5, maxval=1.5)
    v2 = jax.random.normal(keys[3], (Cout, Cout, K), jnp.float32)
    g2 = jax.random.uniform(keys[4], (Cout,), jnp.float32, minval=0.5, maxval=1.5)
    w1 = weight_norm(v1, g1)
    w2 = weight_norm(v2, g2)
    b1 = 0.1 * jax.random.normal(keys[5], (Cout,), jnp.float32)
    b2 = 0.1 * jax.random.normal(keys[6], (Cout,), jnp.float32)
    wr = 0.3 * jax.random.normal(keys[7], (Cout, Cin, 1), jnp.float32)
    br = 0.1 * jax.random.normal(keys[8], (Cout,), jnp.float32)

    out = tcn_block_forward(x, w1, b1, w2, b2, wr, br,
                            kernel_size=K, dilation=dilation)
    out = jax.block_until_ready(out)

    ref = tcn_block_ref(x, w1, b1, w2, b2, wr, br,
                        kernel_size=K, dilation=dilation)
    np.testing.assert_allclose(np.asarray(out), np.asarray(ref),
                               rtol=1e-4, atol=1e-4)

    print("KERNEL_OK")
</pallas_src>

<mosaic_0001>
module attributes {stable_mosaic.version = 11 : i64} {
  func.func @_tcn_block_kernel(%arg0: i32, %arg1: memref<1x24x4xf32, #tpu.memory_space<vmem>>, %arg2: memref<3x4x32xf32, #tpu.memory_space<vmem>>, %arg3: memref<1x32xf32, #tpu.memory_space<vmem>>, %arg4: memref<3x32x32xf32, #tpu.memory_space<vmem>>, %arg5: memref<1x32xf32, #tpu.memory_space<vmem>>, %arg6: memref<4x32xf32, #tpu.memory_space<vmem>>, %arg7: memref<1x32xf32, #tpu.memory_space<vmem>>, %arg8: memref<1x20x32xf32, #tpu.memory_space<vmem>>, %arg9: memref<28x32xf32, #tpu.memory_space<vmem>>) attributes {dimension_semantics = [#tpu.dimension_semantics<parallel>], iteration_bounds = array<i64: 2>, scalar_prefetch = 0 : i64, scratch_operands = 1 : i64, tpu.core_type = #tpu.core_type<tc>, window_params = [{transform_indices = @transform_0, window_bounds = array<i64: 1, 24, 4>}, {pipeline_mode = #tpu.pipeline_mode<synchronous>, transform_indices = @transform_1, window_bounds = array<i64: 3, 4, 32>}, {pipeline_mode = #tpu.pipeline_mode<synchronous>, transform_indices = @transform_2, window_bounds = array<i64: 1, 32>}, {pipeline_mode = #tpu.pipeline_mode<synchronous>, transform_indices = @transform_3, window_bounds = array<i64: 3, 32, 32>}, {pipeline_mode = #tpu.pipeline_mode<synchronous>, transform_indices = @transform_4, window_bounds = array<i64: 1, 32>}, {pipeline_mode = #tpu.pipeline_mode<synchronous>, transform_indices = @transform_5, window_bounds = array<i64: 4, 32>}, {pipeline_mode = #tpu.pipeline_mode<synchronous>, transform_indices = @transform_6, window_bounds = array<i64: 1, 32>}, {transform_indices = @transform_7, window_bounds = array<i64: 1, 20, 32>}]} {
    %cst = arith.constant 0.000000e+00 : f32
    %0 = vector.broadcast %cst : f32 to vector<20x32xf32>
    %c0 = arith.constant 0 : index
    %c0_0 = arith.constant 0 : index
    %c0_1 = arith.constant 0 : index
    %1 = vector.load %arg1[%c0, %c0_0, %c0_1] : memref<1x24x4xf32, #tpu.memory_space<vmem>>, vector<1x20x4xf32>
    %2 = vector.shape_cast %1 : vector<1x20x4xf32> to vector<20x4xf32>
    %c0_2 = arith.constant 0 : index
    %c0_3 = arith.constant 0 : index
    %c0_4 = arith.constant 0 : index
    %3 = vector.load %arg2[%c0_2, %c0_3, %c0_4] : memref<3x4x32xf32, #tpu.memory_space<vmem>>, vector<1x4x32xf32>
    %4 = vector.shape_cast %3 : vector<1x4x32xf32> to vector<4x32xf32>
    %cst_5 = arith.constant dense<0.000000e+00> : vector<20x32xf32>
    %5 = tpu.matmul %2, %4, %cst_5 {dimension_numbers = #tpu.dot_dimension_numbers<[1], [0], [0], [1], [0, 0, 1, 1], [], []>, precision = #tpu.contract_precision<fp32>} : vector<20x4xf32>, vector<4x32xf32>, vector<20x32xf32> -> vector<20x32xf32>
    %6 = arith.addf %0, %5 : vector<20x32xf32>
    %c0_6 = arith.constant 0 : index
    %c2 = arith.constant 2 : index
    %c0_7 = arith.constant 0 : index
    %7 = vector.load %arg1[%c0_6, %c2, %c0_7] : memref<1x24x4xf32, #tpu.memory_space<vmem>>, vector<1x20x4xf32>
    %8 = vector.shape_cast %7 : vector<1x20x4xf32> to vector<20x4xf32>
    %c1 = arith.constant 1 : index
    %c0_8 = arith.constant 0 : index
    %c0_9 = arith.constant 0 : index
    %9 = vector.load %arg2[%c1, %c0_8, %c0_9] : memref<3x4x32xf32, #tpu.memory_space<vmem>>, vector<1x4x32xf32>
    %10 = vector.shape_cast %9 : vector<1x4x32xf32> to vector<4x32xf32>
    %cst_10 = arith.constant dense<0.000000e+00> : vector<20x32xf32>
    %11 = tpu.matmul %8, %10, %cst_10 {dimension_numbers = #tpu.dot_dimension_numbers<[1], [0], [0], [1], [0, 0, 1, 1], [], []>, precision = #tpu.contract_precision<fp32>} : vector<20x4xf32>, vector<4x32xf32>, vector<20x32xf32> -> vector<20x32xf32>
    %12 = arith.addf %6, %11 : vector<20x32xf32>
    %c0_11 = arith.constant 0 : index
    %c4 = arith.constant 4 : index
    %c0_12 = arith.constant 0 : index
    %13 = vector.load %arg1[%c0_11, %c4, %c0_12] : memref<1x24x4xf32, #tpu.memory_space<vmem>>, vector<1x20x4xf32>
    %14 = vector.shape_cast %13 : vector<1x20x4xf32> to vector<20x4xf32>
    %c2_13 = arith.constant 2 : index
    %c0_14 = arith.constant 0 : index
    %c0_15 = arith.constant 0 : index
    %15 = vector.load %arg2[%c2_13, %c0_14, %c0_15] : memref<3x4x32xf32, #tpu.memory_space<vmem>>, vector<1x4x32xf32>
    %16 = vector.shape_cast %15 : vector<1x4x32xf32> to vector<4x32xf32>
    %cst_16 = arith.constant dense<0.000000e+00> : vector<20x32xf32>
    %17 = tpu.matmul %14, %16, %cst_16 {dimension_numbers = #tpu.dot_dimension_numbers<[1], [0], [0], [1], [0, 0, 1, 1], [], []>, precision = #tpu.contract_precision<fp32>} : vector<20x4xf32>, vector<4x32xf32>, vector<20x32xf32> -> vector<20x32xf32>
    %18 = arith.addf %12, %17 : vector<20x32xf32>
    %c0_17 = arith.constant 0 : index
    %c0_18 = arith.constant 0 : index
    %19 = vector.load %arg3[%c0_17, %c0_18] : memref<1x32xf32, #tpu.memory_space<vmem>>, vector<1x32xf32>
    %20 = vector.broadcast %19 : vector<1x32xf32> to vector<20x32xf32>
    %21 = arith.addf %18, %20 : vector<20x32xf32>
    %cst_19 = arith.constant 0.000000e+00 : f32
    %22 = vector.broadcast %cst_19 : f32 to vector<20x32xf32>
    %23 = arith.maximumf %21, %22 : vector<20x32xf32>
    %cst_20 = arith.constant 0.000000e+00 : f32
    %24 = vector.broadcast %cst_20 : f32 to vector<4x32xf32>
    %c0_21 = arith.constant 0 : index
    %c0_22 = arith.constant 0 : index
    %25 = vector.load %arg9[%c0_21, %c0_22] : memref<28x32xf32, #tpu.memory_space<vmem>>, vector<4x32xf32>
    tpu.vector_store %arg9[%c0_21, %c0_22], %24 {strides = array<i32>} : memref<28x32xf32, #tpu.memory_space<vmem>>, vector<4x32xf32>,
    %cst_23 = arith.constant 0.000000e+00 : f32
    %26 = vector.broadcast %cst_23 : f32 to vector<4x32xf32>
    %c24 = arith.constant 24 : index
    %c0_24 = arith.constant 0 : index
    %27 = vector.load %arg9[%c24, %c0_24] : memref<28x32xf32, #tpu.memory_space<vmem>>, vector<4x32xf32>
    tpu.vector_store %arg9[%c24, %c0_24], %26 {strides = array<i32>} : memref<28x32xf32, #tpu.memory_space<vmem>>, vector<4x32xf32>,
    %c4_25 = arith.constant 4 : index
    %c0_26 = arith.constant 0 : index
    %28 = vector.load %arg9[%c4_25, %c0_26] : memref<28x32xf32, #tpu.memory_space<vmem>>, vector<20x32xf32>
    tpu.vector_store %arg9[%c4_25, %c0_26], %23 {strides = array<i32>} : memref<28x32xf32, #tpu.memory_space<vmem>>, vector<20x32xf32>,
    %cst_27 = arith.constant 0.000000e+00 : f32
    %29 = vector.broadcast %cst_27 : f32 to vector<20x32xf32>
    %c0_28 = arith.constant 0 : index
    %c0_29 = arith.constant 0 : index
    %30 = vector.load %arg9[%c0_28, %c0_29] : memref<28x32xf32, #tpu.memory_space<vmem>>, vector<20x32xf32>
    %c0_30 = arith.constant 0 : index
    %c0_31 = arith.constant 0 : index
    %c0_32 = arith.constant 0 : index
    %31 = vector.load %arg4[%c0_30, %c0_31, %c0_32] : memref<3x32x32xf32, #tpu.memory_space<vmem>>, vector<1x32x32xf32>
    %32 = vector.shape_cast %31 : vector<1x32x32xf32> to vector<32x32xf32>
    %cst_33 = arith.constant dense<0.000000e+00> : vector<20x32xf32>
    %33 = tpu.matmul %30, %32, %cst_33 {dimension_numbers = #tpu.dot_dimension_numbers<[1], [0], [0], [1], [0, 0, 1, 1], [], []>, precision = #tpu.contract_precision<fp32>} : vector<20x32xf32>, vector<32x32xf32>, vector<20x32xf32> -> vector<20x32xf32>
    %34 = arith.addf %29, %33 : vector<20x32xf32>
    %c2_34 = arith.constant 2 : index
    %c0_35 = arith.constant 0 : index
    %35 = vector.load %arg9[%c2_34, %c0_35] : memref<28x32xf32, #tpu.memory_space<vmem>>, vector<20x32xf32>
    %c1_36 = arith.constant 1 : index
    %c0_37 = arith.constant 0 : index
    %c0_38 = arith.constant 0 : index
    %36 = vector.load %arg4[%c1_36, %c0_37, %c0_38] : memref<3x32x32xf32, #tpu.memory_space<vmem>>, vector<1x32x32xf32>
    %37 = vector.shape_cast %36 : vector<1x32x32xf32> to vector<32x32xf32>
    %cst_39 = arith.constant dense<0.000000e+00> : vector<20x32xf32>
    %38 = tpu.matmul %35, %37, %cst_39 {dimension_numbers = #tpu.dot_dimension_numbers<[1], [0], [0], [1], [0, 0, 1, 1], [], []>, precision = #tpu.contract_precision<fp32>} : vector<20x32xf32>, vector<32x32xf32>, vector<20x32xf32> -> vector<20x32xf32>
    %39 = arith.addf %34, %38 : vector<20x32xf32>
    %c4_40 = arith.constant 4 : index
    %c0_41 = arith.constant 0 : index
    %40 = vector.load %arg9[%c4_40, %c0_41] : memref<28x32xf32, #tpu.memory_space<vmem>>, vector<20x32xf32>
    %c2_42 = arith.constant 2 : index
    %c0_43 = arith.constant 0 : index
    %c0_44 = arith.constant 0 : index
    %41 = vector.load %arg4[%c2_42, %c0_43, %c0_44] : memref<3x32x32xf32, #tpu.memory_space<vmem>>, vector<1x32x32xf32>
    %42 = vector.shape_cast %41 : vector<1x32x32xf32> to vector<32x32xf32>
    %cst_45 = arith.constant dense<0.000000e+00> : vector<20x32xf32>
    %43 = tpu.matmul %40, %42, %cst_45 {dimension_numbers = #tpu.dot_dimension_numbers<[1], [0], [0], [1], [0, 0, 1, 1], [], []>, precision = #tpu.contract_precision<fp32>} : vector<20x32xf32>, vector<32x32xf32>, vector<20x32xf32> -> vector<20x32xf32>
    %44 = arith.addf %39, %43 : vector<20x32xf32>
    %c0_46 = arith.constant 0 : index
    %c0_47 = arith.constant 0 : index
    %45 = vector.load %arg5[%c0_46, %c0_47] : memref<1x32xf32, #tpu.memory_space<vmem>>, vector<1x32xf32>
    %46 = vector.broadcast %45 : vector<1x32xf32> to vector<20x32xf32>
    %47 = arith.addf %44, %46 : vector<20x32xf32>
    %cst_48 = arith.constant 0.000000e+00 : f32
    %48 = vector.broadcast %cst_48 : f32 to vector<20x32xf32>
    %49 = arith.maximumf %47, %48 : vector<20x32xf32>
    %c0_49 = arith.constant 0 : index
    %c4_50 = arith.constant 4 : index
    %c0_51 = arith.constant 0 : index
    %50 = vector.load %arg1[%c0_49, %c4_50, %c0_51] : memref<1x24x4xf32, #tpu.memory_space<vmem>>, vector<1x20x4xf32>
    %51 = vector.shape_cast %50 : vector<1x20x4xf32> to vector<20x4xf32>
    %c0_52 = arith.constant 0 : index
    %c0_53 = arith.constant 0 : index
    %52 = vector.load %arg6[%c0_52, %c0_53] : memref<4x32xf32, #tpu.memory_space<vmem>>, vector<4x32xf32>
    %cst_54 = arith.constant dense<0.000000e+00> : vector<20x32xf32>
    %53 = tpu.matmul %51, %52, %cst_54 {dimension_numbers = #tpu.dot_dimension_numbers<[1], [0], [0], [1], [0, 0, 1, 1], [], []>, precision = #tpu.contract_precision<fp32>} : vector<20x4xf32>, vector<4x32xf32>, vector<20x32xf32> -> vector<20x32xf32>
    %54 = tpu.iota {dimensions = array<i32: 0>} : vector<20x32xi32>
    %c16_i32 = arith.constant 16 : i32
    %55 = vector.broadcast %c16_i32 : i32 to vector<20x32xi32>
    %56 = arith.cmpi slt, %54, %55 : vector<20x32xi32>
    %c0_55 = arith.constant 0 : index
    %c0_56 = arith.constant 0 : index
    %57 = vector.load %arg7[%c0_55, %c0_56] : memref<1x32xf32, #tpu.memory_space<vmem>>, vector<1x32xf32>
    %58 = vector.broadcast %57 : vector<1x32xf32> to vector<20x32xf32>
    %59 = arith.addf %53, %58 : vector<20x32xf32>
    %cst_57 = arith.constant 0.000000e+00 : f32
    %60 = vector.broadcast %cst_57 : f32 to vector<20x32xf32>
    %61 = arith.select %56, %59, %60 : vector<20x32xi1>, vector<20x32xf32>
    %62 = arith.addf %49, %61 : vector<20x32xf32>
    %cst_58 = arith.constant 0.000000e+00 : f32
    %63 = vector.broadcast %cst_58 : f32 to vector<20x32xf32>
    %64 = arith.maximumf %62, %63 : vector<20x32xf32>
    %c0_59 = arith.constant 0 : index
    %c0_60 = arith.constant 0 : index
    %c0_61 = arith.constant 0 : index
    %65 = vector.load %arg8[%c0_59, %c0_60, %c0_61] : memref<1x20x32xf32, #tpu.memory_space<vmem>>, vector<1x20x32xf32>
    %66 = vector.shape_cast %65 : vector<1x20x32xf32> to vector<20x32xf32>
    %67 = vector.shape_cast %64 : vector<20x32xf32> to vector<1x20x32xf32>
    tpu.vector_store %arg8[%c0_59, %c0_60, %c0_61], %67 {strides = array<i32>} : memref<1x20x32xf32, #tpu.memory_space<vmem>>, vector<1x20x32xf32>,
    return
  }
  func.func @transform_0(%arg0: i32) -> (i32, i32, i32) {
    %c0_i32 = arith.constant 0 : i32
    %c0_i32_0 = arith.constant 0 : i32
    %c0_i32_1 = arith.constant 0 : i32
    return %arg0, %c0_i32, %c0_i32_0 : i32, i32, i32
  }
  func.func @transform_1(%arg0: i32) -> (i32, i32, i32) {
    %c0_i32 = arith.constant 0 : i32
    %c0_i32_0 = arith.constant 0 : i32
    %c0_i32_1 = arith.constant 0 : i32
    %c0_i32_2 = arith.constant 0 : i32
    return %c0_i32, %c0_i32_0, %c0_i32_1 : i32, i32, i32
  }
  func.func @transform_2(%arg0: i32) -> (i32, i32) {
    %c0_i32 = arith.constant 0 : i32
    %c0_i32_0 = arith.constant 0 : i32
    %c0_i32_1 = arith.constant 0 : i32
    return %c0_i32, %c0_i32_0 : i32, i32
  }
  func.func @transform_3(%arg0: i32) -> (i32, i32, i32) {
    %c0_i32 = arith.constant 0 : i32
    %c0_i32_0 = arith.constant 0 : i32
    %c0_i32_1 = arith.constant 0 : i32
    %c0_i32_2 = arith.constant 0 : i32
    return %c0_i32, %c0_i32_0, %c0_i32_1 : i32, i32, i32
  }
  func.func @transform_4(%arg0: i32) -> (i32, i32) {
    %c0_i32 = arith.constant 0 : i32
    %c0_i32_0 = arith.constant 0 : i32
    %c0_i32_1 = arith.constant 0 : i32
    return %c0_i32, %c0_i32_0 : i32, i32
  }
  func.func @transform_5(%arg0: i32) -> (i32, i32) {
    %c0_i32 = arith.constant 0 : i32
    %c0_i32_0 = arith.constant 0 : i32
    %c0_i32_1 = arith.constant 0 : i32
    return %c0_i32, %c0_i32_0 : i32, i32
  }
  func.func @transform_6(%arg0: i32) -> (i32, i32) {
    %c0_i32 = arith.constant 0 : i32
    %c0_i32_0 = arith.constant 0 : i32
    %c0_i32_1 = arith.constant 0 : i32
    return %c0_i32, %c0_i32_0 : i32, i32
  }
  func.func @transform_7(%arg0: i32) -> (i32, i32, i32) {
    %c0_i32 = arith.constant 0 : i32
    %c0_i32_0 = arith.constant 0 : i32
    %c0_i32_1 = arith.constant 0 : i32
    return %arg0, %c0_i32, %c0_i32_0 : i32, i32, i32
  }
}

</mosaic_0001>

<llo_original>
// kernel: tpu_custom_call.1
$region0: #{tpu_custom_call.1}
  #allocation0 [shape = 'u32[]', space=smem, size = 0x4, offset = 0x4, fixed_abs, tag = 'smem constant byte address 0x4 - core index']
  #allocation1 [shape = 'u32[144,128]{1,0:T(1,128)}', space=vmem, size = 0x12000, scoped, tag = 'internal scratch']
  #allocation2 [shape = 'f32[28,32]{1,0:T(8,128)}', space=vmem, size = 0x4000, scoped, tag = 'scratch operand']
  %s0 = inlined_call_operand.vmem [shape: f32[2,24,4], index: 0, kind: input, shape index: {}]
  %s1 = inlined_call_operand.vmem [shape: f32[3,4,32], index: 1, kind: input, shape index: {}]
  %s2 = inlined_call_operand.vmem [shape: f32[1,32], index: 2, kind: input, shape index: {}]
  %s3 = inlined_call_operand.hbm [shape: f32[3,32,32], index: 3, kind: input, shape index: {}]
  %s4 = inlined_call_operand.vmem [shape: f32[1,32], index: 4, kind: input, shape index: {}]
  %s5 = inlined_call_operand.vmem [shape: f32[4,32], index: 5, kind: input, shape index: {}]
  %s6 = inlined_call_operand.vmem [shape: f32[1,32], index: 6, kind: input, shape index: {}]
  %s7 = inlined_call_operand.vmem [shape: f32[2,20,32], index: 7, kind: output, shape index: {}]
  %s8 = sld [smem:[#allocation0]]
  $region65: #{tpu_custom_call.1} parent=0
    _
  %s10 = ssub.s32 1, %s8
  %s11 = scalar_select 0, %s10, %s8
  $region1: #{tpu_custom_call.1} parent=0
    #allocation3 [shape = 'u8[49152]{0}', space=vmem, size = 0xc000, scoped, tag = 'input window, operand 3, single buffered']
    #allocation4 [shape = 's32[2]{0}', space=sflag, size = 0x8, scoped, tag = 'scoped memory for tpu_custom_call.1']
    %12 = vsyncpa [#allocation4], 0
    loop: start=0, step=1, limit=4
    $region2: #{tpu_custom_call.1} parent=1 // loop_pre_header
      _
    $region3: #{tpu_custom_call.1} parent=1 // loop_header
      %s14 = sphi 0, %s18
      %p15 = scmp.ge.s32.totalorder %s14, 4
      %s24 = sphi 0, %s26
      %s27 = sphi 0, %s24
      %s28 = sphi 0, %s27
      %s44 = sphi 0, %s28
      %s48 = sphi 0, %s48
      %s50 = sphi 0, %s48
      %s51 = sphi 0, %s50
      %s65 = sphi 0, %s51
      %s69 = sphi 0, %s69
      %s71 = sphi 0, %s69
      %s72 = sphi 0, %s71
      %s86 = sphi 0, %s72
      %s90 = sphi 0, %s90
      %s92 = sphi 0, %s90
      %s93 = sphi 0, %s92
      %s107 = sphi 0, %s93
      %s111 = sphi 0, %s111
      %s113 = sphi 0, %s111
      %s114 = sphi 0, %s113
      %s128 = sphi 0, %s114
      %s132 = sphi 0, %s132
      %s134 = sphi 0, %s132
      %s135 = sphi 0, %s134
      %s149 = sphi 0, %s135
      %s153 = sphi 0, %s153
      %s155 = sphi 0, %s153
      %s156 = sphi 0, %s155
      %s170 = sphi 0, %s156
      %s176 = sphi 0, %s178
      %s179 = sphi 0, %s176
      %s180 = sphi 0, %s179
      %s196 = sphi 0, %s180
    $region4: #{tpu_custom_call.1} parent=1 // loop_header_branch
      %17 = sbr.rel (%p15) target = $region8
    $region5: #{tpu_custom_call.1} parent=1 // loop_body
      %s19 = ssub.s32 %s14, 1
      %s20 = ssub.s32 %s14, 2
      %s21 = sadd.s32 %s14, 1
      %s22 = ssub.s32 %s14, %s21
      %p23 = scmp.eq.s32.totalorder %s22, 0
      %s25 = sadd.s32 %s24, 1
      %s26 = scalar_select %p23, %s24, %s25
      %p29 = pneg %p23
      %p30 = scmp.eq.s32.totalorder %s14, 1
      %p31 = por %p29, %p30
      %p32 = scmp.ne.s32.totalorder %s24, %s27
      %p33 = scmp.eq.s32.totalorder %s14, 0
      %p34 = por %p32, %p33
      %p35 = scmp.ne.s32.totalorder %s24, %s27
      %p36 = scmp.eq.s32.totalorder %s19, 1
      %p37 = por %p35, %p36
      %p38 = scmp.ne.s32.totalorder %s27, %s28
      %p39 = scmp.eq.s32.totalorder %s19, 0
      %p40 = por %p38, %p39
      %p41 = scmp.ne.s32.totalorder %s27, %s28
      %p42 = scmp.eq.s32.totalorder %s20, 1
      %p43 = por %p41, %p42
      %p45 = scmp.ne.s32.totalorder %s28, %s44
      %p46 = scmp.eq.s32.totalorder %s20, 0
      %p47 = por %p45, %p46
      %s49 = sadd.s32 %s48, 1
      %p52 = scmp.eq.s32.totalorder %s14, 1
      %p53 = scmp.ne.s32.totalorder %s48, %s50
      %p54 = scmp.eq.s32.totalorder %s14, 0
      %p55 = por %p53, %p54
      %p56 = scmp.ne.s32.totalorder %s48, %s50
      %p57 = scmp.eq.s32.totalorder %s19, 1
      %p58 = por %p56, %p57
      %p59 = scmp.ne.s32.totalorder %s50, %s51
      %p60 = scmp.eq.s32.totalorder %s19, 0
      %p61 = por %p59, %p60
      %p62 = scmp.ne.s32.totalorder %s50, %s51
      %p63 = scmp.eq.s32.totalorder %s20, 1
      %p64 = por %p62, %p63
      %p66 = scmp.ne.s32.totalorder %s51, %s65
      %p67 = scmp.eq.s32.totalorder %s20, 0
      %p68 = por %p66, %p67
      %s70 = sadd.s32 %s69, 1
      %p73 = scmp.eq.s32.totalorder %s14, 1
      %p74 = scmp.ne.s32.totalorder %s69, %s71
      %p75 = scmp.eq.s32.totalorder %s14, 0
      %p76 = por %p74, %p75
      %p77 = scmp.ne.s32.totalorder %s69, %s71
      %p78 = scmp.eq.s32.totalorder %s19, 1
      %p79 = por %p77, %p78
      %p80 = scmp.ne.s32.totalorder %s71, %s72
      %p81 = scmp.eq.s32.totalorder %s19, 0
      %p82 = por %p80, %p81
      %p83 = scmp.ne.s32.totalorder %s71, %s72
      %p84 = scmp.eq.s32.totalorder %s20, 1
      %p85 = por %p83, %p84
      %p87 = scmp.ne.s32.totalorder %s72, %s86
      %p88 = scmp.eq.s32.totalorder %s20, 0
      %p89 = por %p87, %p88
      %s91 = sadd.s32 %s90, 1
      %p94 = scmp.eq.s32.totalorder %s14, 1
      %p95 = scmp.ne.s32.totalorder %s90, %s92
      %p96 = scmp.eq.s32.totalorder %s14, 0
      %p97 = por %p95, %p96
      %p98 = scmp.ne.s32.totalorder %s90, %s92
      %p99 = scmp.eq.s32.totalorder %s19, 1
      %p100 = por %p98, %p99
      %p101 = scmp.ne.s32.totalorder %s92, %s93
      %p102 = scmp.eq.s32.totalorder %s19, 0
      %p103 = por %p101, %p102
      %p104 = scmp.ne.s32.totalorder %s92, %s93
      %p105 = scmp.eq.s32.totalorder %s20, 1
      %p106 = por %p104, %p105
      %p108 = scmp.ne.s32.totalorder %s93, %s107
      %p109 = scmp.eq.s32.totalorder %s20, 0
      %p110 = por %p108, %p109
      %s112 = sadd.s32 %s111, 1
      %p115 = scmp.eq.s32.totalorder %s14, 1
      %p116 = scmp.ne.s32.totalorder %s111, %s113
      %p117 = scmp.eq.s32.totalorder %s14, 0
      %p118 = por %p116, %p117
      %p119 = scmp.ne.s32.totalorder %s111, %s113
      %p120 = scmp.eq.s32.totalorder %s19, 1
      %p121 = por %p119, %p120
      %p122 = scmp.ne.s32.totalorder %s113, %s114
      %p123 = scmp.eq.s32.totalorder %s19, 0
      %p124 = por %p122, %p123
      %p125 = scmp.ne.s32.totalorder %s113, %s114
      %p126 = scmp.eq.s32.totalorder %s20, 1
      %p127 = por %p125, %p126
      %p129 = scmp.ne.s32.totalorder %s114, %s128
      %p130 = scmp.eq.s32.totalorder %s20, 0
      %p131 = por %p129, %p130
      %s133 = sadd.s32 %s132, 1
      %p136 = scmp.eq.s32.totalorder %s14, 1
      %p137 = scmp.ne.s32.totalorder %s132, %s134
      %p138 = scmp.eq.s32.totalorder %s14, 0
      %p139 = por %p137, %p138
      %p140 = scmp.ne.s32.totalorder %s132, %s134
      %p141 = scmp.eq.s32.totalorder %s19, 1
      %p142 = por %p140, %p141
      %p143 = scmp.ne.s32.totalorder %s134, %s135
      %p144 = scmp.eq.s32.totalorder %s19, 0
      %p145 = por %p143, %p144
      %p146 = scmp.ne.s32.totalorder %s134, %s135
      %p147 = scmp.eq.s32.totalorder %s20, 1
      %p148 = por %p146, %p147
      %p150 = scmp.ne.s32.totalorder %s135, %s149
      %p151 = scmp.eq.s32.totalorder %s20, 0
      %p152 = por %p150, %p151
      %s154 = sadd.s32 %s153, 1
      %p157 = scmp.eq.s32.totalorder %s14, 1
      %p158 = scmp.ne.s32.totalorder %s153, %s155
      %p159 = scmp.eq.s32.totalorder %s14, 0
      %p160 = por %p158, %p159
      %p161 = scmp.ne.s32.totalorder %s153, %s155
      %p162 = scmp.eq.s32.totalorder %s19, 1
      %p163 = por %p161, %p162
      %p164 = scmp.ne.s32.totalorder %s155, %s156
      %p165 = scmp.eq.s32.totalorder %s19, 0
      %p166 = por %p164, %p165
      %p167 = scmp.ne.s32.totalorder %s155, %s156
      %p168 = scmp.eq.s32.totalorder %s20, 1
      %p169 = por %p167, %p168
      %p171 = scmp.ne.s32.totalorder %s156, %s170
      %p172 = scmp.eq.s32.totalorder %s20, 0
      %p173 = por %p171, %p172
      %s174 = ssub.s32 %s14, %s21
      %p175 = scmp.eq.s32.totalorder %s174, 0
      %s177 = sadd.s32 %s176, 1
      %s178 = scalar_select %p175, %s176, %s177
      %p181 = pneg %p175
      %p182 = scmp.eq.s32.totalorder %s14, 1
      %p183 = por %p181, %p182
      %p184 = scmp.ne.s32.totalorder %s176, %s179
      %p185 = scmp.eq.s32.totalorder %s14, 0
      %p186 = por %p184, %p185
      %p187 = scmp.ne.s32.totalorder %s176, %s179
      %p188 = scmp.eq.s32.totalorder %s19, 1
      %p189 = por %p187, %p188
      %p190 = scmp.ne.s32.totalorder %s179, %s180
      %p191 = scmp.eq.s32.totalorder %s19, 0
      %p192 = por %p190, %p191
      %p193 = scmp.ne.s32.totalorder %s179, %s180
      %p194 = scmp.eq.s32.totalorder %s20, 1
      %p195 = por %p193, %p194
      %p197 = scmp.ne.s32.totalorder %s180, %s196
      %p198 = scmp.eq.s32.totalorder %s20, 0
      %p199 = por %p197, %p198
      %p200 = scmp.le.s32.totalorder 1, %s14
      %p201 = scmp.lt.s32.totalorder %s14, 3
      %p202 = pnand %p200, %p201
      %p203 = pneg %p202
      // Predicated region
      $region9: #{tpu_custom_call.1} parent=5 // pred_check
        _
      $region10: #{tpu_custom_call.1} parent=5 // pred_check_branch
        %205 = sbr.rel (%p202) target = $region12
      $region11: #{tpu_custom_call.1} parent=5 // pred_region
        %s206 = ssub.s32 %s14, 1
        // Predicated region
        $region13: #{tpu_custom_call.1} parent=11 // pred_check
          %p207 = pneg %p61
        $region14: #{tpu_custom_call.1} parent=11 // pred_check_branch
          %209 = sbr.rel (%p207) target = $region16
        $region15: #{tpu_custom_call.1} parent=11 // pred_region
          _
        $region16: #{tpu_custom_call.1} parent=11 // pred_fallthru
          _
        // Predicated region
        $region17: #{tpu_custom_call.1} parent=11 // pred_check
          %p210 = pneg %p82
        $region18: #{tpu_custom_call.1} parent=11 // pred_check_branch
          %212 = sbr.rel (%p210) target = $region20
        $region19: #{tpu_custom_call.1} parent=11 // pred_region
          _
        $region20: #{tpu_custom_call.1} parent=11 // pred_fallthru
          _
        // Predicated region
        $region21: #{tpu_custom_call.1} parent=11 // pred_check
          %p213 = pneg %p103
        $region22: #{tpu_custom_call.1} parent=11 // pred_check_branch
          %215 = sbr.rel (%p213) target = $region24
        $region23: #{tpu_custom_call.1} parent=11 // pred_region
          %s217 = ssub.s32 1536, 1536
          %218 = vsyncadd [#allocation4], %s217
          %s219 = sshll.u32 [#allocation3], 4
          %s220 = int_to_ptr.vmem [resolvable:$true] %s219
          %225 = dma.hbm_to_vmem [thread:$0]  %s3, 1536, %s220, [#allocation4], 128, 128, 8
        $region24: #{tpu_custom_call.1} parent=11 // pred_fallthru
          _
        // Predicated region
        $region25: #{tpu_custom_call.1} parent=11 // pred_check
          %p226 = pneg %p124
        $region26: #{tpu_custom_call.1} parent=11 // pred_check_branch
          %228 = sbr.rel (%p226) target = $region28
        $region27: #{tpu_custom_call.1} parent=11 // pred_region
          _
        $region28: #{tpu_custom_call.1} parent=11 // pred_fallthru
          _
        // Predicated region
        $region29: #{tpu_custom_call.1} parent=11 // pred_check
          %p229 = pneg %p145
        $region30: #{tpu_custom_call.1} parent=11 // pred_check_branch
          %231 = sbr.rel (%p229) target = $region32
        $region31: #{tpu_custom_call.1} parent=11 // pred_region
          _
        $region32: #{tpu_custom_call.1} parent=11 // pred_fallthru
          _
        // Predicated region
        $region33: #{tpu_custom_call.1} parent=11 // pred_check
          %p232 = pneg %p166
        $region34: #{tpu_custom_call.1} parent=11 // pred_check_branch
          %234 = sbr.rel (%p232) target = $region36
        $region35: #{tpu_custom_call.1} parent=11 // pred_region
          _
        $region36: #{tpu_custom_call.1} parent=11 // pred_fallthru
          _
      $region12: #{tpu_custom_call.1} parent=5 // pred_fallthru
        _
      %p235 = scmp.lt.s32.totalorder %s14, 2
      // Predicated region
      $region37: #{tpu_custom_call.1} parent=5 // pred_check
        %p236 = pneg %p235
      $region38: #{tpu_custom_call.1} parent=5 // pred_check_branch
        %238 = sbr.rel (%p236) target = $region40
      $region39: #{tpu_custom_call.1} parent=5 // pred_region
        // Predicated region
        $region41: #{tpu_custom_call.1} parent=39 // pred_check
          %p239 = pneg %p34
        $region42: #{tpu_custom_call.1} parent=39 // pred_check_branch
          %241 = sbr.rel (%p239) target = $region44
        $region43: #{tpu_custom_call.1} parent=39 // pred_region
          %p242 = scmp.lt.s32.totalorder %s14, 1
          %s243 = scalar_select %p242, %s14, 1
          %s244 = smul.addr %s243, 3
          %s245 = smul.addr %s244, 8
          %s246 = scalar_lea.vmem %s0, %s245
        $region44: #{tpu_custom_call.1} parent=39 // pred_fallthru
          _
      $region40: #{tpu_custom_call.1} parent=5 // pred_fallthru
        _
      %p247 = scmp.le.s32.totalorder 1, %s14
      %p248 = scmp.lt.s32.totalorder %s14, 3
      %p249 = pnand %p247, %p248
      %p250 = pneg %p249
      // Predicated region
      $region45: #{tpu_custom_call.1} parent=5 // pred_check
        _
      $region46: #{tpu_custom_call.1} parent=5 // pred_check_branch
        %252 = sbr.rel (%p249) target = $region48
      $region47: #{tpu_custom_call.1} parent=5 // pred_region
        %s253 = ssub.s32 %s14, 1
        // Predicated region
        $region49: #{tpu_custom_call.1} parent=47 // pred_check
          %p254 = pneg %p103
        $region50: #{tpu_custom_call.1} parent=47 // pred_check_branch
          %256 = sbr.rel (%p254) target = $region52
        $region51: #{tpu_custom_call.1} parent=47 // pred_region
          %257 = dma.done [#allocation4], 1536
        $region52: #{tpu_custom_call.1} parent=47 // pred_fallthru
          _
        %p258 = scmp.lt.s32.totalorder %s19, 1
        %s259 = scalar_select %p258, %s19, 1
        %s260 = smul.addr %s259, 3
        %s261 = smul.addr %s260, 8
        %s262 = scalar_lea.vmem %s0, %s261
        %p263 = pneg %p40
        %p264 = pneg %p37
        %p265 = pneg %p61
        %p266 = pneg %p58
        %p267 = pneg %p82
        %p268 = pneg %p79
        %p269 = pneg %p103
        %p270 = pneg %p100
        %p271 = pneg %p124
        %p272 = pneg %p121
        %p273 = pneg %p145
        %p274 = pneg %p142
        %p275 = pneg %p166
        %p276 = pneg %p163
        %p277 = pneg %p192
        %p278 = pneg %p189
        %p279 = scmp.lt.s32.totalorder %s19, 1
        %s280 = scalar_select %p279, %s19, 1
        %s281 = smul.addr %s280, 3
        %s282 = smul.addr %s281, 8
        %s283 = scalar_lea.vmem %s7, %s282
        %p284 = scmp.lt.s32.totalorder %s19, 1
        %s285 = scalar_select %p284, %s19, 1
        %s286 = smul.addr %s285, 3
        %s287 = smul.addr %s286, 8
        %s288 = scalar_lea.vmem %s0, %s287
        %p289 = scmp.lt.s32.totalorder %s19, 1
        %s290 = scalar_select %p289, %s19, 1
        %s291 = smul.addr %s290, 3
        %s292 = smul.addr %s291, 8
        %s293 = scalar_lea.vmem %s7, %s292
        %v294 = vld [vmem:[%s288] sm:$0xff]
        %v295 = vld [vmem:[%s288 + $0x8] sm:$0xff]
        %v296 = vld [vmem:[%s288 + $0x10] sm:$0xf]
        %v297 = vld [vmem:[%s1] sm:$0xf]
        %v298 = vld [vmem:[%s288 + $0x2] sm:$0xff]
        %v299 = vld [vmem:[%s288 + $0xa] sm:$0xff]
        %v300 = vld [vmem:[%s288 + $0x12] sm:$0xf]
        %s301 = scalar_lea.vmem %s1, 4
        %v302 = vld [vmem:[%s301] sm:$0xf]
        %vm303 = vcmask 31744
        %v305 = vsel %vm303, %v298, 0
        %v308 = vsel %vm303, %v299, 0
        %v311 = vsel %vm303, %v300, 0
        %vm313 = vcmask 1043456
        %v315 = vsel %vm313, %v302, 0
        %317 = vmatprep.subr.mxu0 0.0
        %v318 = vand.u32 %v315, 4294901760
        %319 = vmatpush1.msra.mxu0 %v318
        %320 = vmatprep.subr.mxu0 0.0
        %321 = vmatpush1.msra.mxu0 0.0
        %322 = vmatprep.subr.mxu0 0.0
        %323 = vmatpush1.msra.mxu0 0.0
        %324 = vmatprep.subr.mxu0 0.0
        %325 = vmatpush1.msra.mxu0 0.0
        %326 = vmatprep.subr.mxu0 0.0
        %327 = vmatpush1.msra.mxu0 0.0
        %328 = vmatprep.subr.mxu0 0.0
        %329 = vmatpush1.msra.mxu0 0.0
        %330 = vmatprep.subr.mxu0 0.0
        %331 = vmatpush1.msra.mxu0 0.0
        %332 = vmatprep.subr.mxu0 0.0
        %333 = vmatpush1.msra.mxu0 0.0
        %334 = vmatprep.subr.mxu0 0.0
        %335 = vmatpush1.msra.mxu0 0.0
        %336 = vmatprep.subr.mxu0 0.0
        %337 = vmatpush1.msra.mxu0 0.0
        %338 = vmatprep.subr.mxu0 0.0
        %339 = vmatpush1.msra.mxu0 0.0
        %340 = vmatprep.subr.mxu0 0.0
        %341 = vmatpush1.msra.mxu0 0.0
        %342 = vmatprep.subr.mxu0 0.0
        %343 = vmatpush1.msra.mxu0 0.0
        %344 = vmatprep.subr.mxu0 0.0
        %345 = vmatpush1.msra.mxu0 0.0
        %346 = vmatprep.subr.mxu0 0.0
        %347 = vmatpush1.msra.mxu0 0.0
        %348 = vmatprep.subr.mxu0 0.0
        %349 = vmatpush1.msra.mxu0 0.0
        %350 = vmatprep.subr.mxu0 0.0
        %351 = vmatpush1.msra.mxu0 0.0
        %352 = vmatprep.subr.mxu0 0.0
        %353 = vmatpush1.msra.mxu0 0.0
        %354 = vmatprep.subr.mxu0 0.0
        %355 = vmatpush1.msra.mxu0 0.0
        %356 = vmatprep.subr.mxu0 0.0
        %357 = vmatpush1.msra.mxu0 0.0
        %358 = vmatprep.subr.mxu0 0.0
        %359 = vmatpush1.msra.mxu0 0.0
        %360 = vmatprep.subr.mxu0 0.0
        %361 = vmatpush1.msra.mxu0 0.0
        %362 = vmatprep.subr.mxu0 0.0
        %363 = vmatpush1.msra.mxu0 0.0
        %364 = vmatprep.subr.mxu0 0.0
        %365 = vmatpush1.msra.mxu0 0.0
        %366 = vmatprep.subr.mxu0 0.0
        %367 = vmatpush1.msra.mxu0 0.0
        %368 = vmatprep.subr.mxu0 0.0
        %369 = vmatpush1.msra.mxu0 0.0
        %370 = vmatprep.subr.mxu0 0.0
        %371 = vmatpush1.msra.mxu0 0.0
        %372 = vmatprep.subr.mxu0 0.0
        %373 = vmatpush1.msra.mxu0 0.0
        %374 = vmatprep.subr.mxu0 0.0
        %375 = vmatpush1.msra.mxu0 0.0
        %376 = vmatprep.subr.mxu0 0.0
        %377 = vmatpush1.msra.mxu0 0.0
        %378 = vmatprep.subr.mxu0 0.0
        %379 = vmatpush1.msra.mxu0 0.0
        %380 = vmatprep.subr.mxu0 0.0
        %381 = vmatpush1.msra.mxu0 0.0
        %382 = vmatprep.mubr.f32.mxu0 0.0
        %v383 = vand.u32 %v305, 4294901760
        %v384 = vsub.f32 %v305, %v383
        %v385 = vand.u32 %v384, 4294901760
        %v386 = vsub.f32 %v384, %v385
        %v387 = vand.u32 %v386, 4294901760
        %388 = vmatmul.mubr.f32.gmra.mrb[0].mxu0 %v387
        %v389 = vpop.f32.mrb[0].mxu0
        %v390 = vadd.f32 0.0, %v389
        %v391 = vpop.f32.mrb[0].mxu0
        %392 = vmatprep.mubr.f32.mxu0 0.0
        %v393 = vand.u32 %v308, 4294901760
        %v394 = vsub.f32 %v308, %v393
        %v395 = vand.u32 %v394, 4294901760
        %v396 = vsub.f32 %v394, %v395
        %v397 = vand.u32 %v396, 4294901760
        %398 = vmatmul.mubr.f32.gmra.mrb[0].mxu0 %v397
        %v399 = vpop.f32.mrb[0].mxu0
        %v400 = vadd.f32 0.0, %v399
        %v401 = vpop.f32.mrb[0].mxu0
        %402 = vmatprep.mubr.f32.mxu0 0.0
        %v403 = vand.u32 %v311, 4294901760
        %v404 = vsub.f32 %v311, %v403
        %v405 = vand.u32 %v404, 4294901760
        %v406 = vsub.f32 %v404, %v405
        %v407 = vand.u32 %v406, 4294901760
        %408 = vmatmul.mubr.f32.gmra.mrb[0].mxu0 %v407
        %v409 = vpop.f32.mrb[0].mxu0
        %v410 = vadd.f32 0.0, %v409
        %v411 = vpop.f32.mrb[0].mxu0
        %412 = vdwg.mxu0
        %413 = vmatprep.subr.mxu0 0.0
        %v414 = vand.u32 %v315, 4294901760
        %v415 = vsub.f32 %v315, %v414
        %v416 = vand.u32 %v415, 4294901760
        %v417 = vsub.f32 %v415, %v416
        %v418 = vand.u32 %v417, 4294901760
        %419 = vmatpush1.msra.mxu0 %v418
        %420 = vmatprep.subr.mxu0 0.0
        %421 = vmatpush1.msra.mxu0 0.0
        %422 = vmatprep.subr.mxu0 0.0
        %423 = vmatpush1.msra.mxu0 0.0
        %424 = vmatprep.subr.mxu0 0.0
        %425 = vmatpush1.msra.mxu0 0.0
        %426 = vmatprep.subr.mxu0 0.0
        %427 = vmatpush1.msra.mxu0 0.0
        %428 = vmatprep.subr.mxu0 0.0
        %429 = vmatpush1.msra.mxu0 0.0
        %430 = vmatprep.subr.mxu0 0.0
        %431 = vmatpush1.msra.mxu0 0.0
        %432 = vmatprep.subr.mxu0 0.0
        %433 = vmatpush1.msra.mxu0 0.0
        %434 = vmatprep.subr.mxu0 0.0
        %435 = vmatpush1.msra.mxu0 0.0
        %436 = vmatprep.subr.mxu0 0.0
        %437 = vmatpush1.msra.mxu0 0.0
        %438 = vmatprep.subr.mxu0 0.0
        %439 = vmatpush1.msra.mxu0 0.0
        %440 = vmatprep.subr.mxu0 0.0
        %441 = vmatpush1.msra.mxu0 0.0
        %442 = vmatprep.subr.mxu0 0.0
        %443 = vmatpush1.msra.mxu0 0.0
        %444 = vmatprep.subr.mxu0 0.0
        %445 = vmatpush1.msra.mxu0 0.0
        %446 = vmatprep.subr.mxu0 0.0
        %447 = vmatpush1.msra.mxu0 0.0
        %448 = vmatprep.subr.mxu0 0.0
        %449 = vmatpush1.msra.mxu0 0.0
        %450 = vmatprep.subr.mxu0 0.0
        %451 = vmatpush1.msra.mxu0 0.0
        %452 = vmatprep.subr.mxu0 0.0
        %453 = vmatpush1.msra.mxu0 0.0
        %454 = vmatprep.subr.mxu0 0.0
        %455 = vmatpush1.msra.mxu0 0.0
        %456 = vmatprep.subr.mxu0 0.0
        %457 = vmatpush1.msra.mxu0 0.0
        %458 = vmatprep.subr.mxu0 0.0
        %459 = vmatpush1.msra.mxu0 0.0
        %460 = vmatprep.subr.mxu0 0.0
        %461 = vmatpush1.msra.mxu0 0.0
        %462 = vmatprep.subr.mxu0 0.0
        %463 = vmatpush1.msra.mxu0 0.0
        %464 = vmatprep.subr.mxu0 0.0
        %465 = vmatpush1.msra.mxu0 0.0
        %466 = vmatprep.subr.mxu0 0.0
        %467 = vmatpush1.msra.mxu0 0.0
        %468 = vmatprep.subr.mxu0 0.0
        %469 = vmatpush1.msra.mxu0 0.0
        %470 = vmatprep.subr.mxu0 0.0
        %471 = vmatpush1.msra.mxu0 0.0
        %472 = vmatprep.subr.mxu0 0.0
        %473 = vmatpush1.msra.mxu0 0.0
        %474 = vmatprep.subr.mxu0 0.0
        %475 = vmatpush1.msra.mxu0 0.0
        %476 = vmatprep.subr.mxu0 0.0
        %477 = vmatpush1.msra.mxu0 0.0
        %478 = vmatprep.subr.mxu0 0.0
        %479 = vmatpush1.msra.mxu0 0.0
        %480 = vmatprep.subr.mxu0 0.0
        %481 = vmatpush1.msra.mxu0 0.0
        %482 = vmatprep.mubr.f32.mxu0 0.0
        %v483 = vand.u32 %v305, 4294901760
        %484 = vmatmul.mubr.f32.gmra.mrb[0].mxu0 %v483
        %v485 = vpop.f32.mrb[0].mxu0
        %v486 = vadd.f32 %v390, %v485
        %v487 = vpop.f32.mrb[0].mxu0
        %488 = vmatprep.mubr.f32.mxu0 0.0
        %v489 = vand.u32 %v308, 4294901760
        %490 = vmatmul.mubr.f32.gmra.mrb[0].mxu0 %v489
        %v491 = vpop.f32.mrb[0].mxu0
        %v492 = vadd.f32 %v400, %v491
        %v493 = vpop.f32.mrb[0].mxu0
        %494 = vmatprep.mubr.f32.mxu0 0.0
        %v495 = vand.u32 %v311, 4294901760
        %496 = vmatmul.mubr.f32.gmra.mrb[0].mxu0 %v495
        %v497 = vpop.f32.mrb[0].mxu0
        %v498 = vadd.f32 %v410, %v497
        %v499 = vpop.f32.mrb[0].mxu0
        %500 = vdwg.mxu0
        %501 = vmatprep.subr.mxu0 0.0
        %v502 = vand.u32 %v315, 4294901760
        %v503 = vsub.f32 %v315, %v502
        %504 = vmatpush1.msra.mxu0 %v503
        %505 = vmatprep.subr.mxu0 0.0
        %506 = vmatpush1.msra.mxu0 0.0
        %507 = vmatprep.subr.mxu0 0.0
        %508 = vmatpush1.msra.mxu0 0.0
        %509 = vmatprep.subr.mxu0 0.0
        %510 = vmatpush1.msra.mxu0 0.0
        %511 = vmatprep.subr.mxu0 0.0
        %512 = vmatpush1.msra.mxu0 0.0
        %513 = vmatprep.subr.mxu0 0.0
        %514 = vmatpush1.msra.mxu0 0.0
        %515 = vmatprep.subr.mxu0 0.0
        %516 = vmatpush1.msra.mxu0 0.0
        %517 = vmatprep.subr.mxu0 0.0
        %518 = vmatpush1.msra.mxu0 0.0
        %519 = vmatprep.subr.mxu0 0.0
        %520 = vmatpush1.msra.mxu0 0.0
        %521 = vmatprep.subr.mxu0 0.0
        %522 = vmatpush1.msra.mxu0 0.0
        %523 = vmatprep.subr.mxu0 0.0
        %524 = vmatpush1.msra.mxu0 0.0
        %525 = vmatprep.subr.mxu0 0.0
        %526 = vmatpush1.msra.mxu0 0.0
        %527 = vmatprep.subr.mxu0 0.0
        %528 = vmatpush1.msra.mxu0 0.0
        %529 = vmatprep.subr.mxu0 0.0
        %530 = vmatpush1.msra.mxu0 0.0
        %531 = vmatprep.subr.mxu0 0.0
        %532 = vmatpush1.msra.mxu0 0.0
        %533 = vmatprep.subr.mxu0 0.0
        %534 = vmatpush1.msra.mxu0 0.0
        %535 = vmatprep.subr.mxu0 0.0
        %536 = vmatpush1.msra.mxu0 0.0
        %537 = vmatprep.subr.mxu0 0.0
        %538 = vmatpush1.msra.mxu0 0.0
        %539 = vmatprep.subr.mxu0 0.0
        %540 = vmatpush1.msra.mxu0 0.0
        %541 = vmatprep.subr.mxu0 0.0
        %542 = vmatpush1.msra.mxu0 0.0
        %543 = vmatprep.subr.mxu0 0.0
        %544 = vmatpush1.msra.mxu0 0.0
        %545 = vmatprep.subr.mxu0 0.0
        %546 = vmatpush1.msra.mxu0 0.0
        %547 = vmatprep.subr.mxu0 0.0
        %548 = vmatpush1.msra.mxu0 0.0
        %549 = vmatprep.subr.mxu0 0.0
        %550 = vmatpush1.msra.mxu0 0.0
        %551 = vmatprep.subr.mxu0 0.0
        %552 = vmatpush1.msra.mxu0 0.0
        %553 = vmatprep.subr.mxu0 0.0
        %554 = vmatpush1.msra.mxu0 0.0
        %555 = vmatprep.subr.mxu0 0.0
        %556 = vmatpush1.msra.mxu0 0.0
        %557 = vmatprep.subr.mxu0 0.0
        %558 = vmatpush1.msra.mxu0 0.0
        %559 = vmatprep.subr.mxu0 0.0
        %560 = vmatpush1.msra.mxu0 0.0
        %561 = vmatprep.subr.mxu0 0.0
        %562 = vmatpush1.msra.mxu0 0.0
        %563 = vmatprep.subr.mxu0 0.0
        %564 = vmatpush1.msra.mxu0 0.0
        %565 = vmatprep.subr.mxu0 0.0
        %566 = vmatpush1.msra.mxu0 0.0
        %567 = vmatprep.mubr.f32.mxu0 0.0
        %v568 = vand.u32 %v305, 4294901760
        %v569 = vsub.f32 %v305, %v568
        %570 = vmatmul.mubr.f32.gmra.mrb[0].mxu0 %v569
        %v571 = vpop.f32.mrb[0].mxu0
        %v572 = vadd.f32 %v486, %v571
        %v573 = vpop.f32.mrb[0].mxu0
        %574 = vmatprep.mubr.f32.mxu0 0.0
        %v575 = vand.u32 %v308, 4294901760
        %v576 = vsub.f32 %v308, %v575
        %577 = vmatmul.mubr.f32.gmra.mrb[0].mxu0 %v576
        %v578 = vpop.f32.mrb[0].mxu0
        %v579 = vadd.f32 %v492, %v578
        %v580 = vpop.f32.mrb[0].mxu0
        %581 = vmatprep.mubr.f32.mxu0 0.0
        %v582 = vand.u32 %v311, 4294901760
        %v583 = vsub.f32 %v311, %v582
        %584 = vmatmul.mubr.f32.gmra.mrb[0].mxu0 %v583
        %v585 = vpop.f32.mrb[0].mxu0
        %v586 = vadd.f32 %v498, %v585
        %v587 = vpop.f32.mrb[0].mxu0
        %588 = vdwg.mxu0
        %589 = vmatprep.subr.mxu0 0.0
        %v590 = vand.u32 %v315, 4294901760
        %591 = vmatpush1.msra.mxu0 %v590
        %592 = vmatprep.subr.mxu0 0.0
        %593 = vmatpush1.msra.mxu0 0.0
        %594 = vmatprep.subr.mxu0 0.0
        %595 = vmatpush1.msra.mxu0 0.0
        %596 = vmatprep.subr.mxu0 0.0
        %597 = vmatpush1.msra.mxu0 0.0
        %598 = vmatprep.subr.mxu0 0.0
        %599 = vmatpush1.msra.mxu0 0.0
        %600 = vmatprep.subr.mxu0 0.0
        %601 = vmatpush1.msra.mxu0 0.0
        %602 = vmatprep.subr.mxu0 0.0
        %603 = vmatpush1.msra.mxu0 0.0
        %604 = vmatprep.subr.mxu0 0.0
        %605 = vmatpush1.msra.mxu0 0.0
        %606 = vmatprep.subr.mxu0 0.0
        %607 = vmatpush1.msra.mxu0 0.0
        %608 = vmatprep.subr.mxu0 0.0
        %609 = vmatpush1.msra.mxu0 0.0
        %610 = vmatprep.subr.mxu0 0.0
        %611 = vmatpush1.msra.mxu0 0.0
        %612 = vmatprep.subr.mxu0 0.0
        %613 = vmatpush1.msra.mxu0 0.0
        %614 = vmatprep.subr.mxu0 0.0
        %615 = vmatpush1.msra.mxu0 0.0
        %616 = vmatprep.subr.mxu0 0.0
        %617 = vmatpush1.msra.mxu0 0.0
        %618 = vmatprep.subr.mxu0 0.0
        %619 = vmatpush1.msra.mxu0 0.0
        %620 = vmatprep.subr.mxu0 0.0
        %621 = vmatpush1.msra.mxu0 0.0
        %622 = vmatprep.subr.mxu0 0.0
        %623 = vmatpush1.msra.mxu0 0.0
        %624 = vmatprep.subr.mxu0 0.0
        %625 = vmatpush1.msra.mxu0 0.0
        %626 = vmatprep.subr.mxu0 0.0
        %627 = vmatpush1.msra.mxu0 0.0
        %628 = vmatprep.subr.mxu0 0.0
        %629 = vmatpush1.msra.mxu0 0.0
        %630 = vmatprep.subr.mxu0 0.0
        %631 = vmatpush1.msra.mxu0 0.0
        %632 = vmatprep.subr.mxu0 0.0
        %633 = vmatpush1.msra.mxu0 0.0
        %634 = vmatprep.subr.mxu0 0.0
        %635 = vmatpush1.msra.mxu0 0.0
        %636 = vmatprep.subr.mxu0 0.0
        %637 = vmatpush1.msra.mxu0 0.0
        %638 = vmatprep.subr.mxu0 0.0
        %639 = vmatpush1.msra.mxu0 0.0
        %640 = vmatprep.subr.mxu0 0.0
        %641 = vmatpush1.msra.mxu0 0.0
        %642 = vmatprep.subr.mxu0 0.0
        %643 = vmatpush1.msra.mxu0 0.0
        %644 = vmatprep.subr.mxu0 0.0
        %645 = vmatpush1.msra.mxu0 0.0
        %646 = vmatprep.subr.mxu0 0.0
        %647 = vmatpush1.msra.mxu0 0.0
        %648 = vmatprep.subr.mxu0 0.0
        %649 = vmatpush1.msra.mxu0 0.0
        %650 = vmatprep.subr.mxu0 0.0
        %651 = vmatpush1.msra.mxu0 0.0
        %652 = vmatprep.subr.mxu0 0.0
        %653 = vmatpush1.msra.mxu0 0.0
        %654 = vmatprep.mubr.f32.mxu0 0.0
        %v655 = vand.u32 %v305, 4294901760
        %v656 = vsub.f32 %v305, %v655
        %v657 = vand.u32 %v656, 4294901760
        %658 = vmatmul.mubr.f32.gmra.mrb[0].mxu0 %v657
        %v659 = vpop.f32.mrb[0].mxu0
        %v660 = vadd.f32 %v572, %v659
        %v661 = vpop.f32.mrb[0].mxu0
        %662 = vmatprep.mubr.f32.mxu0 0.0
        %v663 = vand.u32 %v308, 4294901760
        %v664 = vsub.f32 %v308, %v663
        %v665 = vand.u32 %v664, 4294901760
        %666 = vmatmul.mubr.f32.gmra.mrb[0].mxu0 %v665
        %v667 = vpop.f32.mrb[0].mxu0
        %v668 = vadd.f32 %v579, %v667
        %v669 = vpop.f32.mrb[0].mxu0
        %670 = vmatprep.mubr.f32.mxu0 0.0
        %v671 = vand.u32 %v311, 4294901760
        %v672 = vsub.f32 %v311, %v671
        %v673 = vand.u32 %v672, 4294901760
        %674 = vmatmul.mubr.f32.gmra.mrb[0].mxu0 %v673
        %v675 = vpop.f32.mrb[0].mxu0
        %v676 = vadd.f32 %v586, %v675
        %v677 = vpop.f32.mrb[0].mxu0
        %678 = vdwg.mxu0
        %679 = vmatprep.subr.mxu0 0.0
        %v680 = vand.u32 %v315, 4294901760
        %v681 = vsub.f32 %v315, %v680
        %v682 = vand.u32 %v681, 4294901760
        %683 = vmatpush1.msra.mxu0 %v682
        %684 = vmatprep.subr.mxu0 0.0
        %685 = vmatpush1.msra.mxu0 0.0
        %686 = vmatprep.subr.mxu0 0.0
        %687 = vmatpush1.msra.mxu0 0.0
        %688 = vmatprep.subr.mxu0 0.0
        %689 = vmatpush1.msra.mxu0 0.0
        %690 = vmatprep.subr.mxu0 0.0
        %691 = vmatpush1.msra.mxu0 0.0
        %692 = vmatprep.subr.mxu0 0.0
        %693 = vmatpush1.msra.mxu0 0.0
        %694 = vmatprep.subr.mxu0 0.0
        %695 = vmatpush1.msra.mxu0 0.0
        %696 = vmatprep.subr.mxu0 0.0
        %697 = vmatpush1.msra.mxu0 0.0
        %698 = vmatprep.subr.mxu0 0.0
        %699 = vmatpush1.msra.mxu0 0.0
        %700 = vmatprep.subr.mxu0 0.0
        %701 = vmatpush1.msra.mxu0 0.0
        %702 = vmatprep.subr.mxu0 0.0
        %703 = vmatpush1.msra.mxu0 0.0
        %704 = vmatprep.subr.mxu0 0.0
        %705 = vmatpush1.msra.mxu0 0.0
        %706 = vmatprep.subr.mxu0 0.0
        %707 = vmatpush1.msra.mxu0 0.0
        %708 = vmatprep.subr.mxu0 0.0
        %709 = vmatpush1.msra.mxu0 0.0
        %710 = vmatprep.subr.mxu0 0.0
        %711 = vmatpush1.msra.mxu0 0.0
        %712 = vmatprep.subr.mxu0 0.0
        %713 = vmatpush1.msra.mxu0 0.0
        %714 = vmatprep.subr.mxu0 0.0
        %715 = vmatpush1.msra.mxu0 0.0
        %716 = vmatprep.subr.mxu0 0.0
        %717 = vmatpush1.msra.mxu0 0.0
        %718 = vmatprep.subr.mxu0 0.0
        %719 = vmatpush1.msra.mxu0 0.0
        %720 = vmatprep.subr.mxu0 0.0
        %721 = vmatpush1.msra.mxu0 0.0
        %722 = vmatprep.subr.mxu0 0.0
        %723 = vmatpush1.msra.mxu0 0.0
        %724 = vmatprep.subr.mxu0 0.0
        %725 = vmatpush1.msra.mxu0 0.0
        %726 = vmatprep.subr.mxu0 0.0
        %727 = vmatpush1.msra.mxu0 0.0
        %728 = vmatprep.subr.mxu0 0.0
        %729 = vmatpush1.msra.mxu0 0.0
        %730 = vmatprep.subr.mxu0 0.0
        %731 = vmatpush1.msra.mxu0 0.0
        %732 = vmatprep.subr.mxu0 0.0
        %733 = vmatpush1.msra.mxu0 0.0
        %734 = vmatprep.subr.mxu0 0.0
        %735 = vmatpush1.msra.mxu0 0.0
        %736 = vmatprep.subr.mxu0 0.0
        %737 = vmatpush1.msra.mxu0 0.0
        %738 = vmatprep.subr.mxu0 0.0
        %739 = vmatpush1.msra.mxu0 0.0
        %740 = vmatprep.subr.mxu0 0.0
        %741 = vmatpush1.msra.mxu0 0.0
        %742 = vmatprep.subr.mxu0 0.0
        %743 = vmatpush1.msra.mxu0 0.0
        %744 = vmatprep.subr.mxu0 0.0
        %745 = vmatpush1.msra.mxu0 0.0
        %746 = vmatprep.mubr.f32.mxu0 0.0
        %v747 = vand.u32 %v305, 4294901760
        %748 = vmatmul.mubr.f32.gmra.mrb[0].mxu0 %v747
        %v749 = vpop.f32.mrb[0].mxu0
        %v750 = vadd.f32 %v660, %v749
        %v751 = vpop.f32.mrb[0].mxu0
        %752 = vmatprep.mubr.f32.mxu0 0.0
        %v753 = vand.u32 %v308, 4294901760
        %754 = vmatmul.mubr.f32.gmra.mrb[0].mxu0 %v753
        %v755 = vpop.f32.mrb[0].mxu0
        %v756 = vadd.f32 %v668, %v755
        %v757 = vpop.f32.mrb[0].mxu0
        %758 = vmatprep.mubr.f32.mxu0 0.0
        %v759 = vand.u32 %v311, 4294901760
        %760 = vmatmul.mubr.f32.gmra.mrb[0].mxu0 %v759
        %v761 = vpop.f32.mrb[0].mxu0
        %v762 = vadd.f32 %v676, %v761
        %v763 = vpop.f32.mrb[0].mxu0
        %764 = vdwg.mxu0
        %765 = vmatprep.subr.mxu0 0.0
        %v766 = vand.u32 %v315, 4294901760
        %767 = vmatpush1.msra.mxu0 %v766
        %768 = vmatprep.subr.mxu0 0.0
        %769 = vmatpush1.msra.mxu0 0.0
        %770 = vmatprep.subr.mxu0 0.0
        %771 = vmatpush1.msra.mxu0 0.0
        %772 = vmatprep.subr.mxu0 0.0
        %773 = vmatpush1.msra.mxu0 0.0
        %774 = vmatprep.subr.mxu0 0.0
        %775 = vmatpush1.msra.mxu0 0.0
        %776 = vmatprep.subr.mxu0 0.0
        %777 = vmatpush1.msra.mxu0 0.0
        %778 = vmatprep.subr.mxu0 0.0
        %779 = vmatpush1.msra.mxu0 0.0
        %780 = vmatprep.subr.mxu0 0.0
        %781 = vmatpush1.msra.mxu0 0.0
        %782 = vmatprep.subr.mxu0 0.0
        %783 = vmatpush1.msra.mxu0 0.0
        %784 = vmatprep.subr.mxu0 0.0
        %785 = vmatpush1.msra.mxu0 0.0
        %786 = vmatprep.subr.mxu0 0.0
        %787 = vmatpush1.msra.mxu0 0.0
        %788 = vmatprep.subr.mxu0 0.0
        %789 = vmatpush1.msra.mxu0 0.0
        %790 = vmatprep.subr.mxu0 0.0
        %791 = vmatpush1.msra.mxu0 0.0
        %792 = vmatprep.subr.mxu0 0.0
        %793 = vmatpush1.msra.mxu0 0.0
        %794 = vmatprep.subr.mxu0 0.0
        %795 = vmatpush1.msra.mxu0 0.0
        %796 = vmatprep.subr.mxu0 0.0
        %797 = vmatpush1.msra.mxu0 0.0
        %798 = vmatprep.subr.mxu0 0.0
        %799 = vmatpush1.msra.mxu0 0.0
        %800 = vmatprep.subr.mxu0 0.0
        %801 = vmatpush1.msra.mxu0 0.0
        %802 = vmatprep.subr.mxu0 0.0
        %803 = vmatpush1.msra.mxu0 0.0
        %804 = vmatprep.subr.mxu0 0.0
        %805 = vmatpush1.msra.mxu0 0.0
        %806 = vmatprep.subr.mxu0 0.0
        %807 = vmatpush1.msra.mxu0 0.0
        %808 = vmatprep.subr.mxu0 0.0
        %809 = vmatpush1.msra.mxu0 0.0
        %810 = vmatprep.subr.mxu0 0.0
        %811 = vmatpush1.msra.mxu0 0.0
        %812 = vmatprep.subr.mxu0 0.0
        %813 = vmatpush1.msra.mxu0 0.0
        %814 = vmatprep.subr.mxu0 0.0
        %815 = vmatpush1.msra.mxu0 0.0
        %816 = vmatprep.subr.mxu0 0.0
        %817 = vmatpush1.msra.mxu0 0.0
        %818 = vmatprep.subr.mxu0 0.0
        %819 = vmatpush1.msra.mxu0 0.0
        %820 = vmatprep.subr.mxu0 0.0
        %821 = vmatpush1.msra.mxu0 0.0
        %822 = vmatprep.subr.mxu0 0.0
        %823 = vmatpush1.msra.mxu0 0.0
        %824 = vmatprep.subr.mxu0 0.0
        %825 = vmatpush1.msra.mxu0 0.0
        %826 = vmatprep.subr.mxu0 0.0
        %827 = vmatpush1.msra.mxu0 0.0
        %828 = vmatprep.subr.mxu0 0.0
        %829 = vmatpush1.msra.mxu0 0.0
        %830 = vmatprep.mubr.f32.mxu0 0.0
        %v831 = vand.u32 %v305, 4294901760
        %832 = vmatmul.mubr.f32.gmra.mrb[0].mxu0 %v831
        %v833 = vpop.f32.mrb[0].mxu0
        %v834 = vadd.f32 %v750, %v833
        %v835 = vpop.f32.mrb[0].mxu0
        %836 = vmatprep.mubr.f32.mxu0 0.0
        %v837 = vand.u32 %v308, 4294901760
        %838 = vmatmul.mubr.f32.gmra.mrb[0].mxu0 %v837
        %v839 = vpop.f32.mrb[0].mxu0
        %v840 = vadd.f32 %v756, %v839
        %v841 = vpop.f32.mrb[0].mxu0
        %842 = vmatprep.mubr.f32.mxu0 0.0
        %v843 = vand.u32 %v311, 4294901760
        %844 = vmatmul.mubr.f32.gmra.mrb[0].mxu0 %v843
        %v845 = vpop.f32.mrb[0].mxu0
        %v846 = vadd.f32 %v762, %v845
        %v847 = vpop.f32.mrb[0].mxu0
        %848 = vdwg.mxu0
        %v850 = vsel %vm303, %v294, 0
        %v853 = vsel %vm303, %v295, 0
        %v856 = vsel %vm303, %v296, 0
        %v859 = vsel %vm313, %v297, 0
        %861 = vmatprep.subr.mxu0 0.0
        %v862 = vand.u32 %v859, 4294901760
        %863 = vmatpush1.msra.mxu0 %v862
        %864 = vmatprep.subr.mxu0 0.0
        %865 = vmatpush1.msra.mxu0 0.0
        %866 = vmatprep.subr.mxu0 0.0
        %867 = vmatpush1.msra.mxu0 0.0
        %868 = vmatprep.subr.mxu0 0.0
        %869 = vmatpush1.msra.mxu0 0.0
        %870 = vmatprep.subr.mxu0 0.0
        %871 = vmatpush1.msra.mxu0 0.0
        %872 = vmatprep.subr.mxu0 0.0
        %873 = vmatpush1.msra.mxu0 0.0
        %874 = vmatprep.subr.mxu0 0.0
        %875 = vmatpush1.msra.mxu0 0.0
        %876 = vmatprep.subr.mxu0 0.0
        %877 = vmatpush1.msra.mxu0 0.0
        %878 = vmatprep.subr.mxu0 0.0
        %879 = vmatpush1.msra.mxu0 0.0
        %880 = vmatprep.subr.mxu0 0.0
        %881 = vmatpush1.msra.mxu0 0.0
        %882 = vmatprep.subr.mxu0 0.0
        %883 = vmatpush1.msra.mxu0 0.0
        %884 = vmatprep.subr.mxu0 0.0
        %885 = vmatpush1.msra.mxu0 0.0
        %886 = vmatprep.subr.mxu0 0.0
        %887 = vmatpush1.msra.mxu0 0.0
        %888 = vmatprep.subr.mxu0 0.0
        %889 = vmatpush1.msra.mxu0 0.0
        %890 = vmatprep.subr.mxu0 0.0
        %891 = vmatpush1.msra.mxu0 0.0
        %892 = vmatprep.subr.mxu0 0.0
        %893 = vmatpush1.msra.mxu0 0.0
        %894 = vmatprep.subr.mxu0 0.0
        %895 = vmatpush1.msra.mxu0 0.0
        %896 = vmatprep.subr.mxu0 0.0
        %897 = vmatpush1.msra.mxu0 0.0
        %898 = vmatprep.subr.mxu0 0.0
        %899 = vmatpush1.msra.mxu0 0.0
        %900 = vmatprep.subr.mxu0 0.0
        %901 = vmatpush1.msra.mxu0 0.0
        %902 = vmatprep.subr.mxu0 0.0
        %903 = vmatpush1.msra.mxu0 0.0
        %904 = vmatprep.subr.mxu0 0.0
        %905 = vmatpush1.msra.mxu0 0.0
        %906 = vmatprep.subr.mxu0 0.0
        %907 = vmatpush1.msra.mxu0 0.0
        %908 = vmatprep.subr.mxu0 0.0
        %909 = vmatpush1.msra.mxu0 0.0
        %910 = vmatprep.subr.mxu0 0.0
        %911 = vmatpush1.msra.mxu0 0.0
        %912 = vmatprep.subr.mxu0 0.0
        %913 = vmatpush1.msra.mxu0 0.0
        %914 = vmatprep.subr.mxu0 0.0
        %915 = vmatpush1.msra.mxu0 0.0
        %916 = vmatprep.subr.mxu0 0.0
        %917 = vmatpush1.msra.mxu0 0.0
        %918 = vmatprep.subr.mxu0 0.0
        %919 = vmatpush1.msra.mxu0 0.0
        %920 = vmatprep.subr.mxu0 0.0
        %921 = vmatpush1.msra.mxu0 0.0
        %922 = vmatprep.subr.mxu0 0.0
        %923 = vmatpush1.msra.mxu0 0.0
        %924 = vmatprep.subr.mxu0 0.0
        %925 = vmatpush1.msra.mxu0 0.0
        %926 = vmatprep.mubr.f32.mxu0 0.0
        %v927 = vand.u32 %v850, 4294901760
        %v928 = vsub.f32 %v850, %v927
        %v929 = vand.u32 %v928, 4294901760
        %v930 = vsub.f32 %v928, %v929
        %v931 = vand.u32 %v930, 4294901760
        %932 = vmatmul.mubr.f32.gmra.mrb[0].mxu0 %v931
        %v933 = vpop.f32.mrb[0].mxu0
        %v934 = vadd.f32 %v834, %v933
        %v935 = vpop.f32.mrb[0].mxu0
        %936 = vmatprep.mubr.f32.mxu0 0.0
        %v937 = vand.u32 %v853, 4294901760
        %v938 = vsub.f32 %v853, %v937
        %v939 = vand.u32 %v938, 4294901760
        %v940 = vsub.f32 %v938, %v939
        %v941 = vand.u32 %v940, 4294901760
        %942 = vmatmul.mubr.f32.gmra.mrb[0].mxu0 %v941
        %v943 = vpop.f32.mrb[0].mxu0
        %v944 = vadd.f32 %v840, %v943
        %v945 = vpop.f32.mrb[0].mxu0
        %946 = vmatprep.mubr.f32.mxu0 0.0
        %v947 = vand.u32 %v856, 4294901760
        %v948 = vsub.f32 %v856, %v947
        %v949 = vand.u32 %v948, 4294901760
        %v950 = vsub.f32 %v948, %v949
        %v951 = vand.u32 %v950, 4294901760
        %952 = vmatmul.mubr.f32.gmra.mrb[0].mxu0 %v951
        %v953 = vpop.f32.mrb[0].mxu0
        %v954 = vadd.f32 %v846, %v953
        %v955 = vpop.f32.mrb[0].mxu0
        %956 = vdwg.mxu0
        %957 = vmatprep.subr.mxu0 0.0
        %v958 = vand.u32 %v859, 4294901760
        %v959 = vsub.f32 %v859, %v958
        %v960 = vand.u32 %v959, 4294901760
        %v961 = vsub.f32 %v959, %v960
        %v962 = vand.u32 %v961, 4294901760
        %963 = vmatpush1.msra.mxu0 %v962
        %964 = vmatprep.subr.mxu0 0.0
        %965 = vmatpush1.msra.mxu0 0.0
        %966 = vmatprep.subr.mxu0 0.0
        %967 = vmatpush1.msra.mxu0 0.0
        %968 = vmatprep.subr.mxu0 0.0
        %969 = vmatpush1.msra.mxu0 0.0
        %970 = vmatprep.subr.mxu0 0.0
        %971 = vmatpush1.msra.mxu0 0.0
        %972 = vmatprep.subr.mxu0 0.0
        %973 = vmatpush1.msra.mxu0 0.0
        %974 = vmatprep.subr.mxu0 0.0
        %975 = vmatpush1.msra.mxu0 0.0
        %976 = vmatprep.subr.mxu0 0.0
        %977 = vmatpush1.msra.mxu0 0.0
        %978 = vmatprep.subr.mxu0 0.0
        %979 = vmatpush1.msra.mxu0 0.0
        %980 = vmatprep.subr.mxu0 0.0
        %981 = vmatpush1.msra.mxu0 0.0
        %982 = vmatprep.subr.mxu0 0.0
        %983 = vmatpush1.msra.mxu0 0.0
        %984 = vmatprep.subr.mxu0 0.0
        %985 = vmatpush1.msra.mxu0 0.0
        %986 = vmatprep.subr.mxu0 0.0
        %987 = vmatpush1.msra.mxu0 0.0
        %988 = vmatprep.subr.mxu0 0.0
        %989 = vmatpush1.msra.mxu0 0.0
        %990 = vmatprep.subr.mxu0 0.0
        %991 = vmatpush1.msra.mxu0 0.0
        %992 = vmatprep.subr.mxu0 0.0
        %993 = vmatpush1.msra.mxu0 0.0
        %994 = vmatprep.subr.mxu0 0.0
        %995 = vmatpush1.msra.mxu0 0.0
        %996 = vmatprep.subr.mxu0 0.0
        %997 = vmatpush1.msra.mxu0 0.0
        %998 = vmatprep.subr.mxu0 0.0
        %999 = vmatpush1.msra.mxu0 0.0
        %1000 = vmatprep.subr.mxu0 0.0
        %1001 = vmatpush1.msra.mxu0 0.0
        %1002 = vmatprep.subr.mxu0 0.0
        %1003 = vmatpush1.msra.mxu0 0.0
        %1004 = vmatprep.subr.mxu0 0.0
        %1005 = vmatpush1.msra.mxu0 0.0
        %1006 = vmatprep.subr.mxu0 0.0
        %1007 = vmatpush1.msra.mxu0 0.0
        %1008 = vmatprep.subr.mxu0 0.0
        %1009 = vmatpush1.msra.mxu0 0.0
        %1010 = vmatprep.subr.mxu0 0.0
        %1011 = vmatpush1.msra.mxu0 0.0
        %1012 = vmatprep.subr.mxu0 0.0
        %1013 = vmatpush1.msra.mxu0 0.0
        %1014 = vmatprep.subr.mxu0 0.0
        %1015 = vmatpush1.msra.mxu0 0.0
        %1016 = vmatprep.subr.mxu0 0.0
        %1017 = vmatpush1.msra.mxu0 0.0
        %1018 = vmatprep.subr.mxu0 0.0
        %1019 = vmatpush1.msra.mxu0 0.0
        %1020 = vmatprep.subr.mxu0 0.0
        %1021 = vmatpush1.msra.mxu0 0.0
        %1022 = vmatprep.subr.mxu0 0.0
        %1023 = vmatpush1.msra.mxu0 0.0
        %1024 = vmatprep.subr.mxu0 0.0
        %1025 = vmatpush1.msra.mxu0 0.0
        %1026 = vmatprep.mubr.f32.mxu0 0.0
        %v1027 = vand.u32 %v850, 4294901760
        %1028 = vmatmul.mubr.f32.gmra.mrb[0].mxu0 %v1027
        %v1029 = vpop.f32.mrb[0].mxu0
        %v1030 = vadd.f32 %v934, %v1029
        %v1031 = vpop.f32.mrb[0].mxu0
        %1032 = vmatprep.mubr.f32.mxu0 0.0
        %v1033 = vand.u32 %v853, 4294901760
        %1034 = vmatmul.mubr.f32.gmra.mrb[0].mxu0 %v1033
        %v1035 = vpop.f32.mrb[0].mxu0
        %v1036 = vadd.f32 %v944, %v1035
        %v1037 = vpop.f32.mrb[0].mxu0
        %1038 = vmatprep.mubr.f32.mxu0 0.0
        %v1039 = vand.u32 %v856, 4294901760
        %1040 = vmatmul.mubr.f32.gmra.mrb[0].mxu0 %v1039
        %v1041 = vpop.f32.mrb[0].mxu0
        %v1042 = vadd.f32 %v954, %v1041
        %v1043 = vpop.f32.mrb[0].mxu0
        %1044 = vdwg.mxu0
        %1045 = vmatprep.subr.mxu0 0.0
        %v1046 = vand.u32 %v859, 4294901760
        %v1047 = vsub.f32 %v859, %v1046
        %1048 = vmatpush1.msra.mxu0 %v1047
        %1049 = vmatprep.subr.mxu0 0.0
        %1050 = vmatpush1.msra.mxu0 0.0
        %1051 = vmatprep.subr.mxu0 0.0
        %1052 = vmatpush1.msra.mxu0 0.0
        %1053 = vmatprep.subr.mxu0 0.0
        %1054 = vmatpush1.msra.mxu0 0.0
        %1055 = vmatprep.subr.mxu0 0.0
        %1056 = vmatpush1.msra.mxu0 0.0
        %1057 = vmatprep.subr.mxu0 0.0
        %1058 = vmatpush1.msra.mxu0 0.0
        %1059 = vmatprep.subr.mxu0 0.0
        %1060 = vmatpush1.msra.mxu0 0.0
        %1061 = vmatprep.subr.mxu0 0.0
        %1062 = vmatpush1.msra.mxu0 0.0
        %1063 = vmatprep.subr.mxu0 0.0
        %1064 = vmatpush1.msra.mxu0 0.0
        %1065 = vmatprep.subr.mxu0 0.0
        %1066 = vmatpush1.msra.mxu0 0.0
        %1067 = vmatprep.subr.mxu0 0.0
        %1068 = vmatpush1.msra.mxu0 0.0
        %1069 = vmatprep.subr.mxu0 0.0
        %1070 = vmatpush1.msra.mxu0 0.0
        %1071 = vmatprep.subr.mxu0 0.0
        %1072 = vmatpush1.msra.mxu0 0.0
        %1073 = vmatprep.subr.mxu0 0.0
        %1074 = vmatpush1.msra.mxu0 0.0
        %1075 = vmatprep.subr.mxu0 0.0
        %1076 = vmatpush1.msra.mxu0 0.0
        %1077 = vmatprep.subr.mxu0 0.0
        %1078 = vmatpush1.msra.mxu0 0.0
        %1079 = vmatprep.subr.mxu0 0.0
        %1080 = vmatpush1.msra.mxu0 0.0
        %1081 = vmatprep.subr.mxu0 0.0
        %1082 = vmatpush1.msra.mxu0 0.0
        %1083 = vmatprep.subr.mxu0 0.0
        %1084 = vmatpush1.msra.mxu0 0.0
        %1085 = vmatprep.subr.mxu0 0.0
        %1086 = vmatpush1.msra.mxu0 0.0
        %1087 = vmatprep.subr.mxu0 0.0
        %1088 = vmatpush1.msra.mxu0 0.0
        %1089 = vmatprep.subr.mxu0 0.0
        %1090 = vmatpush1.msra.mxu0 0.0
        %1091 = vmatprep.subr.mxu0 0.0
        %1092 = vmatpush1.msra.mxu0 0.0
        %1093 = vmatprep.subr.mxu0 0.0
        %1094 = vmatpush1.msra.mxu0 0.0
        %1095 = vmatprep.subr.mxu0 0.0
        %1096 = vmatpush1.msra.mxu0 0.0
        %1097 = vmatprep.subr.mxu0 0.0
        %1098 = vmatpush1.msra.mxu0 0.0
        %1099 = vmatprep.subr.mxu0 0.0
        %1100 = vmatpush1.msra.mxu0 0.0
        %1101 = vmatprep.subr.mxu0 0.0
        %1102 = vmatpush1.msra.mxu0 0.0
        %1103 = vmatprep.subr.mxu0 0.0
        %1104 = vmatpush1.msra.mxu0 0.0
        %1105 = vmatprep.subr.mxu0 0.0
        %1106 = vmatpush1.msra.mxu0 0.0
        %1107 = vmatprep.subr.mxu0 0.0
        %1108 = vmatpush1.msra.mxu0 0.0
        %1109 = vmatprep.subr.mxu0 0.0
        %1110 = vmatpush1.msra.mxu0 0.0
        %1111 = vmatprep.mubr.f32.mxu0 0.0
        %v1112 = vand.u32 %v850, 4294901760
        %v1113 = vsub.f32 %v850, %v1112
        %1114 = vmatmul.mubr.f32.gmra.mrb[0].mxu0 %v1113
        %v1115 = vpop.f32.mrb[0].mxu0
        %v1116 = vadd.f32 %v1030, %v1115
        %v1117 = vpop.f32.mrb[0].mxu0
        %1118 = vmatprep.mubr.f32.mxu0 0.0
        %v1119 = vand.u32 %v853, 4294901760
        %v1120 = vsub.f32 %v853, %v1119
        %1121 = vmatmul.mubr.f32.gmra.mrb[0].mxu0 %v1120
        %v1122 = vpop.f32.mrb[0].mxu0
        %v1123 = vadd.f32 %v1036, %v1122
        %v1124 = vpop.f32.mrb[0].mxu0
        %1125 = vmatprep.mubr.f32.mxu0 0.0
        %v1126 = vand.u32 %v856, 4294901760
        %v1127 = vsub.f32 %v856, %v1126
        %1128 = vmatmul.mubr.f32.gmra.mrb[0].mxu0 %v1127
        %v1129 = vpop.f32.mrb[0].mxu0
        %v1130 = vadd.f32 %v1042, %v1129
        %v1131 = vpop.f32.mrb[0].mxu0
        %1132 = vdwg.mxu0
        %1133 = vmatprep.subr.mxu0 0.0
        %v1134 = vand.u32 %v859, 4294901760
        %1135 = vmatpush1.msra.mxu0 %v1134
        %1136 = vmatprep.subr.mxu0 0.0
        %1137 = vmatpush1.msra.mxu0 0.0
        %1138 = vmatprep.subr.mxu0 0.0
        %1139 = vmatpush1.msra.mxu0 0.0
        %1140 = vmatprep.subr.mxu0 0.0
        %1141 = vmatpush1.msra.mxu0 0.0
        %1142 = vmatprep.subr.mxu0 0.0
        %1143 = vmatpush1.msra.mxu0 0.0
        %1144 = vmatprep.subr.mxu0 0.0
        %1145 = vmatpush1.msra.mxu0 0.0
        %1146 = vmatprep.subr.mxu0 0.0
        %1147 = vmatpush1.msra.mxu0 0.0
        %1148 = vmatprep.subr.mxu0 0.0
        %1149 = vmatpush1.msra.mxu0 0.0
        %1150 = vmatprep.subr.mxu0 0.0
        %1151 = vmatpush1.msra.mxu0 0.0
        %1152 = vmatprep.subr.mxu0 0.0
        %1153 = vmatpush1.msra.mxu0 0.0
        %1154 = vmatprep.subr.mxu0 0.0
        %1155 = vmatpush1.msra.mxu0 0.0
        %1156 = vmatprep.subr.mxu0 0.0
        %1157 = vmatpush1.msra.mxu0 0.0
        %1158 = vmatprep.subr.mxu0 0.0
        %1159 = vmatpush1.msra.mxu0 0.0
        %1160 = vmatprep.subr.mxu0 0.0
        %1161 = vmatpush1.msra.mxu0 0.0
        %1162 = vmatprep.subr.mxu0 0.0
        %1163 = vmatpush1.msra.mxu0 0.0
        %1164 = vmatprep.subr.mxu0 0.0
        %1165 = vmatpush1.msra.mxu0 0.0
        %1166 = vmatprep.subr.mxu0 0.0
        %1167 = vmatpush1.msra.mxu0 0.0
        %1168 = vmatprep.subr.mxu0 0.0
        %1169 = vmatpush1.msra.mxu0 0.0
        %1170 = vmatprep.subr.mxu0 0.0
        %1171 = vmatpush1.msra.mxu0 0.0
        %1172 = vmatprep.subr.mxu0 0.0
        %1173 = vmatpush1.msra.mxu0 0.0
        %1174 = vmatprep.subr.mxu0 0.0
        %1175 = vmatpush1.msra.mxu0 0.0
        %1176 = vmatprep.subr.mxu0 0.0
        %1177 = vmatpush1.msra.mxu0 0.0
        %1178 = vmatprep.subr.mxu0 0.0
        %1179 = vmatpush1.msra.mxu0 0.0
        %1180 = vmatprep.subr.mxu0 0.0
        %1181 = vmatpush1.msra.mxu0 0.0
        %1182 = vmatprep.subr.mxu0 0.0
        %1183 = vmatpush1.msra.mxu0 0.0
        %1184 = vmatprep.subr.mxu0 0.0
        %1185 = vmatpush1.msra.mxu0 0.0
        %1186 = vmatprep.subr.mxu0 0.0
        %1187 = vmatpush1.msra.mxu0 0.0
        %1188 = vmatprep.subr.mxu0 0.0
        %1189 = vmatpush1.msra.mxu0 0.0
        %1190 = vmatprep.subr.mxu0 0.0
        %1191 = vmatpush1.msra.mxu0 0.0
        %1192 = vmatprep.subr.mxu0 0.0
        %1193 = vmatpush1.msra.mxu0 0.0
        %1194 = vmatprep.subr.mxu0 0.0
        %1195 = vmatpush1.msra.mxu0 0.0
        %1196 = vmatprep.subr.mxu0 0.0
        %1197 = vmatpush1.msra.mxu0 0.0
        %1198 = vmatprep.mubr.f32.mxu0 0.0
        %v1199 = vand.u32 %v850, 4294901760
        %v1200 = vsub.f32 %v850, %v1199
        %v1201 = vand.u32 %v1200, 4294901760
        %1202 = vmatmul.mubr.f32.gmra.mrb[0].mxu0 %v1201
        %v1203 = vpop.f32.mrb[0].mxu0
        %v1204 = vadd.f32 %v1116, %v1203
        %v1205 = vpop.f32.mrb[0].mxu0
        %1206 = vmatprep.mubr.f32.mxu0 0.0
        %v1207 = vand.u32 %v853, 4294901760
        %v1208 = vsub.f32 %v853, %v1207
        %v1209 = vand.u32 %v1208, 4294901760
        %1210 = vmatmul.mubr.f32.gmra.mrb[0].mxu0 %v1209
        %v1211 = vpop.f32.mrb[0].mxu0
        %v1212 = vadd.f32 %v1123, %v1211
        %v1213 = vpop.f32.mrb[0].mxu0
        %1214 = vmatprep.mubr.f32.mxu0 0.0
        %v1215 = vand.u32 %v856, 4294901760
        %v1216 = vsub.f32 %v856, %v1215
        %v1217 = vand.u32 %v1216, 4294901760
        %1218 = vmatmul.mubr.f32.gmra.mrb[0].mxu0 %v1217
        %v1219 = vpop.f32.mrb[0].mxu0
        %v1220 = vadd.f32 %v1130, %v1219
        %v1221 = vpop.f32.mrb[0].mxu0
        %1222 = vdwg.mxu0
        %1223 = vmatprep.subr.mxu0 0.0
        %v1224 = vand.u32 %v859, 4294901760
        %v1225 = vsub.f32 %v859, %v1224
        %v1226 = vand.u32 %v1225, 4294901760
        %1227 = vmatpush1.msra.mxu0 %v1226
        %1228 = vmatprep.subr.mxu0 0.0
        %1229 = vmatpush1.msra.mxu0 0.0
        %1230 = vmatprep.subr.mxu0 0.0
        %1231 = vmatpush1.msra.mxu0 0.0
        %1232 = vmatprep.subr.mxu0 0.0
        %1233 = vmatpush1.msra.mxu0 0.0
        %1234 = vmatprep.subr.mxu0 0.0
        %1235 = vmatpush1.msra.mxu0 0.0
        %1236 = vmatprep.subr.mxu0 0.0
        %1237 = vmatpush1.msra.mxu0 0.0
        %1238 = vmatprep.subr.mxu0 0.0
        %1239 = vmatpush1.msra.mxu0 0.0
        %1240 = vmatprep.subr.mxu0 0.0
        %1241 = vmatpush1.msra.mxu0 0.0
        %1242 = vmatprep.subr.mxu0 0.0
        %1243 = vmatpush1.msra.mxu0 0.0
        %1244 = vmatprep.subr.mxu0 0.0
        %1245 = vmatpush1.msra.mxu0 0.0
        %1246 = vmatprep.subr.mxu0 0.0
        %1247 = vmatpush1.msra.mxu0 0.0
        %1248 = vmatprep.subr.mxu0 0.0
        %1249 = vmatpush1.msra.mxu0 0.0
        %1250 = vmatprep.subr.mxu0 0.0
        %1251 = vmatpush1.msra.mxu0 0.0
        %1252 = vmatprep.subr.mxu0 0.0
        %1253 = vmatpush1.msra.mxu0 0.0
        %1254 = vmatprep.subr.mxu0 0.0
        %1255 = vmatpush1.msra.mxu0 0.0
        %1256 = vmatprep.subr.mxu0 0.0
        %1257 = vmatpush1.msra.mxu0 0.0
        %1258 = vmatprep.subr.mxu0 0.0
        %1259 = vmatpush1.msra.mxu0 0.0
        %1260 = vmatprep.subr.mxu0 0.0
        %1261 = vmatpush1.msra.mxu0 0.0
        %1262 = vmatprep.subr.mxu0 0.0
        %1263 = vmatpush1.msra.mxu0 0.0
        %1264 = vmatprep.subr.mxu0 0.0
        %1265 = vmatpush1.msra.mxu0 0.0
        %1266 = vmatprep.subr.mxu0 0.0
        %1267 = vmatpush1.msra.mxu0 0.0
        %1268 = vmatprep.subr.mxu0 0.0
        %1269 = vmatpush1.msra.mxu0 0.0
        %1270 = vmatprep.subr.mxu0 0.0
        %1271 = vmatpush1.msra.mxu0 0.0
        %1272 = vmatprep.subr.mxu0 0.0
        %1273 = vmatpush1.msra.mxu0 0.0
        %1274 = vmatprep.subr.mxu0 0.0
        %1275 = vmatpush1.msra.mxu0 0.0
        %1276 = vmatprep.subr.mxu0 0.0
        %1277 = vmatpush1.msra.mxu0 0.0
        %1278 = vmatprep.subr.mxu0 0.0
        %1279 = vmatpush1.msra.mxu0 0.0
        %1280 = vmatprep.subr.mxu0 0.0
        %1281 = vmatpush1.msra.mxu0 0.0
        %1282 = vmatprep.subr.mxu0 0.0
        %1283 = vmatpush1.msra.mxu0 0.0
        %1284 = vmatprep.subr.mxu0 0.0
        %1285 = vmatpush1.msra.mxu0 0.0
        %1286 = vmatprep.subr.mxu0 0.0
        %1287 = vmatpush1.msra.mxu0 0.0
        %1288 = vmatprep.subr.mxu0 0.0
        %1289 = vmatpush1.msra.mxu0 0.0
        %1290 = vmatprep.mubr.f32.mxu0 0.0
        %v1291 = vand.u32 %v850, 4294901760
        %1292 = vmatmul.mubr.f32.gmra.mrb[0].mxu0 %v1291
        %v1293 = vpop.f32.mrb[0].mxu0
        %v1294 = vadd.f32 %v1204, %v1293
        %v1295 = vpop.f32.mrb[0].mxu0
        %1296 = vmatprep.mubr.f32.mxu0 0.0
        %v1297 = vand.u32 %v853, 4294901760
        %1298 = vmatmul.mubr.f32.gmra.mrb[0].mxu0 %v1297
        %v1299 = vpop.f32.mrb[0].mxu0
        %v1300 = vadd.f32 %v1212, %v1299
        %v1301 = vpop.f32.mrb[0].mxu0
        %1302 = vmatprep.mubr.f32.mxu0 0.0
        %v1303 = vand.u32 %v856, 4294901760
        %1304 = vmatmul.mubr.f32.gmra.mrb[0].mxu0 %v1303
        %v1305 = vpop.f32.mrb[0].mxu0
        %v1306 = vadd.f32 %v1220, %v1305
        %v1307 = vpop.f32.mrb[0].mxu0
        %1308 = vdwg.mxu0
        %1309 = vmatprep.subr.mxu0 0.0
        %v1310 = vand.u32 %v859, 4294901760
        %1311 = vmatpush1.msra.mxu0 %v1310
        %1312 = vmatprep.subr.mxu0 0.0
        %1313 = vmatpush1.msra.mxu0 0.0
        %1314 = vmatprep.subr.mxu0 0.0
        %1315 = vmatpush1.msra.mxu0 0.0
        %1316 = vmatprep.subr.mxu0 0.0
        %1317 = vmatpush1.msra.mxu0 0.0
        %1318 = vmatprep.subr.mxu0 0.0
        %1319 = vmatpush1.msra.mxu0 0.0
        %1320 = vmatprep.subr.mxu0 0.0
        %1321 = vmatpush1.msra.mxu0 0.0
        %1322 = vmatprep.subr.mxu0 0.0
        %1323 = vmatpush1.msra.mxu0 0.0
        %1324 = vmatprep.subr.mxu0 0.0
        %1325 = vmatpush1.msra.mxu0 0.0
        %1326 = vmatprep.subr.mxu0 0.0
        %1327 = vmatpush1.msra.mxu0 0.0
        %1328 = vmatprep.subr.mxu0 0.0
        %1329 = vmatpush1.msra.mxu0 0.0
        %1330 = vmatprep.subr.mxu0 0.0
        %1331 = vmatpush1.msra.mxu0 0.0
        %1332 = vmatprep.subr.mxu0 0.0
        %1333 = vmatpush1.msra.mxu0 0.0
        %1334 = vmatprep.subr.mxu0 0.0
        %1335 = vmatpush1.msra.mxu0 0.0
        %1336 = vmatprep.subr.mxu0 0.0
        %1337 = vmatpush1.msra.mxu0 0.0
        %1338 = vmatprep.subr.mxu0 0.0
        %1339 = vmatpush1.msra.mxu0 0.0
        %1340 = vmatprep.subr.mxu0 0.0
        %1341 = vmatpush1.msra.mxu0 0.0
        %1342 = vmatprep.subr.mxu0 0.0
        %1343 = vmatpush1.msra.mxu0 0.0
        %1344 = vmatprep.subr.mxu0 0.0
        %1345 = vmatpush1.msra.mxu0 0.0
        %1346 = vmatprep.subr.mxu0 0.0
        %1347 = vmatpush1.msra.mxu0 0.0
        %1348 = vmatprep.subr.mxu0 0.0
        %1349 = vmatpush1.msra.mxu0 0.0
        %1350 = vmatprep.subr.mxu0 0.0
        %1351 = vmatpush1.msra.mxu0 0.0
        %1352 = vmatprep.subr.mxu0 0.0
        %1353 = vmatpush1.msra.mxu0 0.0
        %1354 = vmatprep.subr.mxu0 0.0
        %1355 = vmatpush1.msra.mxu0 0.0
        %1356 = vmatprep.subr.mxu0 0.0
        %1357 = vmatpush1.msra.mxu0 0.0
        %1358 = vmatprep.subr.mxu0 0.0
        %1359 = vmatpush1.msra.mxu0 0.0
        %1360 = vmatprep.subr.mxu0 0.0
        %1361 = vmatpush1.msra.mxu0 0.0
        %1362 = vmatprep.subr.mxu0 0.0
        %1363 = vmatpush1.msra.mxu0 0.0
        %1364 = vmatprep.subr.mxu0 0.0
        %1365 = vmatpush1.msra.mxu0 0.0
        %1366 = vmatprep.subr.mxu0 0.0
        %1367 = vmatpush1.msra.mxu0 0.0
        %1368 = vmatprep.subr.mxu0 0.0
        %1369 = vmatpush1.msra.mxu0 0.0
        %1370 = vmatprep.subr.mxu0 0.0
        %1371 = vmatpush1.msra.mxu0 0.0
        %1372 = vmatprep.subr.mxu0 0.0
        %1373 = vmatpush1.msra.mxu0 0.0
        %1374 = vmatprep.mubr.f32.mxu0 0.0
        %v1375 = vand.u32 %v850, 4294901760
        %1376 = vmatmul.mubr.f32.gmra.mrb[0].mxu0 %v1375
        %v1377 = vpop.f32.mrb[0].mxu0
        %v1378 = vadd.f32 %v1294, %v1377
        %v1379 = vpop.f32.mrb[0].mxu0
        %1380 = vmatprep.mubr.f32.mxu0 0.0
        %v1381 = vand.u32 %v853, 4294901760
        %1382 = vmatmul.mubr.f32.gmra.mrb[0].mxu0 %v1381
        %v1383 = vpop.f32.mrb[0].mxu0
        %v1384 = vadd.f32 %v1300, %v1383
        %v1385 = vpop.f32.mrb[0].mxu0
        %1386 = vmatprep.mubr.f32.mxu0 0.0
        %v1387 = vand.u32 %v856, 4294901760
        %1388 = vmatmul.mubr.f32.gmra.mrb[0].mxu0 %v1387
        %v1389 = vpop.f32.mrb[0].mxu0
        %v1390 = vadd.f32 %v1306, %v1389
        %v1391 = vpop.f32.mrb[0].mxu0
        %1392 = vdwg.mxu0
        %v1393 = vld [vmem:[%s288 + $0x4] sm:$0xff]
        %v1394 = vld [vmem:[%s288 + $0xc] sm:$0xff]
        %v1395 = vld [vmem:[%s288 + $0x14] sm:$0xf]
        %s1396 = scalar_lea.vmem %s1, 8
        %v1397 = vld [vmem:[%s1396] sm:$0xf]
        %v1399 = vsel %vm303, %v1393, 0
        %v1402 = vsel %vm303, %v1394, 0
        %v1405 = vsel %vm303, %v1395, 0
        %v1408 = vsel %vm313, %v1397, 0
        %1410 = vmatprep.subr.mxu0 0.0
        %v1411 = vand.u32 %v1408, 4294901760
        %1412 = vmatpush1.msra.mxu0 %v1411
        %1413 = vmatprep.subr.mxu0 0.0
        %1414 = vmatpush1.msra.mxu0 0.0
        %1415 = vmatprep.subr.mxu0 0.0
        %1416 = vmatpush1.msra.mxu0 0.0
        %1417 = vmatprep.subr.mxu0 0.0
        %1418 = vmatpush1.msra.mxu0 0.0
        %1419 = vmatprep.subr.mxu0 0.0
        %1420 = vmatpush1.msra.mxu0 0.0
        %1421 = vmatprep.subr.mxu0 0.0
        %1422 = vmatpush1.msra.mxu0 0.0
        %1423 = vmatprep.subr.mxu0 0.0
        %1424 = vmatpush1.msra.mxu0 0.0
        %1425 = vmatprep.subr.mxu0 0.0
        %1426 = vmatpush1.msra.mxu0 0.0
        %1427 = vmatprep.subr.mxu0 0.0
        %1428 = vmatpush1.msra.mxu0 0.0
        %1429 = vmatprep.subr.mxu0 0.0
        %1430 = vmatpush1.msra.mxu0 0.0
        %1431 = vmatprep.subr.mxu0 0.0
        %1432 = vmatpush1.msra.mxu0 0.0
        %1433 = vmatprep.subr.mxu0 0.0
        %1434 = vmatpush1.msra.mxu0 0.0
        %1435 = vmatprep.subr.mxu0 0.0
        %1436 = vmatpush1.msra.mxu0 0.0
        %1437 = vmatprep.subr.mxu0 0.0
        %1438 = vmatpush1.msra.mxu0 0.0
        %1439 = vmatprep.subr.mxu0 0.0
        %1440 = vmatpush1.msra.mxu0 0.0
        %1441 = vmatprep.subr.mxu0 0.0
        %1442 = vmatpush1.msra.mxu0 0.0
        %1443 = vmatprep.subr.mxu0 0.0
        %1444 = vmatpush1.msra.mxu0 0.0
        %1445 = vmatprep.subr.mxu0 0.0
        %1446 = vmatpush1.msra.mxu0 0.0
        %1447 = vmatprep.subr.mxu0 0.0
        %1448 = vmatpush1.msra.mxu0 0.0
        %1449 = vmatprep.subr.mxu0 0.0
        %1450 = vmatpush1.msra.mxu0 0.0
        %1451 = vmatprep.subr.mxu0 0.0
        %1452 = vmatpush1.msra.mxu0 0.0
        %1453 = vmatprep.subr.mxu0 0.0
        %1454 = vmatpush1.msra.mxu0 0.0
        %1455 = vmatprep.subr.mxu0 0.0
        %1456 = vmatpush1.msra.mxu0 0.0
        %1457 = vmatprep.subr.mxu0 0.0
        %1458 = vmatpush1.msra.mxu0 0.0
        %1459 = vmatprep.subr.mxu0 0.0
        %1460 = vmatpush1.msra.mxu0 0.0
        %1461 = vmatprep.subr.mxu0 0.0
        %1462 = vmatpush1.msra.mxu0 0.0
        %1463 = vmatprep.subr.mxu0 0.0
        %1464 = vmatpush1.msra.mxu0 0.0
        %1465 = vmatprep.subr.mxu0 0.0
        %1466 = vmatpush1.msra.mxu0 0.0
        %1467 = vmatprep.subr.mxu0 0.0
        %1468 = vmatpush1.msra.mxu0 0.0
        %1469 = vmatprep.subr.mxu0 0.0
        %1470 = vmatpush1.msra.mxu0 0.0
        %1471 = vmatprep.subr.mxu0 0.0
        %1472 = vmatpush1.msra.mxu0 0.0
        %1473 = vmatprep.subr.mxu0 0.0
        %1474 = vmatpush1.msra.mxu0 0.0
        %1475 = vmatprep.mubr.f32.mxu0 0.0
        %v1476 = vand.u32 %v1399, 4294901760
        %v1477 = vsub.f32 %v1399, %v1476
        %v1478 = vand.u32 %v1477, 4294901760
        %v1479 = vsub.f32 %v1477, %v1478
        %v1480 = vand.u32 %v1479, 4294901760
        %1481 = vmatmul.mubr.f32.gmra.mrb[0].mxu0 %v1480
        %v1482 = vpop.f32.mrb[0].mxu0
        %v1483 = vadd.f32 0.0, %v1482
        %v1484 = vpop.f32.mrb[0].mxu0
        %1485 = vmatprep.mubr.f32.mxu0 0.0
        %v1486 = vand.u32 %v1402, 4294901760
        %v1487 = vsub.f32 %v1402, %v1486
        %v1488 = vand.u32 %v1487, 4294901760
        %v1489 = vsub.f32 %v1487, %v1488
        %v1490 = vand.u32 %v1489, 4294901760
        %1491 = vmatmul.mubr.f32.gmra.mrb[0].mxu0 %v1490
        %v1492 = vpop.f32.mrb[0].mxu0
        %v1493 = vadd.f32 0.0, %v1492
        %v1494 = vpop.f32.mrb[0].mxu0
        %1495 = vmatprep.mubr.f32.mxu0 0.0
        %v1496 = vand.u32 %v1405, 4294901760
        %v1497 = vsub.f32 %v1405, %v1496
        %v1498 = vand.u32 %v1497, 4294901760
        %v1499 = vsub.f32 %v1497, %v1498
        %v1500 = vand.u32 %v1499, 4294901760
        %1501 = vmatmul.mubr.f32.gmra.mrb[0].mxu0 %v1500
        %v1502 = vpop.f32.mrb[0].mxu0
        %v1503 = vadd.f32 0.0, %v1502
        %v1504 = vpop.f32.mrb[0].mxu0
        %1505 = vdwg.mxu0
        %1506 = vmatprep.subr.mxu0 0.0
        %v1507 = vand.u32 %v1408, 4294901760
        %v1508 = vsub.f32 %v1408, %v1507
        %v1509 = vand.u32 %v1508, 4294901760
        %v1510 = vsub.f32 %v1508, %v1509
        %v1511 = vand.u32 %v1510, 4294901760
        %1512 = vmatpush1.msra.mxu0 %v1511
        %1513 = vmatprep.subr.mxu0 0.0
        %1514 = vmatpush1.msra.mxu0 0.0
        %1515 = vmatprep.subr.mxu0 0.0
        %1516 = vmatpush1.msra.mxu0 0.0
        %1517 = vmatprep.subr.mxu0 0.0
        %1518 = vmatpush1.msra.mxu0 0.0
        %1519 = vmatprep.subr.mxu0 0.0
        %1520 = vmatpush1.msra.mxu0 0.0
        %1521 = vmatprep.subr.mxu0 0.0
        %1522 = vmatpush1.msra.mxu0 0.0
        %1523 = vmatprep.subr.mxu0 0.0
        %1524 = vmatpush1.msra.mxu0 0.0
        %1525 = vmatprep.subr.mxu0 0.0
        %1526 = vmatpush1.msra.mxu0 0.0
        %1527 = vmatprep.subr.mxu0 0.0
        %1528 = vmatpush1.msra.mxu0 0.0
        %1529 = vmatprep.subr.mxu0 0.0
        %1530 = vmatpush1.msra.mxu0 0.0
        %1531 = vmatprep.subr.mxu0 0.0
        %1532 = vmatpush1.msra.mxu0 0.0
        %1533 = vmatprep.subr.mxu0 0.0
        %1534 = vmatpush1.msra.mxu0 0.0
        %1535 = vmatprep.subr.mxu0 0.0
        %1536 = vmatpush1.msra.mxu0 0.0
        %1537 = vmatprep.subr.mxu0 0.0
        %1538 = vmatpush1.msra.mxu0 0.0
        %1539 = vmatprep.subr.mxu0 0.0
        %1540 = vmatpush1.msra.mxu0 0.0
        %1541 = vmatprep.subr.mxu0 0.0
        %1542 = vmatpush1.msra.mxu0 0.0
        %1543 = vmatprep.subr.mxu0 0.0
        %1544 = vmatpush1.msra.mxu0 0.0
        %1545 = vmatprep.subr.mxu0 0.0
        %1546 = vmatpush1.msra.mxu0 0.0
        %1547 = vmatprep.subr.mxu0 0.0
        %1548 = vmatpush1.msra.mxu0 0.0
        %1549 = vmatprep.subr.mxu0 0.0
        %1550 = vmatpush1.msra.mxu0 0.0
        %1551 = vmatprep.subr.mxu0 0.0
        %1552 = vmatpush1.msra.mxu0 0.0
        %1553 = vmatprep.subr.mxu0 0.0
        %1554 = vmatpush1.msra.mxu0 0.0
        %1555 = vmatprep.subr.mxu0 0.0
        %1556 = vmatpush1.msra.mxu0 0.0
        %1557 = vmatprep.subr.mxu0 0.0
        %1558 = vmatpush1.msra.mxu0 0.0
        %1559 = vmatprep.subr.mxu0 0.0
        %1560 = vmatpush1.msra.mxu0 0.0
        %1561 = vmatprep.subr.mxu0 0.0
        %1562 = vmatpush1.msra.mxu0 0.0
        %1563 = vmatprep.subr.mxu0 0.0
        %1564 = vmatpush1.msra.mxu0 0.0
        %1565 = vmatprep.subr.mxu0 0.0
        %1566 = vmatpush1.msra.mxu0 0.0
        %1567 = vmatprep.subr.mxu0 0.0
        %1568 = vmatpush1.msra.mxu0 0.0
        %1569 = vmatprep.subr.mxu0 0.0
        %1570 = vmatpush1.msra.mxu0 0.0
        %1571 = vmatprep.subr.mxu0 0.0
        %1572 = vmatpush1.msra.mxu0 0.0
        %1573 = vmatprep.subr.mxu0 0.0
        %1574 = vmatpush1.msra.mxu0 0.0
        %1575 = vmatprep.mubr.f32.mxu0 0.0
        %v1576 = vand.u32 %v1399, 4294901760
        %1577 = vmatmul.mubr.f32.gmra.mrb[0].mxu0 %v1576
        %v1578 = vpop.f32.mrb[0].mxu0
        %v1579 = vadd.f32 %v1483, %v1578
        %v1580 = vpop.f32.mrb[0].mxu0
        %1581 = vmatprep.mubr.f32.mxu0 0.0
        %v1582 = vand.u32 %v1402, 4294901760
        %1583 = vmatmul.mubr.f32.gmra.mrb[0].mxu0 %v1582
        %v1584 = vpop.f32.mrb[0].mxu0
        %v1585 = vadd.f32 %v1493, %v1584
        %v1586 = vpop.f32.mrb[0].mxu0
        %1587 = vmatprep.mubr.f32.mxu0 0.0
        %v1588 = vand.u32 %v1405, 4294901760
        %1589 = vmatmul.mubr.f32.gmra.mrb[0].mxu0 %v1588
        %v1590 = vpop.f32.mrb[0].mxu0
        %v1591 = vadd.f32 %v1503, %v1590
        %v1592 = vpop.f32.mrb[0].mxu0
        %1593 = vdwg.mxu0
        %1594 = vmatprep.subr.mxu0 0.0
        %v1595 = vand.u32 %v1408, 4294901760
        %v1596 = vsub.f32 %v1408, %v1595
        %1597 = vmatpush1.msra.mxu0 %v1596
        %1598 = vmatprep.subr.mxu0 0.0
        %1599 = vmatpush1.msra.mxu0 0.0
        %1600 = vmatprep.subr.mxu0 0.0
        %1601 = vmatpush1.msra.mxu0 0.0
        %1602 = vmatprep.subr.mxu0 0.0
        %1603 = vmatpush1.msra.mxu0 0.0
        %1604 = vmatprep.subr.mxu0 0.0
        %1605 = vmatpush1.msra.mxu0 0.0
        %1606 = vmatprep.subr.mxu0 0.0
        %1607 = vmatpush1.msra.mxu0 0.0
        %1608 = vmatprep.subr.mxu0 0.0
        %1609 = vmatpush1.msra.mxu0 0.0
        %1610 = vmatprep.subr.mxu0 0.0
        %1611 = vmatpush1.msra.mxu0 0.0
        %1612 = vmatprep.subr.mxu0 0.0
        %1613 = vmatpush1.msra.mxu0 0.0
        %1614 = vmatprep.subr.mxu0 0.0
        %1615 = vmatpush1.msra.mxu0 0.0
        %1616 = vmatprep.subr.mxu0 0.0
        %1617 = vmatpush1.msra.mxu0 0.0
        %1618 = vmatprep.subr.mxu0 0.0
        %1619 = vmatpush1.msra.mxu0 0.0
        %1620 = vmatprep.subr.mxu0 0.0
        %1621 = vmatpush1.msra.mxu0 0.0
        %1622 = vmatprep.subr.mxu0 0.0
        %1623 = vmatpush1.msra.mxu0 0.0
        %1624 = vmatprep.subr.mxu0 0.0
        %1625 = vmatpush1.msra.mxu0 0.0
        %1626 = vmatprep.subr.mxu0 0.0
        %1627 = vmatpush1.msra.mxu0 0.0
        %1628 = vmatprep.subr.mxu0 0.0
        %1629 = vmatpush1.msra.mxu0 0.0
        %1630 = vmatprep.subr.mxu0 0.0
        %1631 = vmatpush1.msra.mxu0 0.0
        %1632 = vmatprep.subr.mxu0 0.0
        %1633 = vmatpush1.msra.mxu0 0.0
        %1634 = vmatprep.subr.mxu0 0.0
        %1635 = vmatpush1.msra.mxu0 0.0
        %1636 = vmatprep.subr.mxu0 0.0
        %1637 = vmatpush1.msra.mxu0 0.0
        %1638 = vmatprep.subr.mxu0 0.0
        %1639 = vmatpush1.msra.mxu0 0.0
        %1640 = vmatprep.subr.mxu0 0.0
        %1641 = vmatpush1.msra.mxu0 0.0
        %1642 = vmatprep.subr.mxu0 0.0
        %1643 = vmatpush1.msra.mxu0 0.0
        %1644 = vmatprep.subr.mxu0 0.0
        %1645 = vmatpush1.msra.mxu0 0.0
        %1646 = vmatprep.subr.mxu0 0.0
        %1647 = vmatpush1.msra.mxu0 0.0
        %1648 = vmatprep.subr.mxu0 0.0
        %1649 = vmatpush1.msra.mxu0 0.0
        %1650 = vmatprep.subr.mxu0 0.0
        %1651 = vmatpush1.msra.mxu0 0.0
        %1652 = vmatprep.subr.mxu0 0.0
        %1653 = vmatpush1.msra.mxu0 0.0
        %1654 = vmatprep.subr.mxu0 0.0
        %1655 = vmatpush1.msra.mxu0 0.0
        %1656 = vmatprep.subr.mxu0 0.0
        %1657 = vmatpush1.msra.mxu0 0.0
        %1658 = vmatprep.subr.mxu0 0.0
        %1659 = vmatpush1.msra.mxu0 0.0
        %1660 = vmatprep.mubr.f32.mxu0 0.0
        %v1661 = vand.u32 %v1399, 4294901760
        %v1662 = vsub.f32 %v1399, %v1661
        %1663 = vmatmul.mubr.f32.gmra.mrb[0].mxu0 %v1662
        %v1664 = vpop.f32.mrb[0].mxu0
        %v1665 = vadd.f32 %v1579, %v1664
        %v1666 = vpop.f32.mrb[0].mxu0
        %1667 = vmatprep.mubr.f32.mxu0 0.0
        %v1668 = vand.u32 %v1402, 4294901760
        %v1669 = vsub.f32 %v1402, %v1668
        %1670 = vmatmul.mubr.f32.gmra.mrb[0].mxu0 %v1669
        %v1671 = vpop.f32.mrb[0].mxu0
        %v1672 = vadd.f32 %v1585, %v1671
        %v1673 = vpop.f32.mrb[0].mxu0
        %1674 = vmatprep.mubr.f32.mxu0 0.0
        %v1675 = vand.u32 %v1405, 4294901760
        %v1676 = vsub.f32 %v1405, %v1675
        %1677 = vmatmul.mubr.f32.gmra.mrb[0].mxu0 %v1676
        %v1678 = vpop.f32.mrb[0].mxu0
        %v1679 = vadd.f32 %v1591, %v1678
        %v1680 = vpop.f32.mrb[0].mxu0
        %1681 = vdwg.mxu0
        %1682 = vmatprep.subr.mxu0 0.0
        %v1683 = vand.u32 %v1408, 4294901760
        %1684 = vmatpush1.msra.mxu0 %v1683
        %1685 = vmatprep.subr.mxu0 0.0
        %1686 = vmatpush1.msra.mxu0 0.0
        %1687 = vmatprep.subr.mxu0 0.0
        %1688 = vmatpush1.msra.mxu0 0.0
        %1689 = vmatprep.subr.mxu0 0.0
        %1690 = vmatpush1.msra.mxu0 0.0
        %1691 = vmatprep.subr.mxu0 0.0
        %1692 = vmatpush1.msra.mxu0 0.0
        %1693 = vmatprep.subr.mxu0 0.0
        %1694 = vmatpush1.msra.mxu0 0.0
        %1695 = vmatprep.subr.mxu0 0.0
        %1696 = vmatpush1.msra.mxu0 0.0
        %1697 = vmatprep.subr.mxu0 0.0
        %1698 = vmatpush1.msra.mxu0 0.0
        %1699 = vmatprep.subr.mxu0 0.0
        %1700 = vmatpush1.msra.mxu0 0.0
        %1701 = vmatprep.subr.mxu0 0.0
        %1702 = vmatpush1.msra.mxu0 0.0
        %1703 = vmatprep.subr.mxu0 0.0
        %1704 = vmatpush1.msra.mxu0 0.0
        %1705 = vmatprep.subr.mxu0 0.0
        %1706 = vmatpush1.msra.mxu0 0.0
        %1707 = vmatprep.subr.mxu0 0.0
        %1708 = vmatpush1.msra.mxu0 0.0
        %1709 = vmatprep.subr.mxu0 0.0
        %1710 = vmatpush1.msra.mxu0 0.0
        %1711 = vmatprep.subr.mxu0 0.0
        %1712 = vmatpush1.msra.mxu0 0.0
        %1713 = vmatprep.subr.mxu0 0.0
        %1714 = vmatpush1.msra.mxu0 0.0
        %1715 = vmatprep.subr.mxu0 0.0
        %1716 = vmatpush1.msra.mxu0 0.0
        %1717 = vmatprep.subr.mxu0 0.0
        %1718 = vmatpush1.msra.mxu0 0.0
        %1719 = vmatprep.subr.mxu0 0.0
        %1720 = vmatpush1.msra.mxu0 0.0
        %1721 = vmatprep.subr.mxu0 0.0
        %1722 = vmatpush1.msra.mxu0 0.0
        %1723 = vmatprep.subr.mxu0 0.0
        %1724 = vmatpush1.msra.mxu0 0.0
        %1725 = vmatprep.subr.mxu0 0.0
        %1726 = vmatpush1.msra.mxu0 0.0
        %1727 = vmatprep.subr.mxu0 0.0
        %1728 = vmatpush1.msra.mxu0 0.0
        %1729 = vmatprep.subr.mxu0 0.0
        %1730 = vmatpush1.msra.mxu0 0.0
        %1731 = vmatprep.subr.mxu0 0.0
        %1732 = vmatpush1.msra.mxu0 0.0
        %1733 = vmatprep.subr.mxu0 0.0
        %1734 = vmatpush1.msra.mxu0 0.0
        %1735 = vmatprep.subr.mxu0 0.0
        %1736 = vmatpush1.msra.mxu0 0.0
        %1737 = vmatprep.subr.mxu0 0.0
        %1738 = vmatpush1.msra.mxu0 0.0
        %1739 = vmatprep.subr.mxu0 0.0
        %1740 = vmatpush1.msra.mxu0 0.0
        %1741 = vmatprep.subr.mxu0 0.0
        %1742 = vmatpush1.msra.mxu0 0.0
        %1743 = vmatprep.subr.mxu0 0.0
        %1744 = vmatpush1.msra.mxu0 0.0
        %1745 = vmatprep.subr.mxu0 0.0
        %1746 = vmatpush1.msra.mxu0 0.0
        %1747 = vmatprep.mubr.f32.mxu0 0.0
        %v1748 = vand.u32 %v1399, 4294901760
        %v1749 = vsub.f32 %v1399, %v1748
        %v1750 = vand.u32 %v1749, 4294901760
        %1751 = vmatmul.mubr.f32.gmra.mrb[0].mxu0 %v1750
        %v1752 = vpop.f32.mrb[0].mxu0
        %v1753 = vadd.f32 %v1665, %v1752
        %v1754 = vpop.f32.mrb[0].mxu0
        %1755 = vmatprep.mubr.f32.mxu0 0.0
        %v1756 = vand.u32 %v1402, 4294901760
        %v1757 = vsub.f32 %v1402, %v1756
        %v1758 = vand.u32 %v1757, 4294901760
        %1759 = vmatmul.mubr.f32.gmra.mrb[0].mxu0 %v1758
        %v1760 = vpop.f32.mrb[0].mxu0
        %v1761 = vadd.f32 %v1672, %v1760
        %v1762 = vpop.f32.mrb[0].mxu0
        %1763 = vmatprep.mubr.f32.mxu0 0.0
        %v1764 = vand.u32 %v1405, 4294901760
        %v1765 = vsub.f32 %v1405, %v1764
        %v1766 = vand.u32 %v1765, 4294901760
        %1767 = vmatmul.mubr.f32.gmra.mrb[0].mxu0 %v1766
        %v1768 = vpop.f32.mrb[0].mxu0
        %v1769 = vadd.f32 %v1679, %v1768
        %v1770 = vpop.f32.mrb[0].mxu0
        %1771 = vdwg.mxu0
        %1772 = vmatprep.subr.mxu0 0.0
        %v1773 = vand.u32 %v1408, 4294901760
        %v1774 = vsub.f32 %v1408, %v1773
        %v1775 = vand.u32 %v1774, 4294901760
        %1776 = vmatpush1.msra.mxu0 %v1775
        %1777 = vmatprep.subr.mxu0 0.0
        %1778 = vmatpush1.msra.mxu0 0.0
        %1779 = vmatprep.subr.mxu0 0.0
        %1780 = vmatpush1.msra.mxu0 0.0
        %1781 = vmatprep.subr.mxu0 0.0
        %1782 = vmatpush1.msra.mxu0 0.0
        %1783 = vmatprep.subr.mxu0 0.0
        %1784 = vmatpush1.msra.mxu0 0.0
        %1785 = vmatprep.subr.mxu0 0.0
        %1786 = vmatpush1.msra.mxu0 0.0
        %1787 = vmatprep.subr.mxu0 0.0
        %1788 = vmatpush1.msra.mxu0 0.0
        %1789 = vmatprep.subr.mxu0 0.0
        %1790 = vmatpush1.msra.mxu0 0.0
        %1791 = vmatprep.subr.mxu0 0.0
        %1792 = vmatpush1.msra.mxu0 0.0
        %1793 = vmatprep.subr.mxu0 0.0
        %1794 = vmatpush1.msra.mxu0 0.0
        %1795 = vmatprep.subr.mxu0 0.0
        %1796 = vmatpush1.msra.mxu0 0.0
        %1797 = vmatprep.subr.mxu0 0.0
        %1798 = vmatpush1.msra.mxu0 0.0
        %1799 = vmatprep.subr.mxu0 0.0
        %1800 = vmatpush1.msra.mxu0 0.0
        %1801 = vmatprep.subr.mxu0 0.0
        %1802 = vmatpush1.msra.mxu0 0.0
        %1803 = vmatprep.subr.mxu0 0.0
        %1804 = vmatpush1.msra.mxu0 0.0
        %1805 = vmatprep.subr.mxu0 0.0
        %1806 = vmatpush1.msra.mxu0 0.0
        %1807 = vmatprep.subr.mxu0 0.0
        %1808 = vmatpush1.msra.mxu0 0.0
        %1809 = vmatprep.subr.mxu0 0.0
        %1810 = vmatpush1.msra.mxu0 0.0
        %1811 = vmatprep.subr.mxu0 0.0
        %1812 = vmatpush1.msra.mxu0 0.0
        %1813 = vmatprep.subr.mxu0 0.0
        %1814 = vmatpush1.msra.mxu0 0.0
        %1815 = vmatprep.subr.mxu0 0.0
        %1816 = vmatpush1.msra.mxu0 0.0
        %1817 = vmatprep.subr.mxu0 0.0
        %1818 = vmatpush1.msra.mxu0 0.0
        %1819 = vmatprep.subr.mxu0 0.0
        %1820 = vmatpush1.msra.mxu0 0.0
        %1821 = vmatprep.subr.mxu0 0.0
        %1822 = vmatpush1.msra.mxu0 0.0
        %1823 = vmatprep.subr.mxu0 0.0
        %1824 = vmatpush1.msra.mxu0 0.0
        %1825 = vmatprep.subr.mxu0 0.0
        %1826 = vmatpush1.msra.mxu0 0.0
        %1827 = vmatprep.subr.mxu0 0.0
        %1828 = vmatpush1.msra.mxu0 0.0
        %1829 = vmatprep.subr.mxu0 0.0
        %1830 = vmatpush1.msra.mxu0 0.0
        %1831 = vmatprep.subr.mxu0 0.0
        %1832 = vmatpush1.msra.mxu0 0.0
        %1833 = vmatprep.subr.mxu0 0.0
        %1834 = vmatpush1.msra.mxu0 0.0
        %1835 = vmatprep.subr.mxu0 0.0
        %1836 = vmatpush1.msra.mxu0 0.0
        %1837 = vmatprep.subr.mxu0 0.0
        %1838 = vmatpush1.msra.mxu0 0.0
        %1839 = vmatprep.mubr.f32.mxu0 0.0
        %v1840 = vand.u32 %v1399, 4294901760
        %1841 = vmatmul.mubr.f32.gmra.mrb[0].mxu0 %v1840
        %v1842 = vpop.f32.mrb[0].mxu0
        %v1843 = vadd.f32 %v1753, %v1842
        %v1844 = vpop.f32.mrb[0].mxu0
        %1845 = vmatprep.mubr.f32.mxu0 0.0
        %v1846 = vand.u32 %v1402, 4294901760
        %1847 = vmatmul.mubr.f32.gmra.mrb[0].mxu0 %v1846
        %v1848 = vpop.f32.mrb[0].mxu0
        %v1849 = vadd.f32 %v1761, %v1848
        %v1850 = vpop.f32.mrb[0].mxu0
        %1851 = vmatprep.mubr.f32.mxu0 0.0
        %v1852 = vand.u32 %v1405, 4294901760
        %1853 = vmatmul.mubr.f32.gmra.mrb[0].mxu0 %v1852
        %v1854 = vpop.f32.mrb[0].mxu0
        %v1855 = vadd.f32 %v1769, %v1854
        %v1856 = vpop.f32.mrb[0].mxu0
        %1857 = vdwg.mxu0
        %1858 = vmatprep.subr.mxu0 0.0
        %v1859 = vand.u32 %v1408, 4294901760
        %1860 = vmatpush1.msra.mxu0 %v1859
        %1861 = vmatprep.subr.mxu0 0.0
        %1862 = vmatpush1.msra.mxu0 0.0
        %1863 = vmatprep.subr.mxu0 0.0
        %1864 = vmatpush1.msra.mxu0 0.0
        %1865 = vmatprep.subr.mxu0 0.0
        %1866 = vmatpush1.msra.mxu0 0.0
        %1867 = vmatprep.subr.mxu0 0.0
        %1868 = vmatpush1.msra.mxu0 0.0
        %1869 = vmatprep.subr.mxu0 0.0
        %1870 = vmatpush1.msra.mxu0 0.0
        %1871 = vmatprep.subr.mxu0 0.0
        %1872 = vmatpush1.msra.mxu0 0.0
        %1873 = vmatprep.subr.mxu0 0.0
        %1874 = vmatpush1.msra.mxu0 0.0
        %1875 = vmatprep.subr.mxu0 0.0
        %1876 = vmatpush1.msra.mxu0 0.0
        %1877 = vmatprep.subr.mxu0 0.0
        %1878 = vmatpush1.msra.mxu0 0.0
        %1879 = vmatprep.subr.mxu0 0.0
        %1880 = vmatpush1.msra.mxu0 0.0
        %1881 = vmatprep.subr.mxu0 0.0
        %1882 = vmatpush1.msra.mxu0 0.0
        %1883 = vmatprep.subr.mxu0 0.0
        %1884 = vmatpush1.msra.mxu0 0.0
        %1885 = vmatprep.subr.mxu0 0.0
        %1886 = vmatpush1.msra.mxu0 0.0
        %1887 = vmatprep.subr.mxu0 0.0
        %1888 = vmatpush1.msra.mxu0 0.0
        %1889 = vmatprep.subr.mxu0 0.0
        %1890 = vmatpush1.msra.mxu0 0.0
        %1891 = vmatprep.subr.mxu0 0.0
        %1892 = vmatpush1.msra.mxu0 0.0
        %1893 = vmatprep.subr.mxu0 0.0
        %1894 = vmatpush1.msra.mxu0 0.0
        %1895 = vmatprep.subr.mxu0 0.0
        %1896 = vmatpush1.msra.mxu0 0.0
        %1897 = vmatprep.subr.mxu0 0.0
        %1898 = vmatpush1.msra.mxu0 0.0
        %1899 = vmatprep.subr.mxu0 0.0
        %1900 = vmatpush1.msra.mxu0 0.0
        %1901 = vmatprep.subr.mxu0 0.0
        %1902 = vmatpush1.msra.mxu0 0.0
        %1903 = vmatprep.subr.mxu0 0.0
        %1904 = vmatpush1.msra.mxu0 0.0
        %1905 = vmatprep.subr.mxu0 0.0
        %1906 = vmatpush1.msra.mxu0 0.0
        %1907 = vmatprep.subr.mxu0 0.0
        %1908 = vmatpush1.msra.mxu0 0.0
        %1909 = vmatprep.subr.mxu0 0.0
        %1910 = vmatpush1.msra.mxu0 0.0
        %1911 = vmatprep.subr.mxu0 0.0
        %1912 = vmatpush1.msra.mxu0 0.0
        %1913 = vmatprep.subr.mxu0 0.0
        %1914 = vmatpush1.msra.mxu0 0.0
        %1915 = vmatprep.subr.mxu0 0.0
        %1916 = vmatpush1.msra.mxu0 0.0
        %1917 = vmatprep.subr.mxu0 0.0
        %1918 = vmatpush1.msra.mxu0 0.0
        %1919 = vmatprep.subr.mxu0 0.0
        %1920 = vmatpush1.msra.mxu0 0.0
        %1921 = vmatprep.subr.mxu0 0.0
        %1922 = vmatpush1.msra.mxu0 0.0
        %1923 = vmatprep.mubr.f32.mxu0 0.0
        %v1924 = vand.u32 %v1399, 4294901760
        %1925 = vmatmul.mubr.f32.gmra.mrb[0].mxu0 %v1924
        %v1926 = vpop.f32.mrb[0].mxu0
        %v1927 = vadd.f32 %v1843, %v1926
        %v1928 = vpop.f32.mrb[0].mxu0
        %1929 = vmatprep.mubr.f32.mxu0 0.0
        %v1930 = vand.u32 %v1402, 4294901760
        %1931 = vmatmul.mubr.f32.gmra.mrb[0].mxu0 %v1930
        %v1932 = vpop.f32.mrb[0].mxu0
        %v1933 = vadd.f32 %v1849, %v1932
        %v1934 = vpop.f32.mrb[0].mxu0
        %1935 = vmatprep.mubr.f32.mxu0 0.0
        %v1936 = vand.u32 %v1405, 4294901760
        %1937 = vmatmul.mubr.f32.gmra.mrb[0].mxu0 %v1936
        %v1938 = vpop.f32.mrb[0].mxu0
        %v1939 = vadd.f32 %v1855, %v1938
        %v1940 = vpop.f32.mrb[0].mxu0
        %1941 = vdwg.mxu0
        %v1942 = vadd.f32 %v1378, %v1927
        %v1943 = vadd.f32 %v1384, %v1933
        %v1944 = vadd.f32 %v1390, %v1939
        %v1945 = vld [vmem:[%s2] sm:$0x1]
        %v1947 = vlaneseq
        %v1948 = vshrl.u32 %v1947, 7
        %v1949 = vsub.s32 0, %v1948
        %v1950 = vrot.slane %v1945, %v1949
        %v1952 = vadd.f32 %v1942, %v1950
        %v1953 = vadd.f32 %v1943, %v1950
        %v1954 = vadd.f32 %v1944, %v1950
        %v1955 = vmax.f32 %v1952, 0.0
        %v1956 = vmax.f32 %v1953, 0.0
        %v1957 = vmax.f32 %v1954, 0.0
        %vm1958 = vcmask 257024
        %1959 = vst.msk [vmem:[#allocation2] sm:$0xf] %vm1958, 0.0
        %1960 = vst.msk [vmem:[#allocation2 + $0x18] sm:$0xf] %vm1958, 0.0
        %vm1961 = vcmask 261120
        %1962 = vst.msk [vmem:[#allocation2 + $0x4] sm:$0xff] %vm1961, %v1955
        %1963 = vst.msk [vmem:[#allocation2 + $0xc] sm:$0xff] %vm1961, %v1956
        %1964 = vst.msk [vmem:[#allocation2 + $0x14] sm:$0xf] %vm1958, %v1957
        %v1965 = vld [vmem:[#allocation2] sm:$0xff]
        %v1966 = vld [vmem:[#allocation2 + $0x8] sm:$0xff]
        %v1967 = vld [vmem:[#allocation2 + $0x10] sm:$0xf]
        %v1968 = vld [vmem:[#allocation3] sm:$0xff]
        %v1969 = vld [vmem:[#allocation3 + $0x8] sm:$0xff]
        %v1970 = vld [vmem:[#allocation3 + $0x10] sm:$0xff]
        %v1971 = vld [vmem:[#allocation3 + $0x18] sm:$0xff]
        %v1972 = vld [vmem:[#allocation2 + $0x2] sm:$0xff]
        %v1973 = vld [vmem:[#allocation2 + $0xa] sm:$0xff]
        %v1974 = vld [vmem:[#allocation2 + $0x12] sm:$0xf]
        %s1975 = scalar_lea.vmem [#allocation3], 32
        %v1976 = vld [vmem:[%s1975] sm:$0xff]
        %v1977 = vld [vmem:[%s1975 + $0x8] sm:$0xff]
        %v1978 = vld [vmem:[%s1975 + $0x10] sm:$0xff]
        %v1979 = vld [vmem:[%s1975 + $0x18] sm:$0xff]
        %v1981 = vsel %vm1961, %v1972, 0
        %v1984 = vsel %vm1961, %v1973, 0
        %v1987 = vsel %vm1961, %v1974, 0
        %1989 = vmatprep.subr.mxu0 0.0
        %v1990 = vand.u32 %v1976, 4294901760
        %1991 = vmatpush1.msra.mxu0 %v1990
        %1992 = vmatprep.subr.mxu0 0.0
        %v1993 = vand.u32 %v1977, 4294901760
        %1994 = vmatpush1.msra.mxu0 %v1993
        %1995 = vmatprep.subr.mxu0 0.0
        %v1996 = vand.u32 %v1978, 4294901760
        %1997 = vmatpush1.msra.mxu0 %v1996
        %1998 = vmatprep.subr.mxu0 0.0
        %v1999 = vand.u32 %v1979, 4294901760
        %2000 = vmatpush1.msra.mxu0 %v1999
        %2001 = vmatprep.subr.mxu0 0.0
        %2002 = vmatpush1.msra.mxu0 0.0
        %2003 = vmatprep.subr.mxu0 0.0
        %2004 = vmatpush1.msra.mxu0 0.0
        %2005 = vmatprep.subr.mxu0 0.0
        %2006 = vmatpush1.msra.mxu0 0.0
        %2007 = vmatprep.subr.mxu0 0.0
        %2008 = vmatpush1.msra.mxu0 0.0
        %2009 = vmatprep.subr.mxu0 0.0
        %2010 = vmatpush1.msra.mxu0 0.0
        %2011 = vmatprep.subr.mxu0 0.0
        %2012 = vmatpush1.msra.mxu0 0.0
        %2013 = vmatprep.subr.mxu0 0.0
        %2014 = vmatpush1.msra.mxu0 0.0
        %2015 = vmatprep.subr.mxu0 0.0
        %2016 = vmatpush1.msra.mxu0 0.0
        %2017 = vmatprep.subr.mxu0 0.0
        %2018 = vmatpush1.msra.mxu0 0.0
        %2019 = vmatprep.subr.mxu0 0.0
        %2020 = vmatpush1.msra.mxu0 0.0
        %2021 = vmatprep.subr.mxu0 0.0
        %2022 = vmatpush1.msra.mxu0 0.0
        %2023 = vmatprep.subr.mxu0 0.0
        %2024 = vmatpush1.msra.mxu0 0.0
        %2025 = vmatprep.subr.mxu0 0.0
        %2026 = vmatpush1.msra.mxu0 0.0
        %2027 = vmatprep.subr.mxu0 0.0
        %2028 = vmatpush1.msra.mxu0 0.0
        %2029 = vmatprep.subr.mxu0 0.0
        %2030 = vmatpush1.msra.mxu0 0.0
        %2031 = vmatprep.subr.mxu0 0.0
        %2032 = vmatpush1.msra.mxu0 0.0
        %2033 = vmatprep.subr.mxu0 0.0
        %2034 = vmatpush1.msra.mxu0 0.0
        %2035 = vmatprep.subr.mxu0 0.0
        %2036 = vmatpush1.msra.mxu0 0.0
        %2037 = vmatprep.subr.mxu0 0.0
        %2038 = vmatpush1.msra.mxu0 0.0
        %2039 = vmatprep.subr.mxu0 0.0
        %2040 = vmatpush1.msra.mxu0 0.0
        %2041 = vmatprep.subr.mxu0 0.0
        %2042 = vmatpush1.msra.mxu0 0.0
        %2043 = vmatprep.subr.mxu0 0.0
        %2044 = vmatpush1.msra.mxu0 0.0
        %2045 = vmatprep.subr.mxu0 0.0
        %2046 = vmatpush1.msra.mxu0 0.0
        %2047 = vmatprep.subr.mxu0 0.0
        %2048 = vmatpush1.msra.mxu0 0.0
        %2049 = vmatprep.subr.mxu0 0.0
        %2050 = vmatpush1.msra.mxu0 0.0
        %2051 = vmatprep.subr.mxu0 0.0
        %2052 = vmatpush1.msra.mxu0 0.0
        %2053 = vmatprep.subr.mxu0 0.0
        %2054 = vmatpush1.msra.mxu0 0.0
        %2055 = vmatprep.subr.mxu0 0.0
        %2056 = vmatpush1.msra.mxu0 0.0
        %2057 = vmatprep.mubr.f32.mxu0 0.0
        %v2058 = vand.u32 %v1981, 4294901760
        %v2059 = vsub.f32 %v1981, %v2058
        %v2060 = vand.u32 %v2059, 4294901760
        %v2061 = vsub.f32 %v2059, %v2060
        %v2062 = vand.u32 %v2061, 4294901760
        %2063 = vmatmul.mubr.f32.gmra.mrb[0].mxu0 %v2062
        %v2064 = vpop.f32.mrb[0].mxu0
        %v2065 = vadd.f32 0.0, %v2064
        %v2066 = vpop.f32.mrb[0].mxu0
        %2067 = vmatprep.mubr.f32.mxu0 0.0
        %v2068 = vand.u32 %v1984, 4294901760
        %v2069 = vsub.f32 %v1984, %v2068
        %v2070 = vand.u32 %v2069, 4294901760
        %v2071 = vsub.f32 %v2069, %v2070
        %v2072 = vand.u32 %v2071, 4294901760
        %2073 = vmatmul.mubr.f32.gmra.mrb[0].mxu0 %v2072
        %v2074 = vpop.f32.mrb[0].mxu0
        %v2075 = vadd.f32 0.0, %v2074
        %v2076 = vpop.f32.mrb[0].mxu0
        %2077 = vmatprep.mubr.f32.mxu0 0.0
        %v2078 = vand.u32 %v1987, 4294901760
        %v2079 = vsub.f32 %v1987, %v2078
        %v2080 = vand.u32 %v2079, 4294901760
        %v2081 = vsub.f32 %v2079, %v2080
        %v2082 = vand.u32 %v2081, 4294901760
        %2083 = vmatmul.mubr.f32.gmra.mrb[0].mxu0 %v2082
        %v2084 = vpop.f32.mrb[0].mxu0
        %v2085 = vadd.f32 0.0, %v2084
        %v2086 = vpop.f32.mrb[0].mxu0
        %2087 = vdwg.mxu0
        %2088 = vmatprep.subr.mxu0 0.0
        %v2089 = vand.u32 %v1976, 4294901760
        %v2090 = vsub.f32 %v1976, %v2089
        %v2091 = vand.u32 %v2090, 4294901760
        %v2092 = vsub.f32 %v2090, %v2091
        %v2093 = vand.u32 %v2092, 4294901760
        %2094 = vmatpush1.msra.mxu0 %v2093
        %2095 = vmatprep.subr.mxu0 0.0
        %v2096 = vand.u32 %v1977, 4294901760
        %v2097 = vsub.f32 %v1977, %v2096
        %v2098 = vand.u32 %v2097, 4294901760
        %v2099 = vsub.f32 %v2097, %v2098
        %v2100 = vand.u32 %v2099, 4294901760
        %2101 = vmatpush1.msra.mxu0 %v2100
        %2102 = vmatprep.subr.mxu0 0.0
        %v2103 = vand.u32 %v1978, 4294901760
        %v2104 = vsub.f32 %v1978, %v2103
        %v2105 = vand.u32 %v2104, 4294901760
        %v2106 = vsub.f32 %v2104, %v2105
        %v2107 = vand.u32 %v2106, 4294901760
        %2108 = vmatpush1.msra.mxu0 %v2107
        %2109 = vmatprep.subr.mxu0 0.0
        %v2110 = vand.u32 %v1979, 4294901760
        %v2111 = vsub.f32 %v1979, %v2110
        %v2112 = vand.u32 %v2111, 4294901760
        %v2113 = vsub.f32 %v2111, %v2112
        %v2114 = vand.u32 %v2113, 4294901760
        %2115 = vmatpush1.msra.mxu0 %v2114
        %2116 = vmatprep.subr.mxu0 0.0
        %2117 = vmatpush1.msra.mxu0 0.0
        %2118 = vmatprep.subr.mxu0 0.0
        %2119 = vmatpush1.msra.mxu0 0.0
        %2120 = vmatprep.subr.mxu0 0.0
        %2121 = vmatpush1.msra.mxu0 0.0
        %2122 = vmatprep.subr.mxu0 0.0
        %2123 = vmatpush1.msra.mxu0 0.0
        %2124 = vmatprep.subr.mxu0 0.0
        %2125 = vmatpush1.msra.mxu0 0.0
        %2126 = vmatprep.subr.mxu0 0.0
        %2127 = vmatpush1.msra.mxu0 0.0
        %2128 = vmatprep.subr.mxu0 0.0
        %2129 = vmatpush1.msra.mxu0 0.0
        %2130 = vmatprep.subr.mxu0 0.0
        %2131 = vmatpush1.msra.mxu0 0.0
        %2132 = vmatprep.subr.mxu0 0.0
        %2133 = vmatpush1.msra.mxu0 0.0
        %2134 = vmatprep.subr.mxu0 0.0
        %2135 = vmatpush1.msra.mxu0 0.0
        %2136 = vmatprep.subr.mxu0 0.0
        %2137 = vmatpush1.msra.mxu0 0.0
        %2138 = vmatprep.subr.mxu0 0.0
        %2139 = vmatpush1.msra.mxu0 0.0
        %2140 = vmatprep.subr.mxu0 0.0
        %2141 = vmatpush1.msra.mxu0 0.0
        %2142 = vmatprep.subr.mxu0 0.0
        %2143 = vmatpush1.msra.mxu0 0.0
        %2144 = vmatprep.subr.mxu0 0.0
        %2145 = vmatpush1.msra.mxu0 0.0
        %2146 = vmatprep.subr.mxu0 0.0
        %2147 = vmatpush1.msra.mxu0 0.0
        %2148 = vmatprep.subr.mxu0 0.0
        %2149 = vmatpush1.msra.mxu0 0.0
        %2150 = vmatprep.subr.mxu0 0.0
        %2151 = vmatpush1.msra.mxu0 0.0
        %2152 = vmatprep.subr.mxu0 0.0
        %2153 = vmatpush1.msra.mxu0 0.0
        %2154 = vmatprep.subr.mxu0 0.0
        %2155 = vmatpush1.msra.mxu0 0.0
        %2156 = vmatprep.subr.mxu0 0.0
        %2157 = vmatpush1.msra.mxu0 0.0
        %2158 = vmatprep.subr.mxu0 0.0
        %2159 = vmatpush1.msra.mxu0 0.0
        %2160 = vmatprep.subr.mxu0 0.0
        %2161 = vmatpush1.msra.mxu0 0.0
        %2162 = vmatprep.subr.mxu0 0.0
        %2163 = vmatpush1.msra.mxu0 0.0
        %2164 = vmatprep.subr.mxu0 0.0
        %2165 = vmatpush1.msra.mxu0 0.0
        %2166 = vmatprep.subr.mxu0 0.0
        %2167 = vmatpush1.msra.mxu0 0.0
        %2168 = vmatprep.subr.mxu0 0.0
        %2169 = vmatpush1.msra.mxu0 0.0
        %2170 = vmatprep.subr.mxu0 0.0
        %2171 = vmatpush1.msra.mxu0 0.0
        %2172 = vmatprep.mubr.f32.mxu0 0.0
        %v2173 = vand.u32 %v1981, 4294901760
        %2174 = vmatmul.mubr.f32.gmra.mrb[0].mxu0 %v2173
        %v2175 = vpop.f32.mrb[0].mxu0
        %v2176 = vadd.f32 %v2065, %v2175
        %v2177 = vpop.f32.mrb[0].mxu0
        %2178 = vmatprep.mubr.f32.mxu0 0.0
        %v2179 = vand.u32 %v1984, 4294901760
        %2180 = vmatmul.mubr.f32.gmra.mrb[0].mxu0 %v2179
        %v2181 = vpop.f32.mrb[0].mxu0
        %v2182 = vadd.f32 %v2075, %v2181
        %v2183 = vpop.f32.mrb[0].mxu0
        %2184 = vmatprep.mubr.f32.mxu0 0.0
        %v2185 = vand.u32 %v1987, 4294901760
        %2186 = vmatmul.mubr.f32.gmra.mrb[0].mxu0 %v2185
        %v2187 = vpop.f32.mrb[0].mxu0
        %v2188 = vadd.f32 %v2085, %v2187
        %v2189 = vpop.f32.mrb[0].mxu0
        %2190 = vdwg.mxu0
        %2191 = vmatprep.subr.mxu0 0.0
        %v2192 = vand.u32 %v1976, 4294901760
        %v2193 = vsub.f32 %v1976, %v2192
        %2194 = vmatpush1.msra.mxu0 %v2193
        %2195 = vmatprep.subr.mxu0 0.0
        %v2196 = vand.u32 %v1977, 4294901760
        %v2197 = vsub.f32 %v1977, %v2196
        %2198 = vmatpush1.msra.mxu0 %v2197
        %2199 = vmatprep.subr.mxu0 0.0
        %v2200 = vand.u32 %v1978, 4294901760
        %v2201 = vsub.f32 %v1978, %v2200
        %2202 = vmatpush1.msra.mxu0 %v2201
        %2203 = vmatprep.subr.mxu0 0.0
        %v2204 = vand.u32 %v1979, 4294901760
        %v2205 = vsub.f32 %v1979, %v2204
        %2206 = vmatpush1.msra.mxu0 %v2205
        %2207 = vmatprep.subr.mxu0 0.0
        %2208 = vmatpush1.msra.mxu0 0.0
        %2209 = vmatprep.subr.mxu0 0.0
        %2210 = vmatpush1.msra.mxu0 0.0
        %2211 = vmatprep.subr.mxu0 0.0
        %2212 = vmatpush1.msra.mxu0 0.0
        %2213 = vmatprep.subr.mxu0 0.0
        %2214 = vmatpush1.msra.mxu0 0.0
        %2215 = vmatprep.subr.mxu0 0.0
        %2216 = vmatpush1.msra.mxu0 0.0
        %2217 = vmatprep.subr.mxu0 0.0
        %2218 = vmatpush1.msra.mxu0 0.0
        %2219 = vmatprep.subr.mxu0 0.0
        %2220 = vmatpush1.msra.mxu0 0.0
        %2221 = vmatprep.subr.mxu0 0.0
        %2222 = vmatpush1.msra.mxu0 0.0
        %2223 = vmatprep.subr.mxu0 0.0
        %2224 = vmatpush1.msra.mxu0 0.0
        %2225 = vmatprep.subr.mxu0 0.0
        %2226 = vmatpush1.msra.mxu0 0.0
        %2227 = vmatprep.subr.mxu0 0.0
        %2228 = vmatpush1.msra.mxu0 0.0
        %2229 = vmatprep.subr.mxu0 0.0
        %2230 = vmatpush1.msra.mxu0 0.0
        %2231 = vmatprep.subr.mxu0 0.0
        %2232 = vmatpush1.msra.mxu0 0.0
        %2233 = vmatprep.subr.mxu0 0.0
        %2234 = vmatpush1.msra.mxu0 0.0
        %2235 = vmatprep.subr.mxu0 0.0
        %2236 = vmatpush1.msra.mxu0 0.0
        %2237 = vmatprep.subr.mxu0 0.0
        %2238 = vmatpush1.msra.mxu0 0.0
        %2239 = vmatprep.subr.mxu0 0.0
        %2240 = vmatpush1.msra.mxu0 0.0
        %2241 = vmatprep.subr.mxu0 0.0
        %2242 = vmatpush1.msra.mxu0 0.0
        %2243 = vmatprep.subr.mxu0 0.0
        %2244 = vmatpush1.msra.mxu0 0.0
        %2245 = vmatprep.subr.mxu0 0.0
        %2246 = vmatpush1.msra.mxu0 0.0
        %2247 = vmatprep.subr.mxu0 0.0
        %2248 = vmatpush1.msra.mxu0 0.0
        %2249 = vmatprep.subr.mxu0 0.0
        %2250 = vmatpush1.msra.mxu0 0.0
        %2251 = vmatprep.subr.mxu0 0.0
        %2252 = vmatpush1.msra.mxu0 0.0
        %2253 = vmatprep.subr.mxu0 0.0
        %2254 = vmatpush1.msra.mxu0 0.0
        %2255 = vmatprep.subr.mxu0 0.0
        %2256 = vmatpush1.msra.mxu0 0.0
        %2257 = vmatprep.subr.mxu0 0.0
        %2258 = vmatpush1.msra.mxu0 0.0
        %2259 = vmatprep.subr.mxu0 0.0
        %2260 = vmatpush1.msra.mxu0 0.0
        %2261 = vmatprep.subr.mxu0 0.0
        %2262 = vmatpush1.msra.mxu0 0.0
        %2263 = vmatprep.mubr.f32.mxu0 0.0
        %v2264 = vand.u32 %v1981, 4294901760
        %v2265 = vsub.f32 %v1981, %v2264
        %2266 = vmatmul.mubr.f32.gmra.mrb[0].mxu0 %v2265
        %v2267 = vpop.f32.mrb[0].mxu0
        %v2268 = vadd.f32 %v2176, %v2267
        %v2269 = vpop.f32.mrb[0].mxu0
        %2270 = vmatprep.mubr.f32.mxu0 0.0
        %v2271 = vand.u32 %v1984, 4294901760
        %v2272 = vsub.f32 %v1984, %v2271
        %2273 = vmatmul.mubr.f32.gmra.mrb[0].mxu0 %v2272
        %v2274 = vpop.f32.mrb[0].mxu0
        %v2275 = vadd.f32 %v2182, %v2274
        %v2276 = vpop.f32.mrb[0].mxu0
        %2277 = vmatprep.mubr.f32.mxu0 0.0
        %v2278 = vand.u32 %v1987, 4294901760
        %v2279 = vsub.f32 %v1987, %v2278
        %2280 = vmatmul.mubr.f32.gmra.mrb[0].mxu0 %v2279
        %v2281 = vpop.f32.mrb[0].mxu0
        %v2282 = vadd.f32 %v2188, %v2281
        %v2283 = vpop.f32.mrb[0].mxu0
        %2284 = vdwg.mxu0
        %2285 = vmatprep.subr.mxu0 0.0
        %v2286 = vand.u32 %v1976, 4294901760
        %2287 = vmatpush1.msra.mxu0 %v2286
        %2288 = vmatprep.subr.mxu0 0.0
        %v2289 = vand.u32 %v1977, 4294901760
        %2290 = vmatpush1.msra.mxu0 %v2289
        %2291 = vmatprep.subr.mxu0 0.0
        %v2292 = vand.u32 %v1978, 4294901760
        %2293 = vmatpush1.msra.mxu0 %v2292
        %2294 = vmatprep.subr.mxu0 0.0
        %v2295 = vand.u32 %v1979, 4294901760
        %2296 = vmatpush1.msra.mxu0 %v2295
        %2297 = vmatprep.subr.mxu0 0.0
        %2298 = vmatpush1.msra.mxu0 0.0
        %2299 = vmatprep.subr.mxu0 0.0
        %2300 = vmatpush1.msra.mxu0 0.0
        %2301 = vmatprep.subr.mxu0 0.0
        %2302 = vmatpush1.msra.mxu0 0.0
        %2303 = vmatprep.subr.mxu0 0.0
        %2304 = vmatpush1.msra.mxu0 0.0
        %2305 = vmatprep.subr.mxu0 0.0
        %2306 = vmatpush1.msra.mxu0 0.0
        %2307 = vmatprep.subr.mxu0 0.0
        %2308 = vmatpush1.msra.mxu0 0.0
        %2309 = vmatprep.subr.mxu0 0.0
        %2310 = vmatpush1.msra.mxu0 0.0
        %2311 = vmatprep.subr.mxu0 0.0
        %2312 = vmatpush1.msra.mxu0 0.0
        %2313 = vmatprep.subr.mxu0 0.0
        %2314 = vmatpush1.msra.mxu0 0.0
        %2315 = vmatprep.subr.mxu0 0.0
        %2316 = vmatpush1.msra.mxu0 0.0
        %2317 = vmatprep.subr.mxu0 0.0
        %2318 = vmatpush1.msra.mxu0 0.0
        %2319 = vmatprep.subr.mxu0 0.0
        %2320 = vmatpush1.msra.mxu0 0.0
        %2321 = vmatprep.subr.mxu0 0.0
        %2322 = vmatpush1.msra.mxu0 0.0
        %2323 = vmatprep.subr.mxu0 0.0
        %2324 = vmatpush1.msra.mxu0 0.0
        %2325 = vmatprep.subr.mxu0 0.0
        %2326 = vmatpush1.msra.mxu0 0.0
        %2327 = vmatprep.subr.mxu0 0.0
        %2328 = vmatpush1.msra.mxu0 0.0
        %2329 = vmatprep.subr.mxu0 0.0
        %2330 = vmatpush1.msra.mxu0 0.0
        %2331 = vmatprep.subr.mxu0 0.0
        %2332 = vmatpush1.msra.mxu0 0.0
        %2333 = vmatprep.subr.mxu0 0.0
        %2334 = vmatpush1.msra.mxu0 0.0
        %2335 = vmatprep.subr.mxu0 0.0
        %2336 = vmatpush1.msra.mxu0 0.0
        %2337 = vmatprep.subr.mxu0 0.0
        %2338 = vmatpush1.msra.mxu0 0.0
        %2339 = vmatprep.subr.mxu0 0.0
        %2340 = vmatpush1.msra.mxu0 0.0
        %2341 = vmatprep.subr.mxu0 0.0
        %2342 = vmatpush1.msra.mxu0 0.0
        %2343 = vmatprep.subr.mxu0 0.0
        %2344 = vmatpush1.msra.mxu0 0.0
        %2345 = vmatprep.subr.mxu0 0.0
        %2346 = vmatpush1.msra.mxu0 0.0
        %2347 = vmatprep.subr.mxu0 0.0
        %2348 = vmatpush1.msra.mxu0 0.0
        %2349 = vmatprep.subr.mxu0 0.0
        %2350 = vmatpush1.msra.mxu0 0.0
        %2351 = vmatprep.subr.mxu0 0.0
        %2352 = vmatpush1.msra.mxu0 0.0
        %2353 = vmatprep.mubr.f32.mxu0 0.0
        %v2354 = vand.u32 %v1981, 4294901760
        %v2355 = vsub.f32 %v1981, %v2354
        %v2356 = vand.u32 %v2355, 4294901760
        %2357 = vmatmul.mubr.f32.gmra.mrb[0].mxu0 %v2356
        %v2358 = vpop.f32.mrb[0].mxu0
        %v2359 = vadd.f32 %v2268, %v2358
        %v2360 = vpop.f32.mrb[0].mxu0
        %2361 = vmatprep.mubr.f32.mxu0 0.0
        %v2362 = vand.u32 %v1984, 4294901760
        %v2363 = vsub.f32 %v1984, %v2362
        %v2364 = vand.u32 %v2363, 4294901760
        %2365 = vmatmul.mubr.f32.gmra.mrb[0].mxu0 %v2364
        %v2366 = vpop.f32.mrb[0].mxu0
        %v2367 = vadd.f32 %v2275, %v2366
        %v2368 = vpop.f32.mrb[0].mxu0
        %2369 = vmatprep.mubr.f32.mxu0 0.0
        %v2370 = vand.u32 %v1987, 4294901760
        %v2371 = vsub.f32 %v1987, %v2370
        %v2372 = vand.u32 %v2371, 4294901760
        %2373 = vmatmul.mubr.f32.gmra.mrb[0].mxu0 %v2372
        %v2374 = vpop.f32.mrb[0].mxu0
        %v2375 = vadd.f32 %v2282, %v2374
        %v2376 = vpop.f32.mrb[0].mxu0
        %2377 = vdwg.mxu0
        %2378 = vmatprep.subr.mxu0 0.0
        %v2379 = vand.u32 %v1976, 4294901760
        %v2380 = vsub.f32 %v1976, %v2379
        %v2381 = vand.u32 %v2380, 4294901760
        %2382 = vmatpush1.msra.mxu0 %v2381
        %2383 = vmatprep.subr.mxu0 0.0
        %v2384 = vand.u32 %v1977, 4294901760
        %v2385 = vsub.f32 %v1977, %v2384
        %v2386 = vand.u32 %v2385, 4294901760
        %2387 = vmatpush1.msra.mxu0 %v2386
        %2388 = vmatprep.subr.mxu0 0.0
        %v2389 = vand.u32 %v1978, 4294901760
        %v2390 = vsub.f32 %v1978, %v2389
        %v2391 = vand.u32 %v2390, 4294901760
        %2392 = vmatpush1.msra.mxu0 %v2391
        %2393 = vmatprep.subr.mxu0 0.0
        %v2394 = vand.u32 %v1979, 4294901760
        %v2395 = vsub.f32 %v1979, %v2394
        %v2396 = vand.u32 %v2395, 4294901760
        %2397 = vmatpush1.msra.mxu0 %v2396
        %2398 = vmatprep.subr.mxu0 0.0
        %2399 = vmatpush1.msra.mxu0 0.0
        %2400 = vmatprep.subr.mxu0 0.0
        %2401 = vmatpush1.msra.mxu0 0.0
        %2402 = vmatprep.subr.mxu0 0.0
        %2403 = vmatpush1.msra.mxu0 0.0
        %2404 = vmatprep.subr.mxu0 0.0
        %2405 = vmatpush1.msra.mxu0 0.0
        %2406 = vmatprep.subr.mxu0 0.0
        %2407 = vmatpush1.msra.mxu0 0.0
        %2408 = vmatprep.subr.mxu0 0.0
        %2409 = vmatpush1.msra.mxu0 0.0
        %2410 = vmatprep.subr.mxu0 0.0
        %2411 = vmatpush1.msra.mxu0 0.0
        %2412 = vmatprep.subr.mxu0 0.0
        %2413 = vmatpush1.msra.mxu0 0.0
        %2414 = vmatprep.subr.mxu0 0.0
        %2415 = vmatpush1.msra.mxu0 0.0
        %2416 = vmatprep.subr.mxu0 0.0
        %2417 = vmatpush1.msra.mxu0 0.0
        %2418 = vmatprep.subr.mxu0 0.0
        %2419 = vmatpush1.msra.mxu0 0.0
        %2420 = vmatprep.subr.mxu0 0.0
        %2421 = vmatpush1.msra.mxu0 0.0
        %2422 = vmatprep.subr.mxu0 0.0
        %2423 = vmatpush1.msra.mxu0 0.0
        %2424 = vmatprep.subr.mxu0 0.0
        %2425 = vmatpush1.msra.mxu0 0.0
        %2426 = vmatprep.subr.mxu0 0.0
        %2427 = vmatpush1.msra.mxu0 0.0
        %2428 = vmatprep.subr.mxu0 0.0
        %2429 = vmatpush1.msra.mxu0 0.0
        %2430 = vmatprep.subr.mxu0 0.0
        %2431 = vmatpush1.msra.mxu0 0.0
        %2432 = vmatprep.subr.mxu0 0.0
        %2433 = vmatpush1.msra.mxu0 0.0
        %2434 = vmatprep.subr.mxu0 0.0
        %2435 = vmatpush1.msra.mxu0 0.0
        %2436 = vmatprep.subr.mxu0 0.0
        %2437 = vmatpush1.msra.mxu0 0.0
        %2438 = vmatprep.subr.mxu0 0.0
        %2439 = vmatpush1.msra.mxu0 0.0
        %2440 = vmatprep.subr.mxu0 0.0
        %2441 = vmatpush1.msra.mxu0 0.0
        %2442 = vmatprep.subr.mxu0 0.0
        %2443 = vmatpush1.msra.mxu0 0.0
        %2444 = vmatprep.subr.mxu0 0.0
        %2445 = vmatpush1.msra.mxu0 0.0
        %2446 = vmatprep.subr.mxu0 0.0
        %2447 = vmatpush1.msra.mxu0 0.0
        %2448 = vmatprep.subr.mxu0 0.0
        %2449 = vmatpush1.msra.mxu0 0.0
        %2450 = vmatprep.subr.mxu0 0.0
        %2451 = vmatpush1.msra.mxu0 0.0
        %2452 = vmatprep.subr.mxu0 0.0
        %2453 = vmatpush1.msra.mxu0 0.0
        %2454 = vmatprep.mubr.f32.mxu0 0.0
        %v2455 = vand.u32 %v1981, 4294901760
        %2456 = vmatmul.mubr.f32.gmra.mrb[0].mxu0 %v2455
        %v2457 = vpop.f32.mrb[0].mxu0
        %v2458 = vadd.f32 %v2359, %v2457
        %v2459 = vpop.f32.mrb[0].mxu0
        %2460 = vmatprep.mubr.f32.mxu0 0.0
        %v2461 = vand.u32 %v1984, 4294901760
        %2462 = vmatmul.mubr.f32.gmra.mrb[0].mxu0 %v2461
        %v2463 = vpop.f32.mrb[0].mxu0
        %v2464 = vadd.f32 %v2367, %v2463
        %v2465 = vpop.f32.mrb[0].mxu0
        %2466 = vmatprep.mubr.f32.mxu0 0.0
        %v2467 = vand.u32 %v1987, 4294901760
        %2468 = vmatmul.mubr.f32.gmra.mrb[0].mxu0 %v2467
        %v2469 = vpop.f32.mrb[0].mxu0
        %v2470 = vadd.f32 %v2375, %v2469
        %v2471 = vpop.f32.mrb[0].mxu0
        %2472 = vdwg.mxu0
        %2473 = vmatprep.subr.mxu0 0.0
        %v2474 = vand.u32 %v1976, 4294901760
        %2475 = vmatpush1.msra.mxu0 %v2474
        %2476 = vmatprep.subr.mxu0 0.0
        %v2477 = vand.u32 %v1977, 4294901760
        %2478 = vmatpush1.msra.mxu0 %v2477
        %2479 = vmatprep.subr.mxu0 0.0
        %v2480 = vand.u32 %v1978, 4294901760
        %2481 = vmatpush1.msra.mxu0 %v2480
        %2482 = vmatprep.subr.mxu0 0.0
        %v2483 = vand.u32 %v1979, 4294901760
        %2484 = vmatpush1.msra.mxu0 %v2483
        %2485 = vmatprep.subr.mxu0 0.0
        %2486 = vmatpush1.msra.mxu0 0.0
        %2487 = vmatprep.subr.mxu0 0.0
        %2488 = vmatpush1.msra.mxu0 0.0
        %2489 = vmatprep.subr.mxu0 0.0
        %2490 = vmatpush1.msra.mxu0 0.0
        %2491 = vmatprep.subr.mxu0 0.0
        %2492 = vmatpush1.msra.mxu0 0.0
        %2493 = vmatprep.subr.mxu0 0.0
        %2494 = vmatpush1.msra.mxu0 0.0
        %2495 = vmatprep.subr.mxu0 0.0
        %2496 = vmatpush1.msra.mxu0 0.0
        %2497 = vmatprep.subr.mxu0 0.0
        %2498 = vmatpush1.msra.mxu0 0.0
        %2499 = vmatprep.subr.mxu0 0.0
        %2500 = vmatpush1.msra.mxu0 0.0
        %2501 = vmatprep.subr.mxu0 0.0
        %2502 = vmatpush1.msra.mxu0 0.0
        %2503 = vmatprep.subr.mxu0 0.0
        %2504 = vmatpush1.msra.mxu0 0.0
        %2505 = vmatprep.subr.mxu0 0.0
        %2506 = vmatpush1.msra.mxu0 0.0
        %2507 = vmatprep.subr.mxu0 0.0
        %2508 = vmatpush1.msra.mxu0 0.0
        %2509 = vmatprep.subr.mxu0 0.0
        %2510 = vmatpush1.msra.mxu0 0.0
        %2511 = vmatprep.subr.mxu0 0.0
        %2512 = vmatpush1.msra.mxu0 0.0
        %2513 = vmatprep.subr.mxu0 0.0
        %2514 = vmatpush1.msra.mxu0 0.0
        %2515 = vmatprep.subr.mxu0 0.0
        %2516 = vmatpush1.msra.mxu0 0.0
        %2517 = vmatprep.subr.mxu0 0.0
        %2518 = vmatpush1.msra.mxu0 0.0
        %2519 = vmatprep.subr.mxu0 0.0
        %2520 = vmatpush1.msra.mxu0 0.0
        %2521 = vmatprep.subr.mxu0 0.0
        %2522 = vmatpush1.msra.mxu0 0.0
        %2523 = vmatprep.subr.mxu0 0.0
        %2524 = vmatpush1.msra.mxu0 0.0
        %2525 = vmatprep.subr.mxu0 0.0
        %2526 = vmatpush1.msra.mxu0 0.0
        %2527 = vmatprep.subr.mxu0 0.0
        %2528 = vmatpush1.msra.mxu0 0.0
        %2529 = vmatprep.subr.mxu0 0.0
        %2530 = vmatpush1.msra.mxu0 0.0
        %2531 = vmatprep.subr.mxu0 0.0
        %2532 = vmatpush1.msra.mxu0 0.0
        %2533 = vmatprep.subr.mxu0 0.0
        %2534 = vmatpush1.msra.mxu0 0.0
        %2535 = vmatprep.subr.mxu0 0.0
        %2536 = vmatpush1.msra.mxu0 0.0
        %2537 = vmatprep.subr.mxu0 0.0
        %2538 = vmatpush1.msra.mxu0 0.0
        %2539 = vmatprep.subr.mxu0 0.0
        %2540 = vmatpush1.msra.mxu0 0.0
        %2541 = vmatprep.mubr.f32.mxu0 0.0
        %v2542 = vand.u32 %v1981, 4294901760
        %2543 = vmatmul.mubr.f32.gmra.mrb[0].mxu0 %v2542
        %v2544 = vpop.f32.mrb[0].mxu0
        %v2545 = vadd.f32 %v2458, %v2544
        %v2546 = vpop.f32.mrb[0].mxu0
        %2547 = vmatprep.mubr.f32.mxu0 0.0
        %v2548 = vand.u32 %v1984, 4294901760
        %2549 = vmatmul.mubr.f32.gmra.mrb[0].mxu0 %v2548
        %v2550 = vpop.f32.mrb[0].mxu0
        %v2551 = vadd.f32 %v2464, %v2550
        %v2552 = vpop.f32.mrb[0].mxu0
        %2553 = vmatprep.mubr.f32.mxu0 0.0
        %v2554 = vand.u32 %v1987, 4294901760
        %2555 = vmatmul.mubr.f32.gmra.mrb[0].mxu0 %v2554
        %v2556 = vpop.f32.mrb[0].mxu0
        %v2557 = vadd.f32 %v2470, %v2556
        %v2558 = vpop.f32.mrb[0].mxu0
        %2559 = vdwg.mxu0
        %v2561 = vsel %vm1961, %v1965, 0
        %v2564 = vsel %vm1961, %v1966, 0
        %v2567 = vsel %vm1961, %v1967, 0
        %2569 = vmatprep.subr.mxu0 0.0
        %v2570 = vand.u32 %v1968, 4294901760
        %2571 = vmatpush1.msra.mxu0 %v2570
        %2572 = vmatprep.subr.mxu0 0.0
        %v2573 = vand.u32 %v1969, 4294901760
        %2574 = vmatpush1.msra.mxu0 %v2573
        %2575 = vmatprep.subr.mxu0 0.0
        %v2576 = vand.u32 %v1970, 4294901760
        %2577 = vmatpush1.msra.mxu0 %v2576
        %2578 = vmatprep.subr.mxu0 0.0
        %v2579 = vand.u32 %v1971, 4294901760
        %2580 = vmatpush1.msra.mxu0 %v2579
        %2581 = vmatprep.subr.mxu0 0.0
        %2582 = vmatpush1.msra.mxu0 0.0
        %2583 = vmatprep.subr.mxu0 0.0
        %2584 = vmatpush1.msra.mxu0 0.0
        %2585 = vmatprep.subr.mxu0 0.0
        %2586 = vmatpush1.msra.mxu0 0.0
        %2587 = vmatprep.subr.mxu0 0.0
        %2588 = vmatpush1.msra.mxu0 0.0
        %2589 = vmatprep.subr.mxu0 0.0
        %2590 = vmatpush1.msra.mxu0 0.0
        %2591 = vmatprep.subr.mxu0 0.0
        %2592 = vmatpush1.msra.mxu0 0.0
        %2593 = vmatprep.subr.mxu0 0.0
        %2594 = vmatpush1.msra.mxu0 0.0
        %2595 = vmatprep.subr.mxu0 0.0
        %2596 = vmatpush1.msra.mxu0 0.0
        %2597 = vmatprep.subr.mxu0 0.0
        %2598 = vmatpush1.msra.mxu0 0.0
        %2599 = vmatprep.subr.mxu0 0.0
        %2600 = vmatpush1.msra.mxu0 0.0
        %2601 = vmatprep.subr.mxu0 0.0
        %2602 = vmatpush1.msra.mxu0 0.0
        %2603 = vmatprep.subr.mxu0 0.0
        %2604 = vmatpush1.msra.mxu0 0.0
        %2605 = vmatprep.subr.mxu0 0.0
        %2606 = vmatpush1.msra.mxu0 0.0
        %2607 = vmatprep.subr.mxu0 0.0
        %2608 = vmatpush1.msra.mxu0 0.0
        %2609 = vmatprep.subr.mxu0 0.0
        %2610 = vmatpush1.msra.mxu0 0.0
        %2611 = vmatprep.subr.mxu0 0.0
        %2612 = vmatpush1.msra.mxu0 0.0
        %2613 = vmatprep.subr.mxu0 0.0
        %2614 = vmatpush1.msra.mxu0 0.0
        %2615 = vmatprep.subr.mxu0 0.0
        %2616 = vmatpush1.msra.mxu0 0.0
        %2617 = vmatprep.subr.mxu0 0.0
        %2618 = vmatpush1.msra.mxu0 0.0
        %2619 = vmatprep.subr.mxu0 0.0
        %2620 = vmatpush1.msra.mxu0 0.0
        %2621 = vmatprep.subr.mxu0 0.0
        %2622 = vmatpush1.msra.mxu0 0.0
        %2623 = vmatprep.subr.mxu0 0.0
        %2624 = vmatpush1.msra.mxu0 0.0
        %2625 = vmatprep.subr.mxu0 0.0
        %2626 = vmatpush1.msra.mxu0 0.0
        %2627 = vmatprep.subr.mxu0 0.0
        %2628 = vmatpush1.msra.mxu0 0.0
        %2629 = vmatprep.subr.mxu0 0.0
        %2630 = vmatpush1.msra.mxu0 0.0
        %2631 = vmatprep.subr.mxu0 0.0
        %2632 = vmatpush1.msra.mxu0 0.0
        %2633 = vmatprep.subr.mxu0 0.0
        %2634 = vmatpush1.msra.mxu0 0.0
        %2635 = vmatprep.subr.mxu0 0.0
        %2636 = vmatpush1.msra.mxu0 0.0
        %2637 = vmatprep.mubr.f32.mxu0 0.0
        %v2638 = vand.u32 %v2561, 4294901760
        %v2639 = vsub.f32 %v2561, %v2638
        %v2640 = vand.u32 %v2639, 4294901760
        %v2641 = vsub.f32 %v2639, %v2640
        %v2642 = vand.u32 %v2641, 4294901760
        %2643 = vmatmul.mubr.f32.gmra.mrb[0].mxu0 %v2642
        %v2644 = vpop.f32.mrb[0].mxu0
        %v2645 = vadd.f32 %v2545, %v2644
        %v2646 = vpop.f32.mrb[0].mxu0
        %2647 = vmatprep.mubr.f32.mxu0 0.0
        %v2648 = vand.u32 %v2564, 4294901760
        %v2649 = vsub.f32 %v2564, %v2648
        %v2650 = vand.u32 %v2649, 4294901760
        %v2651 = vsub.f32 %v2649, %v2650
        %v2652 = vand.u32 %v2651, 4294901760
        %2653 = vmatmul.mubr.f32.gmra.mrb[0].mxu0 %v2652
        %v2654 = vpop.f32.mrb[0].mxu0
        %v2655 = vadd.f32 %v2551, %v2654
        %v2656 = vpop.f32.mrb[0].mxu0
        %2657 = vmatprep.mubr.f32.mxu0 0.0
        %v2658 = vand.u32 %v2567, 4294901760
        %v2659 = vsub.f32 %v2567, %v2658
        %v2660 = vand.u32 %v2659, 4294901760
        %v2661 = vsub.f32 %v2659, %v2660
        %v2662 = vand.u32 %v2661, 4294901760
        %2663 = vmatmul.mubr.f32.gmra.mrb[0].mxu0 %v2662
        %v2664 = vpop.f32.mrb[0].mxu0
        %v2665 = vadd.f32 %v2557, %v2664
        %v2666 = vpop.f32.mrb[0].mxu0
        %2667 = vdwg.mxu0
        %2668 = vmatprep.subr.mxu0 0.0
        %v2669 = vand.u32 %v1968, 4294901760
        %v2670 = vsub.f32 %v1968, %v2669
        %v2671 = vand.u32 %v2670, 4294901760
        %v2672 = vsub.f32 %v2670, %v2671
        %v2673 = vand.u32 %v2672, 4294901760
        %2674 = vmatpush1.msra.mxu0 %v2673
        %2675 = vmatprep.subr.mxu0 0.0
        %v2676 = vand.u32 %v1969, 4294901760
        %v2677 = vsub.f32 %v1969, %v2676
        %v2678 = vand.u32 %v2677, 4294901760
        %v2679 = vsub.f32 %v2677, %v2678
        %v2680 = vand.u32 %v2679, 4294901760
        %2681 = vmatpush1.msra.mxu0 %v2680
        %2682 = vmatprep.subr.mxu0 0.0
        %v2683 = vand.u32 %v1970, 4294901760
        %v2684 = vsub.f32 %v1970, %v2683
        %v2685 = vand.u32 %v2684, 4294901760
        %v2686 = vsub.f32 %v2684, %v2685
        %v2687 = vand.u32 %v2686, 4294901760
        %2688 = vmatpush1.msra.mxu0 %v2687
        %2689 = vmatprep.subr.mxu0 0.0
        %v2690 = vand.u32 %v1971, 4294901760
        %v2691 = vsub.f32 %v1971, %v2690
        %v2692 = vand.u32 %v2691, 4294901760
        %v2693 = vsub.f32 %v2691, %v2692
        %v2694 = vand.u32 %v2693, 4294901760
        %2695 = vmatpush1.msra.mxu0 %v2694
        %2696 = vmatprep.subr.mxu0 0.0
        %2697 = vmatpush1.msra.mxu0 0.0
        %2698 = vmatprep.subr.mxu0 0.0
        %2699 = vmatpush1.msra.mxu0 0.0
        %2700 = vmatprep.subr.mxu0 0.0
        %2701 = vmatpush1.msra.mxu0 0.0
        %2702 = vmatprep.subr.mxu0 0.0
        %2703 = vmatpush1.msra.mxu0 0.0
        %2704 = vmatprep.subr.mxu0 0.0
        %2705 = vmatpush1.msra.mxu0 0.0
        %2706 = vmatprep.subr.mxu0 0.0
        %2707 = vmatpush1.msra.mxu0 0.0
        %2708 = vmatprep.subr.mxu0 0.0
        %2709 = vmatpush1.msra.mxu0 0.0
        %2710 = vmatprep.subr.mxu0 0.0
        %2711 = vmatpush1.msra.mxu0 0.0
        %2712 = vmatprep.subr.mxu0 0.0
        %2713 = vmatpush1.msra.mxu0 0.0
        %2714 = vmatprep.subr.mxu0 0.0
        %2715 = vmatpush1.msra.mxu0 0.0
        %2716 = vmatprep.subr.mxu0 0.0
        %2717 = vmatpush1.msra.mxu0 0.0
        %2718 = vmatprep.subr.mxu0 0.0
        %2719 = vmatpush1.msra.mxu0 0.0
        %2720 = vmatprep.subr.mxu0 0.0
        %2721 = vmatpush1.msra.mxu0 0.0
        %2722 = vmatprep.subr.mxu0 0.0
        %2723 = vmatpush1.msra.mxu0 0.0
        %2724 = vmatprep.subr.mxu0 0.0
        %2725 = vmatpush1.msra.mxu0 0.0
        %2726 = vmatprep.subr.mxu0 0.0
        %2727 = vmatpush1.msra.mxu0 0.0
        %2728 = vmatprep.subr.mxu0 0.0
        %2729 = vmatpush1.msra.mxu0 0.0
        %2730 = vmatprep.subr.mxu0 0.0
        %2731 = vmatpush1.msra.mxu0 0.0
        %2732 = vmatprep.subr.mxu0 0.0
        %2733 = vmatpush1.msra.mxu0 0.0
        %2734 = vmatprep.subr.mxu0 0.0
        %2735 = vmatpush1.msra.mxu0 0.0
        %2736 = vmatprep.subr.mxu0 0.0
        %2737 = vmatpush1.msra.mxu0 0.0
        %2738 = vmatprep.subr.mxu0 0.0
        %2739 = vmatpush1.msra.mxu0 0.0
        %2740 = vmatprep.subr.mxu0 0.0
        %2741 = vmatpush1.msra.mxu0 0.0
        %2742 = vmatprep.subr.mxu0 0.0
        %2743 = vmatpush1.msra.mxu0 0.0
        %2744 = vmatprep.subr.mxu0 0.0
        %2745 = vmatpush1.msra.mxu0 0.0
        %2746 = vmatprep.subr.mxu0 0.0
        %2747 = vmatpush1.msra.mxu0 0.0
        %2748 = vmatprep.subr.mxu0 0.0
        %2749 = vmatpush1.msra.mxu0 0.0
        %2750 = vmatprep.subr.mxu0 0.0
        %2751 = vmatpush1.msra.mxu0 0.0
        %2752 = vmatprep.mubr.f32.mxu0 0.0
        %v2753 = vand.u32 %v2561, 4294901760
        %2754 = vmatmul.mubr.f32.gmra.mrb[0].mxu0 %v2753
        %v2755 = vpop.f32.mrb[0].mxu0
        %v2756 = vadd.f32 %v2645, %v2755
        %v2757 = vpop.f32.mrb[0].mxu0
        %2758 = vmatprep.mubr.f32.mxu0 0.0
        %v2759 = vand.u32 %v2564, 4294901760
        %2760 = vmatmul.mubr.f32.gmra.mrb[0].mxu0 %v2759
        %v2761 = vpop.f32.mrb[0].mxu0
        %v2762 = vadd.f32 %v2655, %v2761
        %v2763 = vpop.f32.mrb[0].mxu0
        %2764 = vmatprep.mubr.f32.mxu0 0.0
        %v2765 = vand.u32 %v2567, 4294901760
        %2766 = vmatmul.mubr.f32.gmra.mrb[0].mxu0 %v2765
        %v2767 = vpop.f32.mrb[0].mxu0
        %v2768 = vadd.f32 %v2665, %v2767
        %v2769 = vpop.f32.mrb[0].mxu0
        %2770 = vdwg.mxu0
        %2771 = vmatprep.subr.mxu0 0.0
        %v2772 = vand.u32 %v1968, 4294901760
        %v2773 = vsub.f32 %v1968, %v2772
        %2774 = vmatpush1.msra.mxu0 %v2773
        %2775 = vmatprep.subr.mxu0 0.0
        %v2776 = vand.u32 %v1969, 4294901760
        %v2777 = vsub.f32 %v1969, %v2776
        %2778 = vmatpush1.msra.mxu0 %v2777
        %2779 = vmatprep.subr.mxu0 0.0
        %v2780 = vand.u32 %v1970, 4294901760
        %v2781 = vsub.f32 %v1970, %v2780
        %2782 = vmatpush1.msra.mxu0 %v2781
        %2783 = vmatprep.subr.mxu0 0.0
        %v2784 = vand.u32 %v1971, 4294901760
        %v2785 = vsub.f32 %v1971, %v2784
        %2786 = vmatpush1.msra.mxu0 %v2785
        %2787 = vmatprep.subr.mxu0 0.0
        %2788 = vmatpush1.msra.mxu0 0.0
        %2789 = vmatprep.subr.mxu0 0.0
        %2790 = vmatpush1.msra.mxu0 0.0
        %2791 = vmatprep.subr.mxu0 0.0
        %2792 = vmatpush1.msra.mxu0 0.0
        %2793 = vmatprep.subr.mxu0 0.0
        %2794 = vmatpush1.msra.mxu0 0.0
        %2795 = vmatprep.subr.mxu0 0.0
        %2796 = vmatpush1.msra.mxu0 0.0
        %2797 = vmatprep.subr.mxu0 0.0
        %2798 = vmatpush1.msra.mxu0 0.0
        %2799 = vmatprep.subr.mxu0 0.0
        %2800 = vmatpush1.msra.mxu0 0.0
        %2801 = vmatprep.subr.mxu0 0.0
        %2802 = vmatpush1.msra.mxu0 0.0
        %2803 = vmatprep.subr.mxu0 0.0
        %2804 = vmatpush1.msra.mxu0 0.0
        %2805 = vmatprep.subr.mxu0 0.0
        %2806 = vmatpush1.msra.mxu0 0.0
        %2807 = vmatprep.subr.mxu0 0.0
        %2808 = vmatpush1.msra.mxu0 0.0
        %2809 = vmatprep.subr.mxu0 0.0
        %2810 = vmatpush1.msra.mxu0 0.0
        %2811 = vmatprep.subr.mxu0 0.0
        %2812 = vmatpush1.msra.mxu0 0.0
        %2813 = vmatprep.subr.mxu0 0.0
        %2814 = vmatpush1.msra.mxu0 0.0
        %2815 = vmatprep.subr.mxu0 0.0
        %2816 = vmatpush1.msra.mxu0 0.0
        %2817 = vmatprep.subr.mxu0 0.0
        %2818 = vmatpush1.msra.mxu0 0.0
        %2819 = vmatprep.subr.mxu0 0.0
        %2820 = vmatpush1.msra.mxu0 0.0
        %2821 = vmatprep.subr.mxu0 0.0
        %2822 = vmatpush1.msra.mxu0 0.0
        %2823 = vmatprep.subr.mxu0 0.0
        %2824 = vmatpush1.msra.mxu0 0.0
        %2825 = vmatprep.subr.mxu0 0.0
        %2826 = vmatpush1.msra.mxu0 0.0
        %2827 = vmatprep.subr.mxu0 0.0
        %2828 = vmatpush1.msra.mxu0 0.0
        %2829 = vmatprep.subr.mxu0 0.0
        %2830 = vmatpush1.msra.mxu0 0.0
        %2831 = vmatprep.subr.mxu0 0.0
        %2832 = vmatpush1.msra.mxu0 0.0
        %2833 = vmatprep.subr.mxu0 0.0
        %2834 = vmatpush1.msra.mxu0 0.0
        %2835 = vmatprep.subr.mxu0 0.0
        %2836 = vmatpush1.msra.mxu0 0.0
        %2837 = vmatprep.subr.mxu0 0.0
        %2838 = vmatpush1.msra.mxu0 0.0
        %2839 = vmatprep.subr.mxu0 0.0
        %2840 = vmatpush1.msra.mxu0 0.0
        %2841 = vmatprep.subr.mxu0 0.0
        %2842 = vmatpush1.msra.mxu0 0.0
        %2843 = vmatprep.mubr.f32.mxu0 0.0
        %v2844 = vand.u32 %v2561, 4294901760
        %v2845 = vsub.f32 %v2561, %v2844
        %2846 = vmatmul.mubr.f32.gmra.mrb[0].mxu0 %v2845
        %v2847 = vpop.f32.mrb[0].mxu0
        %v2848 = vadd.f32 %v2756, %v2847
        %v2849 = vpop.f32.mrb[0].mxu0
        %2850 = vmatprep.mubr.f32.mxu0 0.0
        %v2851 = vand.u32 %v2564, 4294901760
        %v2852 = vsub.f32 %v2564, %v2851
        %2853 = vmatmul.mubr.f32.gmra.mrb[0].mxu0 %v2852
        %v2854 = vpop.f32.mrb[0].mxu0
        %v2855 = vadd.f32 %v2762, %v2854
        %v2856 = vpop.f32.mrb[0].mxu0
        %2857 = vmatprep.mubr.f32.mxu0 0.0
        %v2858 = vand.u32 %v2567, 4294901760
        %v2859 = vsub.f32 %v2567, %v2858
        %2860 = vmatmul.mubr.f32.gmra.mrb[0].mxu0 %v2859
        %v2861 = vpop.f32.mrb[0].mxu0
        %v2862 = vadd.f32 %v2768, %v2861
        %v2863 = vpop.f32.mrb[0].mxu0
        %2864 = vdwg.mxu0
        %2865 = vmatprep.subr.mxu0 0.0
        %v2866 = vand.u32 %v1968, 4294901760
        %2867 = vmatpush1.msra.mxu0 %v2866
        %2868 = vmatprep.subr.mxu0 0.0
        %v2869 = vand.u32 %v1969, 4294901760
        %2870 = vmatpush1.msra.mxu0 %v2869
        %2871 = vmatprep.subr.mxu0 0.0
        %v2872 = vand.u32 %v1970, 4294901760
        %2873 = vmatpush1.msra.mxu0 %v2872
        %2874 = vmatprep.subr.mxu0 0.0
        %v2875 = vand.u32 %v1971, 4294901760
        %2876 = vmatpush1.msra.mxu0 %v2875
        %2877 = vmatprep.subr.mxu0 0.0
        %2878 = vmatpush1.msra.mxu0 0.0
        %2879 = vmatprep.subr.mxu0 0.0
        %2880 = vmatpush1.msra.mxu0 0.0
        %2881 = vmatprep.subr.mxu0 0.0
        %2882 = vmatpush1.msra.mxu0 0.0
        %2883 = vmatprep.subr.mxu0 0.0
        %2884 = vmatpush1.msra.mxu0 0.0
        %2885 = vmatprep.subr.mxu0 0.0
        %2886 = vmatpush1.msra.mxu0 0.0
        %2887 = vmatprep.subr.mxu0 0.0
        %2888 = vmatpush1.msra.mxu0 0.0
        %2889 = vmatprep.subr.mxu0 0.0
        %2890 = vmatpush1.msra.mxu0 0.0
        %2891 = vmatprep.subr.mxu0 0.0
        %2892 = vmatpush1.msra.mxu0 0.0
        %2893 = vmatprep.subr.mxu0 0.0
        %2894 = vmatpush1.msra.mxu0 0.0
        %2895 = vmatprep.subr.mxu0 0.0
        %2896 = vmatpush1.msra.mxu0 0.0
        %2897 = vmatprep.subr.mxu0 0.0
        %2898 = vmatpush1.msra.mxu0 0.0
        %2899 = vmatprep.subr.mxu0 0.0
        %2900 = vmatpush1.msra.mxu0 0.0
        %2901 = vmatprep.subr.mxu0 0.0
        %2902 = vmatpush1.msra.mxu0 0.0
        %2903 = vmatprep.subr.mxu0 0.0
        %2904 = vmatpush1.msra.mxu0 0.0
        %2905 = vmatprep.subr.mxu0 0.0
        %2906 = vmatpush1.msra.mxu0 0.0
        %2907 = vmatprep.subr.mxu0 0.0
        %2908 = vmatpush1.msra.mxu0 0.0
        %2909 = vmatprep.subr.mxu0 0.0
        %2910 = vmatpush1.msra.mxu0 0.0
        %2911 = vmatprep.subr.mxu0 0.0
        %2912 = vmatpush1.msra.mxu0 0.0
        %2913 = vmatprep.subr.mxu0 0.0
        %2914 = vmatpush1.msra.mxu0 0.0
        %2915 = vmatprep.subr.mxu0 0.0
        %2916 = vmatpush1.msra.mxu0 0.0
        %2917 = vmatprep.subr.mxu0 0.0
        %2918 = vmatpush1.msra.mxu0 0.0
        %2919 = vmatprep.subr.mxu0 0.0
        %2920 = vmatpush1.msra.mxu0 0.0
        %2921 = vmatprep.subr.mxu0 0.0
        %2922 = vmatpush1.msra.mxu0 0.0
        %2923 = vmatprep.subr.mxu0 0.0
        %2924 = vmatpush1.msra.mxu0 0.0
        %2925 = vmatprep.subr.mxu0 0.0
        %2926 = vmatpush1.msra.mxu0 0.0
        %2927 = vmatprep.subr.mxu0 0.0
        %2928 = vmatpush1.msra.mxu0 0.0
        %2929 = vmatprep.subr.mxu0 0.0
        %2930 = vmatpush1.msra.mxu0 0.0
        %2931 = vmatprep.subr.mxu0 0.0
        %2932 = vmatpush1.msra.mxu0 0.0
        %2933 = vmatprep.mubr.f32.mxu0 0.0
        %v2934 = vand.u32 %v2561, 4294901760
        %v2935 = vsub.f32 %v2561, %v2934
        %v2936 = vand.u32 %v2935, 4294901760
        %2937 = vmatmul.mubr.f32.gmra.mrb[0].mxu0 %v2936
        %v2938 = vpop.f32.mrb[0].mxu0
        %v2939 = vadd.f32 %v2848, %v2938
        %v2940 = vpop.f32.mrb[0].mxu0
        %2941 = vmatprep.mubr.f32.mxu0 0.0
        %v2942 = vand.u32 %v2564, 4294901760
        %v2943 = vsub.f32 %v2564, %v2942
        %v2944 = vand.u32 %v2943, 4294901760
        %2945 = vmatmul.mubr.f32.gmra.mrb[0].mxu0 %v2944
        %v2946 = vpop.f32.mrb[0].mxu0
        %v2947 = vadd.f32 %v2855, %v2946
        %v2948 = vpop.f32.mrb[0].mxu0
        %2949 = vmatprep.mubr.f32.mxu0 0.0
        %v2950 = vand.u32 %v2567, 4294901760
        %v2951 = vsub.f32 %v2567, %v2950
        %v2952 = vand.u32 %v2951, 4294901760
        %2953 = vmatmul.mubr.f32.gmra.mrb[0].mxu0 %v2952
        %v2954 = vpop.f32.mrb[0].mxu0
        %v2955 = vadd.f32 %v2862, %v2954
        %v2956 = vpop.f32.mrb[0].mxu0
        %2957 = vdwg.mxu0
        %2958 = vmatprep.subr.mxu0 0.0
        %v2959 = vand.u32 %v1968, 4294901760
        %v2960 = vsub.f32 %v1968, %v2959
        %v2961 = vand.u32 %v2960, 4294901760
        %2962 = vmatpush1.msra.mxu0 %v2961
        %2963 = vmatprep.subr.mxu0 0.0
        %v2964 = vand.u32 %v1969, 4294901760
        %v2965 = vsub.f32 %v1969, %v2964
        %v2966 = vand.u32 %v2965, 4294901760
        %2967 = vmatpush1.msra.mxu0 %v2966
        %2968 = vmatprep.subr.mxu0 0.0
        %v2969 = vand.u32 %v1970, 4294901760
        %v2970 = vsub.f32 %v1970, %v2969
        %v2971 = vand.u32 %v2970, 4294901760
        %2972 = vmatpush1.msra.mxu0 %v2971
        %2973 = vmatprep.subr.mxu0 0.0
        %v2974 = vand.u32 %v1971, 4294901760
        %v2975 = vsub.f32 %v1971, %v2974
        %v2976 = vand.u32 %v2975, 4294901760
        %2977 = vmatpush1.msra.mxu0 %v2976
        %2978 = vmatprep.subr.mxu0 0.0
        %2979 = vmatpush1.msra.mxu0 0.0
        %2980 = vmatprep.subr.mxu0 0.0
        %2981 = vmatpush1.msra.mxu0 0.0
        %2982 = vmatprep.subr.mxu0 0.0
        %2983 = vmatpush1.msra.mxu0 0.0
        %2984 = vmatprep.subr.mxu0 0.0
        %2985 = vmatpush1.msra.mxu0 0.0
        %2986 = vmatprep.subr.mxu0 0.0
        %2987 = vmatpush1.msra.mxu0 0.0
        %2988 = vmatprep.subr.mxu0 0.0
        %2989 = vmatpush1.msra.mxu0 0.0
        %2990 = vmatprep.subr.mxu0 0.0
        %2991 = vmatpush1.msra.mxu0 0.0
        %2992 = vmatprep.subr.mxu0 0.0
        %2993 = vmatpush1.msra.mxu0 0.0
        %2994 = vmatprep.subr.mxu0 0.0
        %2995 = vmatpush1.msra.mxu0 0.0
        %2996 = vmatprep.subr.mxu0 0.0
        %2997 = vmatpush1.msra.mxu0 0.0
        %2998 = vmatprep.subr.mxu0 0.0
        %2999 = vmatpush1.msra.mxu0 0.0
        %3000 = vmatprep.subr.mxu0 0.0
        %3001 = vmatpush1.msra.mxu0 0.0
        %3002 = vmatprep.subr.mxu0 0.0
        %3003 = vmatpush1.msra.mxu0 0.0
        %3004 = vmatprep.subr.mxu0 0.0
        %3005 = vmatpush1.msra.mxu0 0.0
        %3006 = vmatprep.subr.mxu0 0.0
        %3007 = vmatpush1.msra.mxu0 0.0
        %3008 = vmatprep.subr.mxu0 0.0
        %3009 = vmatpush1.msra.mxu0 0.0
        %3010 = vmatprep.subr.mxu0 0.0
        %3011 = vmatpush1.msra.mxu0 0.0
        %3012 = vmatprep.subr.mxu0 0.0
        %3013 = vmatpush1.msra.mxu0 0.0
        %3014 = vmatprep.subr.mxu0 0.0
        %3015 = vmatpush1.msra.mxu0 0.0
        %3016 = vmatprep.subr.mxu0 0.0
        %3017 = vmatpush1.msra.mxu0 0.0
        %3018 = vmatprep.subr.mxu0 0.0
        %3019 = vmatpush1.msra.mxu0 0.0
        %3020 = vmatprep.subr.mxu0 0.0
        %3021 = vmatpush1.msra.mxu0 0.0
        %3022 = vmatprep.subr.mxu0 0.0
        %3023 = vmatpush1.msra.mxu0 0.0
        %3024 = vmatprep.subr.mxu0 0.0
        %3025 = vmatpush1.msra.mxu0 0.0
        %3026 = vmatprep.subr.mxu0 0.0
        %3027 = vmatpush1.msra.mxu0 0.0
        %3028 = vmatprep.subr.mxu0 0.0
        %3029 = vmatpush1.msra.mxu0 0.0
        %3030 = vmatprep.subr.mxu0 0.0
        %3031 = vmatpush1.msra.mxu0 0.0
        %3032 = vmatprep.subr.mxu0 0.0
        %3033 = vmatpush1.msra.mxu0 0.0
        %3034 = vmatprep.mubr.f32.mxu0 0.0
        %v3035 = vand.u32 %v2561, 4294901760
        %3036 = vmatmul.mubr.f32.gmra.mrb[0].mxu0 %v3035
        %v3037 = vpop.f32.mrb[0].mxu0
        %v3038 = vadd.f32 %v2939, %v3037
        %v3039 = vpop.f32.mrb[0].mxu0
        %3040 = vmatprep.mubr.f32.mxu0 0.0
        %v3041 = vand.u32 %v2564, 4294901760
        %3042 = vmatmul.mubr.f32.gmra.mrb[0].mxu0 %v3041
        %v3043 = vpop.f32.mrb[0].mxu0
        %v3044 = vadd.f32 %v2947, %v3043
        %v3045 = vpop.f32.mrb[0].mxu0
        %3046 = vmatprep.mubr.f32.mxu0 0.0
        %v3047 = vand.u32 %v2567, 4294901760
        %3048 = vmatmul.mubr.f32.gmra.mrb[0].mxu0 %v3047
        %v3049 = vpop.f32.mrb[0].mxu0
        %v3050 = vadd.f32 %v2955, %v3049
        %v3051 = vpop.f32.mrb[0].mxu0
        %3052 = vdwg.mxu0
        %3053 = vmatprep.subr.mxu0 0.0
        %v3054 = vand.u32 %v1968, 4294901760
        %3055 = vmatpush1.msra.mxu0 %v3054
        %3056 = vmatprep.subr.mxu0 0.0
        %v3057 = vand.u32 %v1969, 4294901760
        %3058 = vmatpush1.msra.mxu0 %v3057
        %3059 = vmatprep.subr.mxu0 0.0
        %v3060 = vand.u32 %v1970, 4294901760
        %3061 = vmatpush1.msra.mxu0 %v3060
        %3062 = vmatprep.subr.mxu0 0.0
        %v3063 = vand.u32 %v1971, 4294901760
        %3064 = vmatpush1.msra.mxu0 %v3063
        %3065 = vmatprep.subr.mxu0 0.0
        %3066 = vmatpush1.msra.mxu0 0.0
        %3067 = vmatprep.subr.mxu0 0.0
        %3068 = vmatpush1.msra.mxu0 0.0
        %3069 = vmatprep.subr.mxu0 0.0
        %3070 = vmatpush1.msra.mxu0 0.0
        %3071 = vmatprep.subr.mxu0 0.0
        %3072 = vmatpush1.msra.mxu0 0.0
        %3073 = vmatprep.subr.mxu0 0.0
        %3074 = vmatpush1.msra.mxu0 0.0
        %3075 = vmatprep.subr.mxu0 0.0
        %3076 = vmatpush1.msra.mxu0 0.0
        %3077 = vmatprep.subr.mxu0 0.0
        %3078 = vmatpush1.msra.mxu0 0.0
        %3079 = vmatprep.subr.mxu0 0.0
        %3080 = vmatpush1.msra.mxu0 0.0
        %3081 = vmatprep.subr.mxu0 0.0
        %3082 = vmatpush1.msra.mxu0 0.0
        %3083 = vmatprep.subr.mxu0 0.0
        %3084 = vmatpush1.msra.mxu0 0.0
        %3085 = vmatprep.subr.mxu0 0.0
        %3086 = vmatpush1.msra.mxu0 0.0
        %3087 = vmatprep.subr.mxu0 0.0
        %3088 = vmatpush1.msra.mxu0 0.0
        %3089 = vmatprep.subr.mxu0 0.0
        %3090 = vmatpush1.msra.mxu0 0.0
        %3091 = vmatprep.subr.mxu0 0.0
        %3092 = vmatpush1.msra.mxu0 0.0
        %3093 = vmatprep.subr.mxu0 0.0
        %3094 = vmatpush1.msra.mxu0 0.0
        %3095 = vmatprep.subr.mxu0 0.0
        %3096 = vmatpush1.msra.mxu0 0.0
        %3097 = vmatprep.subr.mxu0 0.0
        %3098 = vmatpush1.msra.mxu0 0.0
        %3099 = vmatprep.subr.mxu0 0.0
        %3100 = vmatpush1.msra.mxu0 0.0
        %3101 = vmatprep.subr.mxu0 0.0
        %3102 = vmatpush1.msra.mxu0 0.0
        %3103 = vmatprep.subr.mxu0 0.0
        %3104 = vmatpush1.msra.mxu0 0.0
        %3105 = vmatprep.subr.mxu0 0.0
        %3106 = vmatpush1.msra.mxu0 0.0
        %3107 = vmatprep.subr.mxu0 0.0
        %3108 = vmatpush1.msra.mxu0 0.0
        %3109 = vmatprep.subr.mxu0 0.0
        %3110 = vmatpush1.msra.mxu0 0.0
        %3111 = vmatprep.subr.mxu0 0.0
        %3112 = vmatpush1.msra.mxu0 0.0
        %3113 = vmatprep.subr.mxu0 0.0
        %3114 = vmatpush1.msra.mxu0 0.0
        %3115 = vmatprep.subr.mxu0 0.0
        %3116 = vmatpush1.msra.mxu0 0.0
        %3117 = vmatprep.subr.mxu0 0.0
        %3118 = vmatpush1.msra.mxu0 0.0
        %3119 = vmatprep.subr.mxu0 0.0
        %3120 = vmatpush1.msra.mxu0 0.0
        %3121 = vmatprep.mubr.f32.mxu0 0.0
        %v3122 = vand.u32 %v2561, 4294901760
        %3123 = vmatmul.mubr.f32.gmra.mrb[0].mxu0 %v3122
        %v3124 = vpop.f32.mrb[0].mxu0
        %v3125 = vadd.f32 %v3038, %v3124
        %v3126 = vpop.f32.mrb[0].mxu0
        %3127 = vmatprep.mubr.f32.mxu0 0.0
        %v3128 = vand.u32 %v2564, 4294901760
        %3129 = vmatmul.mubr.f32.gmra.mrb[0].mxu0 %v3128
        %v3130 = vpop.f32.mrb[0].mxu0
        %v3131 = vadd.f32 %v3044, %v3130
        %v3132 = vpop.f32.mrb[0].mxu0
        %3133 = vmatprep.mubr.f32.mxu0 0.0
        %v3134 = vand.u32 %v2567, 4294901760
        %3135 = vmatmul.mubr.f32.gmra.mrb[0].mxu0 %v3134
        %v3136 = vpop.f32.mrb[0].mxu0
        %v3137 = vadd.f32 %v3050, %v3136
        %v3138 = vpop.f32.mrb[0].mxu0
        %3139 = vdwg.mxu0
        %v3140 = vld [vmem:[#allocation2 + $0x4] sm:$0xff]
        %v3141 = vld [vmem:[#allocation2 + $0xc] sm:$0xff]
        %v3142 = vld [vmem:[#allocation2 + $0x14] sm:$0xf]
        %s3143 = scalar_lea.vmem [#allocation3], 64
        %v3144 = vld [vmem:[%s3143] sm:$0xff]
        %v3145 = vld [vmem:[%s3143 + $0x8] sm:$0xff]
        %v3146 = vld [vmem:[%s3143 + $0x10] sm:$0xff]
        %v3147 = vld [vmem:[%s3143 + $0x18] sm:$0xff]
        %v3149 = vsel %vm1961, %v3140, 0
        %v3152 = vsel %vm1961, %v3141, 0
        %v3155 = vsel %vm1961, %v3142, 0
        %3157 = vmatprep.subr.mxu0 0.0
        %v3158 = vand.u32 %v3144, 4294901760
        %3159 = vmatpush1.msra.mxu0 %v3158
        %3160 = vmatprep.subr.mxu0 0.0
        %v3161 = vand.u32 %v3145, 4294901760
        %3162 = vmatpush1.msra.mxu0 %v3161
        %3163 = vmatprep.subr.mxu0 0.0
        %v3164 = vand.u32 %v3146, 4294901760
        %3165 = vmatpush1.msra.mxu0 %v3164
        %3166 = vmatprep.subr.mxu0 0.0
        %v3167 = vand.u32 %v3147, 4294901760
        %3168 = vmatpush1.msra.mxu0 %v3167
        %3169 = vmatprep.subr.mxu0 0.0
        %3170 = vmatpush1.msra.mxu0 0.0
        %3171 = vmatprep.subr.mxu0 0.0
        %3172 = vmatpush1.msra.mxu0 0.0
        %3173 = vmatprep.subr.mxu0 0.0
        %3174 = vmatpush1.msra.mxu0 0.0
        %3175 = vmatprep.subr.mxu0 0.0
        %3176 = vmatpush1.msra.mxu0 0.0
        %3177 = vmatprep.subr.mxu0 0.0
        %3178 = vmatpush1.msra.mxu0 0.0
        %3179 = vmatprep.subr.mxu0 0.0
        %3180 = vmatpush1.msra.mxu0 0.0
        %3181 = vmatprep.subr.mxu0 0.0
        %3182 = vmatpush1.msra.mxu0 0.0
        %3183 = vmatprep.subr.mxu0 0.0
        %3184 = vmatpush1.msra.mxu0 0.0
        %3185 = vmatprep.subr.mxu0 0.0
        %3186 = vmatpush1.msra.mxu0 0.0
        %3187 = vmatprep.subr.mxu0 0.0
        %3188 = vmatpush1.msra.mxu0 0.0
        %3189 = vmatprep.subr.mxu0 0.0
        %3190 = vmatpush1.msra.mxu0 0.0
        %3191 = vmatprep.subr.mxu0 0.0
        %3192 = vmatpush1.msra.mxu0 0.0
        %3193 = vmatprep.subr.mxu0 0.0
        %3194 = vmatpush1.msra.mxu0 0.0
        %3195 = vmatprep.subr.mxu0 0.0
        %3196 = vmatpush1.msra.mxu0 0.0
        %3197 = vmatprep.subr.mxu0 0.0
        %3198 = vmatpush1.msra.mxu0 0.0
        %3199 = vmatprep.subr.mxu0 0.0
        %3200 = vmatpush1.msra.mxu0 0.0
        %3201 = vmatprep.subr.mxu0 0.0
        %3202 = vmatpush1.msra.mxu0 0.0
        %3203 = vmatprep.subr.mxu0 0.0
        %3204 = vmatpush1.msra.mxu0 0.0
        %3205 = vmatprep.subr.mxu0 0.0
        %3206 = vmatpush1.msra.mxu0 0.0
        %3207 = vmatprep.subr.mxu0 0.0
        %3208 = vmatpush1.msra.mxu0 0.0
        %3209 = vmatprep.subr.mxu0 0.0
        %3210 = vmatpush1.msra.mxu0 0.0
        %3211 = vmatprep.subr.mxu0 0.0
        %3212 = vmatpush1.msra.mxu0 0.0
        %3213 = vmatprep.subr.mxu0 0.0
        %3214 = vmatpush1.msra.mxu0 0.0
        %3215 = vmatprep.subr.mxu0 0.0
        %3216 = vmatpush1.msra.mxu0 0.0
        %3217 = vmatprep.subr.mxu0 0.0
        %3218 = vmatpush1.msra.mxu0 0.0
        %3219 = vmatprep.subr.mxu0 0.0
        %3220 = vmatpush1.msra.mxu0 0.0
        %3221 = vmatprep.subr.mxu0 0.0
        %3222 = vmatpush1.msra.mxu0 0.0
        %3223 = vmatprep.subr.mxu0 0.0
        %3224 = vmatpush1.msra.mxu0 0.0
        %3225 = vmatprep.mubr.f32.mxu0 0.0
        %v3226 = vand.u32 %v3149, 4294901760
        %v3227 = vsub.f32 %v3149, %v3226
        %v3228 = vand.u32 %v3227, 4294901760
        %v3229 = vsub.f32 %v3227, %v3228
        %v3230 = vand.u32 %v3229, 4294901760
        %3231 = vmatmul.mubr.f32.gmra.mrb[0].mxu0 %v3230
        %v3232 = vpop.f32.mrb[0].mxu0
        %v3233 = vadd.f32 0.0, %v3232
        %v3234 = vpop.f32.mrb[0].mxu0
        %3235 = vmatprep.mubr.f32.mxu0 0.0
        %v3236 = vand.u32 %v3152, 4294901760
        %v3237 = vsub.f32 %v3152, %v3236
        %v3238 = vand.u32 %v3237, 4294901760
        %v3239 = vsub.f32 %v3237, %v3238
        %v3240 = vand.u32 %v3239, 4294901760
        %3241 = vmatmul.mubr.f32.gmra.mrb[0].mxu0 %v3240
        %v3242 = vpop.f32.mrb[0].mxu0
        %v3243 = vadd.f32 0.0, %v3242
        %v3244 = vpop.f32.mrb[0].mxu0
        %3245 = vmatprep.mubr.f32.mxu0 0.0
        %v3246 = vand.u32 %v3155, 4294901760
        %v3247 = vsub.f32 %v3155, %v3246
        %v3248 = vand.u32 %v3247, 4294901760
        %v3249 = vsub.f32 %v3247, %v3248
        %v3250 = vand.u32 %v3249, 4294901760
        %3251 = vmatmul.mubr.f32.gmra.mrb[0].mxu0 %v3250
        %v3252 = vpop.f32.mrb[0].mxu0
        %v3253 = vadd.f32 0.0, %v3252
        %v3254 = vpop.f32.mrb[0].mxu0
        %3255 = vdwg.mxu0
        %3256 = vmatprep.subr.mxu0 0.0
        %v3257 = vand.u32 %v3144, 4294901760
        %v3258 = vsub.f32 %v3144, %v3257
        %v3259 = vand.u32 %v3258, 4294901760
        %v3260 = vsub.f32 %v3258, %v3259
        %v3261 = vand.u32 %v3260, 4294901760
        %3262 = vmatpush1.msra.mxu0 %v3261
        %3263 = vmatprep.subr.mxu0 0.0
        %v3264 = vand.u32 %v3145, 4294901760
        %v3265 = vsub.f32 %v3145, %v3264
        %v3266 = vand.u32 %v3265, 4294901760
        %v3267 = vsub.f32 %v3265, %v3266
        %v3268 = vand.u32 %v3267, 4294901760
        %3269 = vmatpush1.msra.mxu0 %v3268
        %3270 = vmatprep.subr.mxu0 0.0
        %v3271 = vand.u32 %v3146, 4294901760
        %v3272 = vsub.f32 %v3146, %v3271
        %v3273 = vand.u32 %v3272, 4294901760
        %v3274 = vsub.f32 %v3272, %v3273
        %v3275 = vand.u32 %v3274, 4294901760
        %3276 = vmatpush1.msra.mxu0 %v3275
        %3277 = vmatprep.subr.mxu0 0.0
        %v3278 = vand.u32 %v3147, 4294901760
        %v3279 = vsub.f32 %v3147, %v3278
        %v3280 = vand.u32 %v3279, 4294901760
        %v3281 = vsub.f32 %v3279, %v3280
        %v3282 = vand.u32 %v3281, 4294901760
        %3283 = vmatpush1.msra.mxu0 %v3282
        %3284 = vmatprep.subr.mxu0 0.0
        %3285 = vmatpush1.msra.mxu0 0.0
        %3286 = vmatprep.subr.mxu0 0.0
        %3287 = vmatpush1.msra.mxu0 0.0
        %3288 = vmatprep.subr.mxu0 0.0
        %3289 = vmatpush1.msra.mxu0 0.0
        %3290 = vmatprep.subr.mxu0 0.0
        %3291 = vmatpush1.msra.mxu0 0.0
        %3292 = vmatprep.subr.mxu0 0.0
        %3293 = vmatpush1.msra.mxu0 0.0
        %3294 = vmatprep.subr.mxu0 0.0
        %3295 = vmatpush1.msra.mxu0 0.0
        %3296 = vmatprep.subr.mxu0 0.0
        %3297 = vmatpush1.msra.mxu0 0.0
        %3298 = vmatprep.subr.mxu0 0.0
        %3299 = vmatpush1.msra.mxu0 0.0
        %3300 = vmatprep.subr.mxu0 0.0
        %3301 = vmatpush1.msra.mxu0 0.0
        %3302 = vmatprep.subr.mxu0 0.0
        %3303 = vmatpush1.msra.mxu0 0.0
        %3304 = vmatprep.subr.mxu0 0.0
        %3305 = vmatpush1.msra.mxu0 0.0
        %3306 = vmatprep.subr.mxu0 0.0
        %3307 = vmatpush1.msra.mxu0 0.0
        %3308 = vmatprep.subr.mxu0 0.0
        %3309 = vmatpush1.msra.mxu0 0.0
        %3310 = vmatprep.subr.mxu0 0.0
        %3311 = vmatpush1.msra.mxu0 0.0
        %3312 = vmatprep.subr.mxu0 0.0
        %3313 = vmatpush1.msra.mxu0 0.0
        %3314 = vmatprep.subr.mxu0 0.0
        %3315 = vmatpush1.msra.mxu0 0.0
        %3316 = vmatprep.subr.mxu0 0.0
        %3317 = vmatpush1.msra.mxu0 0.0
        %3318 = vmatprep.subr.mxu0 0.0
        %3319 = vmatpush1.msra.mxu0 0.0
        %3320 = vmatprep.subr.mxu0 0.0
        %3321 = vmatpush1.msra.mxu0 0.0
        %3322 = vmatprep.subr.mxu0 0.0
        %3323 = vmatpush1.msra.mxu0 0.0
        %3324 = vmatprep.subr.mxu0 0.0
        %3325 = vmatpush1.msra.mxu0 0.0
        %3326 = vmatprep.subr.mxu0 0.0
        %3327 = vmatpush1.msra.mxu0 0.0
        %3328 = vmatprep.subr.mxu0 0.0
        %3329 = vmatpush1.msra.mxu0 0.0
        %3330 = vmatprep.subr.mxu0 0.0
        %3331 = vmatpush1.msra.mxu0 0.0
        %3332 = vmatprep.subr.mxu0 0.0
        %3333 = vmatpush1.msra.mxu0 0.0
        %3334 = vmatprep.subr.mxu0 0.0
        %3335 = vmatpush1.msra.mxu0 0.0
        %3336 = vmatprep.subr.mxu0 0.0
        %3337 = vmatpush1.msra.mxu0 0.0
        %3338 = vmatprep.subr.mxu0 0.0
        %3339 = vmatpush1.msra.mxu0 0.0
        %3340 = vmatprep.mubr.f32.mxu0 0.0
        %v3341 = vand.u32 %v3149, 4294901760
        %3342 = vmatmul.mubr.f32.gmra.mrb[0].mxu0 %v3341
        %v3343 = vpop.f32.mrb[0].mxu0
        %v3344 = vadd.f32 %v3233, %v3343
        %v3345 = vpop.f32.mrb[0].mxu0
        %3346 = vmatprep.mubr.f32.mxu0 0.0
        %v3347 = vand.u32 %v3152, 4294901760
        %3348 = vmatmul.mubr.f32.gmra.mrb[0].mxu0 %v3347
        %v3349 = vpop.f32.mrb[0].mxu0
        %v3350 = vadd.f32 %v3243, %v3349
        %v3351 = vpop.f32.mrb[0].mxu0
        %3352 = vmatprep.mubr.f32.mxu0 0.0
        %v3353 = vand.u32 %v3155, 4294901760
        %3354 = vmatmul.mubr.f32.gmra.mrb[0].mxu0 %v3353
        %v3355 = vpop.f32.mrb[0].mxu0
        %v3356 = vadd.f32 %v3253, %v3355
        %v3357 = vpop.f32.mrb[0].mxu0
        %3358 = vdwg.mxu0
        %3359 = vmatprep.subr.mxu0 0.0
        %v3360 = vand.u32 %v3144, 4294901760
        %v3361 = vsub.f32 %v3144, %v3360
        %3362 = vmatpush1.msra.mxu0 %v3361
        %3363 = vmatprep.subr.mxu0 0.0
        %v3364 = vand.u32 %v3145, 4294901760
        %v3365 = vsub.f32 %v3145, %v3364
        %3366 = vmatpush1.msra.mxu0 %v3365
        %3367 = vmatprep.subr.mxu0 0.0
        %v3368 = vand.u32 %v3146, 4294901760
        %v3369 = vsub.f32 %v3146, %v3368
        %3370 = vmatpush1.msra.mxu0 %v3369
        %3371 = vmatprep.subr.mxu0 0.0
        %v3372 = vand.u32 %v3147, 4294901760
        %v3373 = vsub.f32 %v3147, %v3372
        %3374 = vmatpush1.msra.mxu0 %v3373
        %3375 = vmatprep.subr.mxu0 0.0
        %3376 = vmatpush1.msra.mxu0 0.0
        %3377 = vmatprep.subr.mxu0 0.0
        %3378 = vmatpush1.msra.mxu0 0.0
        %3379 = vmatprep.subr.mxu0 0.0
        %3380 = vmatpush1.msra.mxu0 0.0
        %3381 = vmatprep.subr.mxu0 0.0
        %3382 = vmatpush1.msra.mxu0 0.0
        %3383 = vmatprep.subr.mxu0 0.0
        %3384 = vmatpush1.msra.mxu0 0.0
        %3385 = vmatprep.subr.mxu0 0.0
        %3386 = vmatpush1.msra.mxu0 0.0
        %3387 = vmatprep.subr.mxu0 0.0
        %3388 = vmatpush1.msra.mxu0 0.0
        %3389 = vmatprep.subr.mxu0 0.0
        %3390 = vmatpush1.msra.mxu0 0.0
        %3391 = vmatprep.subr.mxu0 0.0
        %3392 = vmatpush1.msra.mxu0 0.0
        %3393 = vmatprep.subr.mxu0 0.0
        %3394 = vmatpush1.msra.mxu0 0.0
        %3395 = vmatprep.subr.mxu0 0.0
        %3396 = vmatpush1.msra.mxu0 0.0
        %3397 = vmatprep.subr.mxu0 0.0
        %3398 = vmatpush1.msra.mxu0 0.0
        %3399 = vmatprep.subr.mxu0 0.0
        %3400 = vmatpush1.msra.mxu0 0.0
        %3401 = vmatprep.subr.mxu0 0.0
        %3402 = vmatpush1.msra.mxu0 0.0
        %3403 = vmatprep.subr.mxu0 0.0
        %3404 = vmatpush1.msra.mxu0 0.0
        %3405 = vmatprep.subr.mxu0 0.0
        %3406 = vmatpush1.msra.mxu0 0.0
        %3407 = vmatprep.subr.mxu0 0.0
        %3408 = vmatpush1.msra.mxu0 0.0
        %3409 = vmatprep.subr.mxu0 0.0
        %3410 = vmatpush1.msra.mxu0 0.0
        %3411 = vmatprep.subr.mxu0 0.0
        %3412 = vmatpush1.msra.mxu0 0.0
        %3413 = vmatprep.subr.mxu0 0.0
        %3414 = vmatpush1.msra.mxu0 0.0
        %3415 = vmatprep.subr.mxu0 0.0
        %3416 = vmatpush1.msra.mxu0 0.0
        %3417 = vmatprep.subr.mxu0 0.0
        %3418 = vmatpush1.msra.mxu0 0.0
        %3419 = vmatprep.subr.mxu0 0.0
        %3420 = vmatpush1.msra.mxu0 0.0
        %3421 = vmatprep.subr.mxu0 0.0
        %3422 = vmatpush1.msra.mxu0 0.0
        %3423 = vmatprep.subr.mxu0 0.0
        %3424 = vmatpush1.msra.mxu0 0.0
        %3425 = vmatprep.subr.mxu0 0.0
        %3426 = vmatpush1.msra.mxu0 0.0
        %3427 = vmatprep.subr.mxu0 0.0
        %3428 = vmatpush1.msra.mxu0 0.0
        %3429 = vmatprep.subr.mxu0 0.0
        %3430 = vmatpush1.msra.mxu0 0.0
        %3431 = vmatprep.mubr.f32.mxu0 0.0
        %v3432 = vand.u32 %v3149, 4294901760
        %v3433 = vsub.f32 %v3149, %v3432
        %3434 = vmatmul.mubr.f32.gmra.mrb[0].mxu0 %v3433
        %v3435 = vpop.f32.mrb[0].mxu0
        %v3436 = vadd.f32 %v3344, %v3435
        %v3437 = vpop.f32.mrb[0].mxu0
        %3438 = vmatprep.mubr.f32.mxu0 0.0
        %v3439 = vand.u32 %v3152, 4294901760
        %v3440 = vsub.f32 %v3152, %v3439
        %3441 = vmatmul.mubr.f32.gmra.mrb[0].mxu0 %v3440
        %v3442 = vpop.f32.mrb[0].mxu0
        %v3443 = vadd.f32 %v3350, %v3442
        %v3444 = vpop.f32.mrb[0].mxu0
        %3445 = vmatprep.mubr.f32.mxu0 0.0
        %v3446 = vand.u32 %v3155, 4294901760
        %v3447 = vsub.f32 %v3155, %v3446
        %3448 = vmatmul.mubr.f32.gmra.mrb[0].mxu0 %v3447
        %v3449 = vpop.f32.mrb[0].mxu0
        %v3450 = vadd.f32 %v3356, %v3449
        %v3451 = vpop.f32.mrb[0].mxu0
        %3452 = vdwg.mxu0
        %3453 = vmatprep.subr.mxu0 0.0
        %v3454 = vand.u32 %v3144, 4294901760
        %3455 = vmatpush1.msra.mxu0 %v3454
        %3456 = vmatprep.subr.mxu0 0.0
        %v3457 = vand.u32 %v3145, 4294901760
        %3458 = vmatpush1.msra.mxu0 %v3457
        %3459 = vmatprep.subr.mxu0 0.0
        %v3460 = vand.u32 %v3146, 4294901760
        %3461 = vmatpush1.msra.mxu0 %v3460
        %3462 = vmatprep.subr.mxu0 0.0
        %v3463 = vand.u32 %v3147, 4294901760
        %3464 = vmatpush1.msra.mxu0 %v3463
        %3465 = vmatprep.subr.mxu0 0.0
        %3466 = vmatpush1.msra.mxu0 0.0
        %3467 = vmatprep.subr.mxu0 0.0
        %3468 = vmatpush1.msra.mxu0 0.0
        %3469 = vmatprep.subr.mxu0 0.0
        %3470 = vmatpush1.msra.mxu0 0.0
        %3471 = vmatprep.subr.mxu0 0.0
        %3472 = vmatpush1.msra.mxu0 0.0
        %3473 = vmatprep.subr.mxu0 0.0
        %3474 = vmatpush1.msra.mxu0 0.0
        %3475 = vmatprep.subr.mxu0 0.0
        %3476 = vmatpush1.msra.mxu0 0.0
        %3477 = vmatprep.subr.mxu0 0.0
        %3478 = vmatpush1.msra.mxu0 0.0
        %3479 = vmatprep.subr.mxu0 0.0
        %3480 = vmatpush1.msra.mxu0 0.0
        %3481 = vmatprep.subr.mxu0 0.0
        %3482 = vmatpush1.msra.mxu0 0.0
        %3483 = vmatprep.subr.mxu0 0.0
        %3484 = vmatpush1.msra.mxu0 0.0
        %3485 = vmatprep.subr.mxu0 0.0
        %3486 = vmatpush1.msra.mxu0 0.0
        %3487 = vmatprep.subr.mxu0 0.0
        %3488 = vmatpush1.msra.mxu0 0.0
        %3489 = vmatprep.subr.mxu0 0.0
        %3490 = vmatpush1.msra.mxu0 0.0
        %3491 = vmatprep.subr.mxu0 0.0
        %3492 = vmatpush1.msra.mxu0 0.0
        %3493 = vmatprep.subr.mxu0 0.0
        %3494 = vmatpush1.msra.mxu0 0.0
        %3495 = vmatprep.subr.mxu0 0.0
        %3496 = vmatpush1.msra.mxu0 0.0
        %3497 = vmatprep.subr.mxu0 0.0
        %3498 = vmatpush1.msra.mxu0 0.0
        %3499 = vmatprep.subr.mxu0 0.0
        %3500 = vmatpush1.msra.mxu0 0.0
        %3501 = vmatprep.subr.mxu0 0.0
        %3502 = vmatpush1.msra.mxu0 0.0
        %3503 = vmatprep.subr.mxu0 0.0
        %3504 = vmatpush1.msra.mxu0 0.0
        %3505 = vmatprep.subr.mxu0 0.0
        %3506 = vmatpush1.msra.mxu0 0.0
        %3507 = vmatprep.subr.mxu0 0.0
        %3508 = vmatpush1.msra.mxu0 0.0
        %3509 = vmatprep.subr.mxu0 0.0
        %3510 = vmatpush1.msra.mxu0 0.0
        %3511 = vmatprep.subr.mxu0 0.0
        %3512 = vmatpush1.msra.mxu0 0.0
        %3513 = vmatprep.subr.mxu0 0.0
        %3514 = vmatpush1.msra.mxu0 0.0
        %3515 = vmatprep.subr.mxu0 0.0
        %3516 = vmatpush1.msra.mxu0 0.0
        %3517 = vmatprep.subr.mxu0 0.0
        %3518 = vmatpush1.msra.mxu0 0.0
        %3519 = vmatprep.subr.mxu0 0.0
        %3520 = vmatpush1.msra.mxu0 0.0
        %3521 = vmatprep.mubr.f32.mxu0 0.0
        %v3522 = vand.u32 %v3149, 4294901760
        %v3523 = vsub.f32 %v3149, %v3522
        %v3524 = vand.u32 %v3523, 4294901760
        %3525 = vmatmul.mubr.f32.gmra.mrb[0].mxu0 %v3524
        %v3526 = vpop.f32.mrb[0].mxu0
        %v3527 = vadd.f32 %v3436, %v3526
        %v3528 = vpop.f32.mrb[0].mxu0
        %3529 = vmatprep.mubr.f32.mxu0 0.0
        %v3530 = vand.u32 %v3152, 4294901760
        %v3531 = vsub.f32 %v3152, %v3530
        %v3532 = vand.u32 %v3531, 4294901760
        %3533 = vmatmul.mubr.f32.gmra.mrb[0].mxu0 %v3532
        %v3534 = vpop.f32.mrb[0].mxu0
        %v3535 = vadd.f32 %v3443, %v3534
        %v3536 = vpop.f32.mrb[0].mxu0
        %3537 = vmatprep.mubr.f32.mxu0 0.0
        %v3538 = vand.u32 %v3155, 4294901760
        %v3539 = vsub.f32 %v3155, %v3538
        %v3540 = vand.u32 %v3539, 4294901760
        %3541 = vmatmul.mubr.f32.gmra.mrb[0].mxu0 %v3540
        %v3542 = vpop.f32.mrb[0].mxu0
        %v3543 = vadd.f32 %v3450, %v3542
        %v3544 = vpop.f32.mrb[0].mxu0
        %3545 = vdwg.mxu0
        %3546 = vmatprep.subr.mxu0 0.0
        %v3547 = vand.u32 %v3144, 4294901760
        %v3548 = vsub.f32 %v3144, %v3547
        %v3549 = vand.u32 %v3548, 4294901760
        %3550 = vmatpush1.msra.mxu0 %v3549
        %3551 = vmatprep.subr.mxu0 0.0
        %v3552 = vand.u32 %v3145, 4294901760
        %v3553 = vsub.f32 %v3145, %v3552
        %v3554 = vand.u32 %v3553, 4294901760
        %3555 = vmatpush1.msra.mxu0 %v3554
        %3556 = vmatprep.subr.mxu0 0.0
        %v3557 = vand.u32 %v3146, 4294901760
        %v3558 = vsub.f32 %v3146, %v3557
        %v3559 = vand.u32 %v3558, 4294901760
        %3560 = vmatpush1.msra.mxu0 %v3559
        %3561 = vmatprep.subr.mxu0 0.0
        %v3562 = vand.u32 %v3147, 4294901760
        %v3563 = vsub.f32 %v3147, %v3562
        %v3564 = vand.u32 %v3563, 4294901760
        %3565 = vmatpush1.msra.mxu0 %v3564
        %3566 = vmatprep.subr.mxu0 0.0
        %3567 = vmatpush1.msra.mxu0 0.0
        %3568 = vmatprep.subr.mxu0 0.0
        %3569 = vmatpush1.msra.mxu0 0.0
        %3570 = vmatprep.subr.mxu0 0.0
        %3571 = vmatpush1.msra.mxu0 0.0
        %3572 = vmatprep.subr.mxu0 0.0
        %3573 = vmatpush1.msra.mxu0 0.0
        %3574 = vmatprep.subr.mxu0 0.0
        %3575 = vmatpush1.msra.mxu0 0.0
        %3576 = vmatprep.subr.mxu0 0.0
        %3577 = vmatpush1.msra.mxu0 0.0
        %3578 = vmatprep.subr.mxu0 0.0
        %3579 = vmatpush1.msra.mxu0 0.0
        %3580 = vmatprep.subr.mxu0 0.0
        %3581 = vmatpush1.msra.mxu0 0.0
        %3582 = vmatprep.subr.mxu0 0.0
        %3583 = vmatpush1.msra.mxu0 0.0
        %3584 = vmatprep.subr.mxu0 0.0
        %3585 = vmatpush1.msra.mxu0 0.0
        %3586 = vmatprep.subr.mxu0 0.0
        %3587 = vmatpush1.msra.mxu0 0.0
        %3588 = vmatprep.subr.mxu0 0.0
        %3589 = vmatpush1.msra.mxu0 0.0
        %3590 = vmatprep.subr.mxu0 0.0
        %3591 = vmatpush1.msra.mxu0 0.0
        %3592 = vmatprep.subr.mxu0 0.0
        %3593 = vmatpush1.msra.mxu0 0.0
        %3594 = vmatprep.subr.mxu0 0.0
        %3595 = vmatpush1.msra.mxu0 0.0
        %3596 = vmatprep.subr.mxu0 0.0
        %3597 = vmatpush1.msra.mxu0 0.0
        %3598 = vmatprep.subr.mxu0 0.0
        %3599 = vmatpush1.msra.mxu0 0.0
        %3600 = vmatprep.subr.mxu0 0.0
        %3601 = vmatpush1.msra.mxu0 0.0
        %3602 = vmatprep.subr.mxu0 0.0
        %3603 = vmatpush1.msra.mxu0 0.0
        %3604 = vmatprep.subr.mxu0 0.0
        %3605 = vmatpush1.msra.mxu0 0.0
        %3606 = vmatprep.subr.mxu0 0.0
        %3607 = vmatpush1.msra.mxu0 0.0
        %3608 = vmatprep.subr.mxu0 0.0
        %3609 = vmatpush1.msra.mxu0 0.0
        %3610 = vmatprep.subr.mxu0 0.0
        %3611 = vmatpush1.msra.mxu0 0.0
        %3612 = vmatprep.subr.mxu0 0.0
        %3613 = vmatpush1.msra.mxu0 0.0
        %3614 = vmatprep.subr.mxu0 0.0
        %3615 = vmatpush1.msra.mxu0 0.0
        %3616 = vmatprep.subr.mxu0 0.0
        %3617 = vmatpush1.msra.mxu0 0.0
        %3618 = vmatprep.subr.mxu0 0.0
        %3619 = vmatpush1.msra.mxu0 0.0
        %3620 = vmatprep.subr.mxu0 0.0
        %3621 = vmatpush1.msra.mxu0 0.0
        %3622 = vmatprep.mubr.f32.mxu0 0.0
        %v3623 = vand.u32 %v3149, 4294901760
        %3624 = vmatmul.mubr.f32.gmra.mrb[0].mxu0 %v3623
        %v3625 = vpop.f32.mrb[0].mxu0
        %v3626 = vadd.f32 %v3527, %v3625
        %v3627 = vpop.f32.mrb[0].mxu0
        %3628 = vmatprep.mubr.f32.mxu0 0.0
        %v3629 = vand.u32 %v3152, 4294901760
        %3630 = vmatmul.mubr.f32.gmra.mrb[0].mxu0 %v3629
        %v3631 = vpop.f32.mrb[0].mxu0
        %v3632 = vadd.f32 %v3535, %v3631
        %v3633 = vpop.f32.mrb[0].mxu0
        %3634 = vmatprep.mubr.f32.mxu0 0.0
        %v3635 = vand.u32 %v3155, 4294901760
        %3636 = vmatmul.mubr.f32.gmra.mrb[0].mxu0 %v3635
        %v3637 = vpop.f32.mrb[0].mxu0
        %v3638 = vadd.f32 %v3543, %v3637
        %v3639 = vpop.f32.mrb[0].mxu0
        %3640 = vdwg.mxu0
        %3641 = vmatprep.subr.mxu0 0.0
        %v3642 = vand.u32 %v3144, 4294901760
        %3643 = vmatpush1.msra.mxu0 %v3642
        %3644 = vmatprep.subr.mxu0 0.0
        %v3645 = vand.u32 %v3145, 4294901760
        %3646 = vmatpush1.msra.mxu0 %v3645
        %3647 = vmatprep.subr.mxu0 0.0
        %v3648 = vand.u32 %v3146, 4294901760
        %3649 = vmatpush1.msra.mxu0 %v3648
        %3650 = vmatprep.subr.mxu0 0.0
        %v3651 = vand.u32 %v3147, 4294901760
        %3652 = vmatpush1.msra.mxu0 %v3651
        %3653 = vmatprep.subr.mxu0 0.0
        %3654 = vmatpush1.msra.mxu0 0.0
        %3655 = vmatprep.subr.mxu0 0.0
        %3656 = vmatpush1.msra.mxu0 0.0
        %3657 = vmatprep.subr.mxu0 0.0
        %3658 = vmatpush1.msra.mxu0 0.0
        %3659 = vmatprep.subr.mxu0 0.0
        %3660 = vmatpush1.msra.mxu0 0.0
        %3661 = vmatprep.subr.mxu0 0.0
        %3662 = vmatpush1.msra.mxu0 0.0
        %3663 = vmatprep.subr.mxu0 0.0
        %3664 = vmatpush1.msra.mxu0 0.0
        %3665 = vmatprep.subr.mxu0 0.0
        %3666 = vmatpush1.msra.mxu0 0.0
        %3667 = vmatprep.subr.mxu0 0.0
        %3668 = vmatpush1.msra.mxu0 0.0
        %3669 = vmatprep.subr.mxu0 0.0
        %3670 = vmatpush1.msra.mxu0 0.0
        %3671 = vmatprep.subr.mxu0 0.0
        %3672 = vmatpush1.msra.mxu0 0.0
        %3673 = vmatprep.subr.mxu0 0.0
        %3674 = vmatpush1.msra.mxu0 0.0
        %3675 = vmatprep.subr.mxu0 0.0
        %3676 = vmatpush1.msra.mxu0 0.0
        %3677 = vmatprep.subr.mxu0 0.0
        %3678 = vmatpush1.msra.mxu0 0.0
        %3679 = vmatprep.subr.mxu0 0.0
        %3680 = vmatpush1.msra.mxu0 0.0
        %3681 = vmatprep.subr.mxu0 0.0
        %3682 = vmatpush1.msra.mxu0 0.0
        %3683 = vmatprep.subr.mxu0 0.0
        %3684 = vmatpush1.msra.mxu0 0.0
        %3685 = vmatprep.subr.mxu0 0.0
        %3686 = vmatpush1.msra.mxu0 0.0
        %3687 = vmatprep.subr.mxu0 0.0
        %3688 = vmatpush1.msra.mxu0 0.0
        %3689 = vmatprep.subr.mxu0 0.0
        %3690 = vmatpush1.msra.mxu0 0.0
        %3691 = vmatprep.subr.mxu0 0.0
        %3692 = vmatpush1.msra.mxu0 0.0
        %3693 = vmatprep.subr.mxu0 0.0
        %3694 = vmatpush1.msra.mxu0 0.0
        %3695 = vmatprep.subr.mxu0 0.0
        %3696 = vmatpush1.msra.mxu0 0.0
        %3697 = vmatprep.subr.mxu0 0.0
        %3698 = vmatpush1.msra.mxu0 0.0
        %3699 = vmatprep.subr.mxu0 0.0
        %3700 = vmatpush1.msra.mxu0 0.0
        %3701 = vmatprep.subr.mxu0 0.0
        %3702 = vmatpush1.msra.mxu0 0.0
        %3703 = vmatprep.subr.mxu0 0.0
        %3704 = vmatpush1.msra.mxu0 0.0
        %3705 = vmatprep.subr.mxu0 0.0
        %3706 = vmatpush1.msra.mxu0 0.0
        %3707 = vmatprep.subr.mxu0 0.0
        %3708 = vmatpush1.msra.mxu0 0.0
        %3709 = vmatprep.mubr.f32.mxu0 0.0
        %v3710 = vand.u32 %v3149, 4294901760
        %3711 = vmatmul.mubr.f32.gmra.mrb[0].mxu0 %v3710
        %v3712 = vpop.f32.mrb[0].mxu0
        %v3713 = vadd.f32 %v3626, %v3712
        %v3714 = vpop.f32.mrb[0].mxu0
        %3715 = vmatprep.mubr.f32.mxu0 0.0
        %v3716 = vand.u32 %v3152, 4294901760
        %3717 = vmatmul.mubr.f32.gmra.mrb[0].mxu0 %v3716
        %v3718 = vpop.f32.mrb[0].mxu0
        %v3719 = vadd.f32 %v3632, %v3718
        %v3720 = vpop.f32.mrb[0].mxu0
        %3721 = vmatprep.mubr.f32.mxu0 0.0
        %v3722 = vand.u32 %v3155, 4294901760
        %3723 = vmatmul.mubr.f32.gmra.mrb[0].mxu0 %v3722
        %v3724 = vpop.f32.mrb[0].mxu0
        %v3725 = vadd.f32 %v3638, %v3724
        %v3726 = vpop.f32.mrb[0].mxu0
        %3727 = vdwg.mxu0
        %v3728 = vadd.f32 %v3125, %v3713
        %v3729 = vadd.f32 %v3131, %v3719
        %v3730 = vadd.f32 %v3137, %v3725
        %v3731 = vld [vmem:[%s4] sm:$0x1]
        %v3733 = vlaneseq
        %v3734 = vshrl.u32 %v3733, 7
        %v3735 = vsub.s32 0, %v3734
        %v3736 = vrot.slane %v3731, %v3735
        %v3738 = vadd.f32 %v3728, %v3736
        %v3739 = vadd.f32 %v3729, %v3736
        %v3740 = vadd.f32 %v3730, %v3736
        %v3741 = vmax.f32 %v3738, 0.0
        %v3742 = vmax.f32 %v3739, 0.0
        %v3743 = vmax.f32 %v3740, 0.0
        %v3744 = vld [vmem:[%s288 + $0x4] sm:$0xff]
        %v3745 = vld [vmem:[%s288 + $0xc] sm:$0xff]
        %v3746 = vld [vmem:[%s288 + $0x14] sm:$0xf]
        %v3747 = vld [vmem:[%s5] sm:$0xf]
        %v3748 = vlaneseq
        %v3749 = vshrl.u32 %v3748, 7
        %v3750 = vadd.s32 %v3749, 8
        %v3751 = vadd.s32 %v3749, 16
        %vm3752 = vcmp.lt.s32.totalorder %v3749, 16
        %vm3753 = vcmp.lt.s32.totalorder %v3750, 16
        %vm3754 = vcmp.lt.s32.totalorder %v3751, 16
        %v3755 = vld [vmem:[%s6] sm:$0x1]
        %v3757 = vlaneseq
        %v3758 = vshrl.u32 %v3757, 7
        %v3759 = vsub.s32 0, %v3758
        %v3760 = vrot.slane %v3755, %v3759
        %v3763 = vsel %vm303, %v3744, 0
        %v3766 = vsel %vm303, %v3745, 0
        %v3769 = vsel %vm303, %v3746, 0
        %v3772 = vsel %vm313, %v3747, 0
        %3774 = vmatprep.subr.mxu0 0.0
        %v3775 = vand.u32 %v3772, 4294901760
        %3776 = vmatpush1.msra.mxu0 %v3775
        %3777 = vmatprep.subr.mxu0 0.0
        %3778 = vmatpush1.msra.mxu0 0.0
        %3779 = vmatprep.subr.mxu0 0.0
        %3780 = vmatpush1.msra.mxu0 0.0
        %3781 = vmatprep.subr.mxu0 0.0
        %3782 = vmatpush1.msra.mxu0 0.0
        %3783 = vmatprep.subr.mxu0 0.0
        %3784 = vmatpush1.msra.mxu0 0.0
        %3785 = vmatprep.subr.mxu0 0.0
        %3786 = vmatpush1.msra.mxu0 0.0
        %3787 = vmatprep.subr.mxu0 0.0
        %3788 = vmatpush1.msra.mxu0 0.0
        %3789 = vmatprep.subr.mxu0 0.0
        %3790 = vmatpush1.msra.mxu0 0.0
        %3791 = vmatprep.subr.mxu0 0.0
        %3792 = vmatpush1.msra.mxu0 0.0
        %3793 = vmatprep.subr.mxu0 0.0
        %3794 = vmatpush1.msra.mxu0 0.0
        %3795 = vmatprep.subr.mxu0 0.0
        %3796 = vmatpush1.msra.mxu0 0.0
        %3797 = vmatprep.subr.mxu0 0.0
        %3798 = vmatpush1.msra.mxu0 0.0
        %3799 = vmatprep.subr.mxu0 0.0
        %3800 = vmatpush1.msra.mxu0 0.0
        %3801 = vmatprep.subr.mxu0 0.0
        %3802 = vmatpush1.msra.mxu0 0.0
        %3803 = vmatprep.subr.mxu0 0.0
        %3804 = vmatpush1.msra.mxu0 0.0
        %3805 = vmatprep.subr.mxu0 0.0
        %3806 = vmatpush1.msra.mxu0 0.0
        %3807 = vmatprep.subr.mxu0 0.0
        %3808 = vmatpush1.msra.mxu0 0.0
        %3809 = vmatprep.subr.mxu0 0.0
        %3810 = vmatpush1.msra.mxu0 0.0
        %3811 = vmatprep.subr.mxu0 0.0
        %3812 = vmatpush1.msra.mxu0 0.0
        %3813 = vmatprep.subr.mxu0 0.0
        %3814 = vmatpush1.msra.mxu0 0.0
        %3815 = vmatprep.subr.mxu0 0.0
        %3816 = vmatpush1.msra.mxu0 0.0
        %3817 = vmatprep.subr.mxu0 0.0
        %3818 = vmatpush1.msra.mxu0 0.0
        %3819 = vmatprep.subr.mxu0 0.0
        %3820 = vmatpush1.msra.mxu0 0.0
        %3821 = vmatprep.subr.mxu0 0.0
        %3822 = vmatpush1.msra.mxu0 0.0
        %3823 = vmatprep.subr.mxu0 0.0
        %3824 = vmatpush1.msra.mxu0 0.0
        %3825 = vmatprep.subr.mxu0 0.0
        %3826 = vmatpush1.msra.mxu0 0.0
        %3827 = vmatprep.subr.mxu0 0.0
        %3828 = vmatpush1.msra.mxu0 0.0
        %3829 = vmatprep.subr.mxu0 0.0
        %3830 = vmatpush1.msra.mxu0 0.0
        %3831 = vmatprep.subr.mxu0 0.0
        %3832 = vmatpush1.msra.mxu0 0.0
        %3833 = vmatprep.subr.mxu0 0.0
        %3834 = vmatpush1.msra.mxu0 0.0
        %3835 = vmatprep.subr.mxu0 0.0
        %3836 = vmatpush1.msra.mxu0 0.0
        %3837 = vmatprep.subr.mxu0 0.0
        %3838 = vmatpush1.msra.mxu0 0.0
        %3839 = vmatprep.mubr.f32.mxu0 0.0
        %v3840 = vand.u32 %v3763, 4294901760
        %v3841 = vsub.f32 %v3763, %v3840
        %v3842 = vand.u32 %v3841, 4294901760
        %v3843 = vsub.f32 %v3841, %v3842
        %v3844 = vand.u32 %v3843, 4294901760
        %3845 = vmatmul.mubr.f32.gmra.mrb[0].mxu0 %v3844
        %v3846 = vpop.f32.mrb[0].mxu0
        %v3847 = vadd.f32 %v3760, %v3846
        %v3848 = vpop.f32.mrb[0].mxu0
        %3849 = vmatprep.mubr.f32.mxu0 0.0
        %v3850 = vand.u32 %v3766, 4294901760
        %v3851 = vsub.f32 %v3766, %v3850
        %v3852 = vand.u32 %v3851, 4294901760
        %v3853 = vsub.f32 %v3851, %v3852
        %v3854 = vand.u32 %v3853, 4294901760
        %3855 = vmatmul.mubr.f32.gmra.mrb[0].mxu0 %v3854
        %v3856 = vpop.f32.mrb[0].mxu0
        %v3857 = vadd.f32 %v3760, %v3856
        %v3858 = vpop.f32.mrb[0].mxu0
        %3859 = vmatprep.mubr.f32.mxu0 0.0
        %v3860 = vand.u32 %v3769, 4294901760
        %v3861 = vsub.f32 %v3769, %v3860
        %v3862 = vand.u32 %v3861, 4294901760
        %v3863 = vsub.f32 %v3861, %v3862
        %v3864 = vand.u32 %v3863, 4294901760
        %3865 = vmatmul.mubr.f32.gmra.mrb[0].mxu0 %v3864
        %v3866 = vpop.f32.mrb[0].mxu0
        %v3867 = vadd.f32 %v3760, %v3866
        %v3868 = vpop.f32.mrb[0].mxu0
        %3869 = vdwg.mxu0
        %3870 = vmatprep.subr.mxu0 0.0
        %v3871 = vand.u32 %v3772, 4294901760
        %v3872 = vsub.f32 %v3772, %v3871
        %v3873 = vand.u32 %v3872, 4294901760
        %v3874 = vsub.f32 %v3872, %v3873
        %v3875 = vand.u32 %v3874, 4294901760
        %3876 = vmatpush1.msra.mxu0 %v3875
        %3877 = vmatprep.subr.mxu0 0.0
        %3878 = vmatpush1.msra.mxu0 0.0
        %3879 = vmatprep.subr.mxu0 0.0
        %3880 = vmatpush1.msra.mxu0 0.0
        %3881 = vmatprep.subr.mxu0 0.0
        %3882 = vmatpush1.msra.mxu0 0.0
        %3883 = vmatprep.subr.mxu0 0.0
        %3884 = vmatpush1.msra.mxu0 0.0
        %3885 = vmatprep.subr.mxu0 0.0
        %3886 = vmatpush1.msra.mxu0 0.0
        %3887 = vmatprep.subr.mxu0 0.0
        %3888 = vmatpush1.msra.mxu0 0.0
        %3889 = vmatprep.subr.mxu0 0.0
        %3890 = vmatpush1.msra.mxu0 0.0
        %3891 = vmatprep.subr.mxu0 0.0
        %3892 = vmatpush1.msra.mxu0 0.0
        %3893 = vmatprep.subr.mxu0 0.0
        %3894 = vmatpush1.msra.mxu0 0.0
        %3895 = vmatprep.subr.mxu0 0.0
        %3896 = vmatpush1.msra.mxu0 0.0
        %3897 = vmatprep.subr.mxu0 0.0
        %3898 = vmatpush1.msra.mxu0 0.0
        %3899 = vmatprep.subr.mxu0 0.0
        %3900 = vmatpush1.msra.mxu0 0.0
        %3901 = vmatprep.subr.mxu0 0.0
        %3902 = vmatpush1.msra.mxu0 0.0
        %3903 = vmatprep.subr.mxu0 0.0
        %3904 = vmatpush1.msra.mxu0 0.0
        %3905 = vmatprep.subr.mxu0 0.0
        %3906 = vmatpush1.msra.mxu0 0.0
        %3907 = vmatprep.subr.mxu0 0.0
        %3908 = vmatpush1.msra.mxu0 0.0
        %3909 = vmatprep.subr.mxu0 0.0
        %3910 = vmatpush1.msra.mxu0 0.0
        %3911 = vmatprep.subr.mxu0 0.0
        %3912 = vmatpush1.msra.mxu0 0.0
        %3913 = vmatprep.subr.mxu0 0.0
        %3914 = vmatpush1.msra.mxu0 0.0
        %3915 = vmatprep.subr.mxu0 0.0
        %3916 = vmatpush1.msra.mxu0 0.0
        %3917 = vmatprep.subr.mxu0 0.0
        %3918 = vmatpush1.msra.mxu0 0.0
        %3919 = vmatprep.subr.mxu0 0.0
        %3920 = vmatpush1.msra.mxu0 0.0
        %3921 = vmatprep.subr.mxu0 0.0
        %3922 = vmatpush1.msra.mxu0 0.0
        %3923 = vmatprep.subr.mxu0 0.0
        %3924 = vmatpush1.msra.mxu0 0.0
        %3925 = vmatprep.subr.mxu0 0.0
        %3926 = vmatpush1.msra.mxu0 0.0
        %3927 = vmatprep.subr.mxu0 0.0
        %3928 = vmatpush1.msra.mxu0 0.0
        %3929 = vmatprep.subr.mxu0 0.0
        %3930 = vmatpush1.msra.mxu0 0.0
        %3931 = vmatprep.subr.mxu0 0.0
        %3932 = vmatpush1.msra.mxu0 0.0
        %3933 = vmatprep.subr.mxu0 0.0
        %3934 = vmatpush1.msra.mxu0 0.0
        %3935 = vmatprep.subr.mxu0 0.0
        %3936 = vmatpush1.msra.mxu0 0.0
        %3937 = vmatprep.subr.mxu0 0.0
        %3938 = vmatpush1.msra.mxu0 0.0
        %3939 = vmatprep.mubr.f32.mxu0 0.0
        %v3940 = vand.u32 %v3763, 4294901760
        %3941 = vmatmul.mubr.f32.gmra.mrb[0].mxu0 %v3940
        %v3942 = vpop.f32.mrb[0].mxu0
        %v3943 = vadd.f32 %v3847, %v3942
        %v3944 = vpop.f32.mrb[0].mxu0
        %3945 = vmatprep.mubr.f32.mxu0 0.0
        %v3946 = vand.u32 %v3766, 4294901760
        %3947 = vmatmul.mubr.f32.gmra.mrb[0].mxu0 %v3946
        %v3948 = vpop.f32.mrb[0].mxu0
        %v3949 = vadd.f32 %v3857, %v3948
        %v3950 = vpop.f32.mrb[0].mxu0
        %3951 = vmatprep.mubr.f32.mxu0 0.0
        %v3952 = vand.u32 %v3769, 4294901760
        %3953 = vmatmul.mubr.f32.gmra.mrb[0].mxu0 %v3952
        %v3954 = vpop.f32.mrb[0].mxu0
        %v3955 = vadd.f32 %v3867, %v3954
        %v3956 = vpop.f32.mrb[0].mxu0
        %3957 = vdwg.mxu0
        %3958 = vmatprep.subr.mxu0 0.0
        %v3959 = vand.u32 %v3772, 4294901760
        %v3960 = vsub.f32 %v3772, %v3959
        %3961 = vmatpush1.msra.mxu0 %v3960
        %3962 = vmatprep.subr.mxu0 0.0
        %3963 = vmatpush1.msra.mxu0 0.0
        %3964 = vmatprep.subr.mxu0 0.0
        %3965 = vmatpush1.msra.mxu0 0.0
        %3966 = vmatprep.subr.mxu0 0.0
        %3967 = vmatpush1.msra.mxu0 0.0
        %3968 = vmatprep.subr.mxu0 0.0
        %3969 = vmatpush1.msra.mxu0 0.0
        %3970 = vmatprep.subr.mxu0 0.0
        %3971 = vmatpush1.msra.mxu0 0.0
        %3972 = vmatprep.subr.mxu0 0.0
        %3973 = vmatpush1.msra.mxu0 0.0
        %3974 = vmatprep.subr.mxu0 0.0
        %3975 = vmatpush1.msra.mxu0 0.0
        %3976 = vmatprep.subr.mxu0 0.0
        %3977 = vmatpush1.msra.mxu0 0.0
        %3978 = vmatprep.subr.mxu0 0.0
        %3979 = vmatpush1.msra.mxu0 0.0
        %3980 = vmatprep.subr.mxu0 0.0
        %3981 = vmatpush1.msra.mxu0 0.0
        %3982 = vmatprep.subr.mxu0 0.0
        %3983 = vmatpush1.msra.mxu0 0.0
        %3984 = vmatprep.subr.mxu0 0.0
        %3985 = vmatpush1.msra.mxu0 0.0
        %3986 = vmatprep.subr.mxu0 0.0
        %3987 = vmatpush1.msra.mxu0 0.0
        %3988 = vmatprep.subr.mxu0 0.0
        %3989 = vmatpush1.msra.mxu0 0.0
        %3990 = vmatprep.subr.mxu0 0.0
        %3991 = vmatpush1.msra.mxu0 0.0
        %3992 = vmatprep.subr.mxu0 0.0
        %3993 = vmatpush1.msra.mxu0 0.0
        %3994 = vmatprep.subr.mxu0 0.0
        %3995 = vmatpush1.msra.mxu0 0.0
        %3996 = vmatprep.subr.mxu0 0.0
        %3997 = vmatpush1.msra.mxu0 0.0
        %3998 = vmatprep.subr.mxu0 0.0
        %3999 = vmatpush1.msra.mxu0 0.0
        %4000 = vmatprep.subr.mxu0 0.0
        %4001 = vmatpush1.msra.mxu0 0.0
        %4002 = vmatprep.subr.mxu0 0.0
        %4003 = vmatpush1.msra.mxu0 0.0
        %4004 = vmatprep.subr.mxu0 0.0
        %4005 = vmatpush1.msra.mxu0 0.0
        %4006 = vmatprep.subr.mxu0 0.0
        %4007 = vmatpush1.msra.mxu0 0.0
        %4008 = vmatprep.subr.mxu0 0.0
        %4009 = vmatpush1.msra.mxu0 0.0
        %4010 = vmatprep.subr.mxu0 0.0
        %4011 = vmatpush1.msra.mxu0 0.0
        %4012 = vmatprep.subr.mxu0 0.0
        %4013 = vmatpush1.msra.mxu0 0.0
        %4014 = vmatprep.subr.mxu0 0.0
        %4015 = vmatpush1.msra.mxu0 0.0
        %4016 = vmatprep.subr.mxu0 0.0
        %4017 = vmatpush1.msra.mxu0 0.0
        %4018 = vmatprep.subr.mxu0 0.0
        %4019 = vmatpush1.msra.mxu0 0.0
        %4020 = vmatprep.subr.mxu0 0.0
        %4021 = vmatpush1.msra.mxu0 0.0
        %4022 = vmatprep.subr.mxu0 0.0
        %4023 = vmatpush1.msra.mxu0 0.0
        %4024 = vmatprep.mubr.f32.mxu0 0.0
        %v4025 = vand.u32 %v3763, 4294901760
        %v4026 = vsub.f32 %v3763, %v4025
        %4027 = vmatmul.mubr.f32.gmra.mrb[0].mxu0 %v4026
        %v4028 = vpop.f32.mrb[0].mxu0
        %v4029 = vadd.f32 %v3943, %v4028
        %v4030 = vpop.f32.mrb[0].mxu0
        %4031 = vmatprep.mubr.f32.mxu0 0.0
        %v4032 = vand.u32 %v3766, 4294901760
        %v4033 = vsub.f32 %v3766, %v4032
        %4034 = vmatmul.mubr.f32.gmra.mrb[0].mxu0 %v4033
        %v4035 = vpop.f32.mrb[0].mxu0
        %v4036 = vadd.f32 %v3949, %v4035
        %v4037 = vpop.f32.mrb[0].mxu0
        %4038 = vmatprep.mubr.f32.mxu0 0.0
        %v4039 = vand.u32 %v3769, 4294901760
        %v4040 = vsub.f32 %v3769, %v4039
        %4041 = vmatmul.mubr.f32.gmra.mrb[0].mxu0 %v4040
        %v4042 = vpop.f32.mrb[0].mxu0
        %v4043 = vadd.f32 %v3955, %v4042
        %v4044 = vpop.f32.mrb[0].mxu0
        %4045 = vdwg.mxu0
        %4046 = vmatprep.subr.mxu0 0.0
        %v4047 = vand.u32 %v3772, 4294901760
        %4048 = vmatpush1.msra.mxu0 %v4047
        %4049 = vmatprep.subr.mxu0 0.0
        %4050 = vmatpush1.msra.mxu0 0.0
        %4051 = vmatprep.subr.mxu0 0.0
        %4052 = vmatpush1.msra.mxu0 0.0
        %4053 = vmatprep.subr.mxu0 0.0
        %4054 = vmatpush1.msra.mxu0 0.0
        %4055 = vmatprep.subr.mxu0 0.0
        %4056 = vmatpush1.msra.mxu0 0.0
        %4057 = vmatprep.subr.mxu0 0.0
        %4058 = vmatpush1.msra.mxu0 0.0
        %4059 = vmatprep.subr.mxu0 0.0
        %4060 = vmatpush1.msra.mxu0 0.0
        %4061 = vmatprep.subr.mxu0 0.0
        %4062 = vmatpush1.msra.mxu0 0.0
        %4063 = vmatprep.subr.mxu0 0.0
        %4064 = vmatpush1.msra.mxu0 0.0
        %4065 = vmatprep.subr.mxu0 0.0
        %4066 = vmatpush1.msra.mxu0 0.0
        %4067 = vmatprep.subr.mxu0 0.0
        %4068 = vmatpush1.msra.mxu0 0.0
        %4069 = vmatprep.subr.mxu0 0.0
        %4070 = vmatpush1.msra.mxu0 0.0
        %4071 = vmatprep.subr.mxu0 0.0
        %4072 = vmatpush1.msra.mxu0 0.0
        %4073 = vmatprep.subr.mxu0 0.0
        %4074 = vmatpush1.msra.mxu0 0.0
        %4075 = vmatprep.subr.mxu0 0.0
        %4076 = vmatpush1.msra.mxu0 0.0
        %4077 = vmatprep.subr.mxu0 0.0
        %4078 = vmatpush1.msra.mxu0 0.0
        %4079 = vmatprep.subr.mxu0 0.0
        %4080 = vmatpush1.msra.mxu0 0.0
        %4081 = vmatprep.subr.mxu0 0.0
        %4082 = vmatpush1.msra.mxu0 0.0
        %4083 = vmatprep.subr.mxu0 0.0
        %4084 = vmatpush1.msra.mxu0 0.0
        %4085 = vmatprep.subr.mxu0 0.0
        %4086 = vmatpush1.msra.mxu0 0.0
        %4087 = vmatprep.subr.mxu0 0.0
        %4088 = vmatpush1.msra.mxu0 0.0
        %4089 = vmatprep.subr.mxu0 0.0
        %4090 = vmatpush1.msra.mxu0 0.0
        %4091 = vmatprep.subr.mxu0 0.0
        %4092 = vmatpush1.msra.mxu0 0.0
        %4093 = vmatprep.subr.mxu0 0.0
        %4094 = vmatpush1.msra.mxu0 0.0
        %4095 = vmatprep.subr.mxu0 0.0
        %4096 = vmatpush1.msra.mxu0 0.0
        %4097 = vmatprep.subr.mxu0 0.0
        %4098 = vmatpush1.msra.mxu0 0.0
        %4099 = vmatprep.subr.mxu0 0.0
        %4100 = vmatpush1.msra.mxu0 0.0
        %4101 = vmatprep.subr.mxu0 0.0
        %4102 = vmatpush1.msra.mxu0 0.0
        %4103 = vmatprep.subr.mxu0 0.0
        %4104 = vmatpush1.msra.mxu0 0.0
        %4105 = vmatprep.subr.mxu0 0.0
        %4106 = vmatpush1.msra.mxu0 0.0
        %4107 = vmatprep.subr.mxu0 0.0
        %4108 = vmatpush1.msra.mxu0 0.0
        %4109 = vmatprep.subr.mxu0 0.0
        %4110 = vmatpush1.msra.mxu0 0.0
        %4111 = vmatprep.mubr.f32.mxu0 0.0
        %v4112 = vand.u32 %v3763, 4294901760
        %v4113 = vsub.f32 %v3763, %v4112
        %v4114 = vand.u32 %v4113, 4294901760
        %4115 = vmatmul.mubr.f32.gmra.mrb[0].mxu0 %v4114
        %v4116 = vpop.f32.mrb[0].mxu0
        %v4117 = vadd.f32 %v4029, %v4116
        %v4118 = vpop.f32.mrb[0].mxu0
        %4119 = vmatprep.mubr.f32.mxu0 0.0
        %v4120 = vand.u32 %v3766, 4294901760
        %v4121 = vsub.f32 %v3766, %v4120
        %v4122 = vand.u32 %v4121, 4294901760
        %4123 = vmatmul.mubr.f32.gmra.mrb[0].mxu0 %v4122
        %v4124 = vpop.f32.mrb[0].mxu0
        %v4125 = vadd.f32 %v4036, %v4124
        %v4126 = vpop.f32.mrb[0].mxu0
        %4127 = vmatprep.mubr.f32.mxu0 0.0
        %v4128 = vand.u32 %v3769, 4294901760
        %v4129 = vsub.f32 %v3769, %v4128
        %v4130 = vand.u32 %v4129, 4294901760
        %4131 = vmatmul.mubr.f32.gmra.mrb[0].mxu0 %v4130
        %v4132 = vpop.f32.mrb[0].mxu0
        %v4133 = vadd.f32 %v4043, %v4132
        %v4134 = vpop.f32.mrb[0].mxu0
        %4135 = vdwg.mxu0
        %4136 = vmatprep.subr.mxu0 0.0
        %v4137 = vand.u32 %v3772, 4294901760
        %v4138 = vsub.f32 %v3772, %v4137
        %v4139 = vand.u32 %v4138, 4294901760
        %4140 = vmatpush1.msra.mxu0 %v4139
        %4141 = vmatprep.subr.mxu0 0.0
        %4142 = vmatpush1.msra.mxu0 0.0
        %4143 = vmatprep.subr.mxu0 0.0
        %4144 = vmatpush1.msra.mxu0 0.0
        %4145 = vmatprep.subr.mxu0 0.0
        %4146 = vmatpush1.msra.mxu0 0.0
        %4147 = vmatprep.subr.mxu0 0.0
        %4148 = vmatpush1.msra.mxu0 0.0
        %4149 = vmatprep.subr.mxu0 0.0
        %4150 = vmatpush1.msra.mxu0 0.0
        %4151 = vmatprep.subr.mxu0 0.0
        %4152 = vmatpush1.msra.mxu0 0.0
        %4153 = vmatprep.subr.mxu0 0.0
        %4154 = vmatpush1.msra.mxu0 0.0
        %4155 = vmatprep.subr.mxu0 0.0
        %4156 = vmatpush1.msra.mxu0 0.0
        %4157 = vmatprep.subr.mxu0 0.0
        %4158 = vmatpush1.msra.mxu0 0.0
        %4159 = vmatprep.subr.mxu0 0.0
        %4160 = vmatpush1.msra.mxu0 0.0
        %4161 = vmatprep.subr.mxu0 0.0
        %4162 = vmatpush1.msra.mxu0 0.0
        %4163 = vmatprep.subr.mxu0 0.0
        %4164 = vmatpush1.msra.mxu0 0.0
        %4165 = vmatprep.subr.mxu0 0.0
        %4166 = vmatpush1.msra.mxu0 0.0
        %4167 = vmatprep.subr.mxu0 0.0
        %4168 = vmatpush1.msra.mxu0 0.0
        %4169 = vmatprep.subr.mxu0 0.0
        %4170 = vmatpush1.msra.mxu0 0.0
        %4171 = vmatprep.subr.mxu0 0.0
        %4172 = vmatpush1.msra.mxu0 0.0
        %4173 = vmatprep.subr.mxu0 0.0
        %4174 = vmatpush1.msra.mxu0 0.0
        %4175 = vmatprep.subr.mxu0 0.0
        %4176 = vmatpush1.msra.mxu0 0.0
        %4177 = vmatprep.subr.mxu0 0.0
        %4178 = vmatpush1.msra.mxu0 0.0
        %4179 = vmatprep.subr.mxu0 0.0
        %4180 = vmatpush1.msra.mxu0 0.0
        %4181 = vmatprep.subr.mxu0 0.0
        %4182 = vmatpush1.msra.mxu0 0.0
        %4183 = vmatprep.subr.mxu0 0.0
        %4184 = vmatpush1.msra.mxu0 0.0
        %4185 = vmatprep.subr.mxu0 0.0
        %4186 = vmatpush1.msra.mxu0 0.0
        %4187 = vmatprep.subr.mxu0 0.0
        %4188 = vmatpush1.msra.mxu0 0.0
        %4189 = vmatprep.subr.mxu0 0.0
        %4190 = vmatpush1.msra.mxu0 0.0
        %4191 = vmatprep.subr.mxu0 0.0
        %4192 = vmatpush1.msra.mxu0 0.0
        %4193 = vmatprep.subr.mxu0 0.0
        %4194 = vmatpush1.msra.mxu0 0.0
        %4195 = vmatprep.subr.mxu0 0.0
        %4196 = vmatpush1.msra.mxu0 0.0
        %4197 = vmatprep.subr.mxu0 0.0
        %4198 = vmatpush1.msra.mxu0 0.0
        %4199 = vmatprep.subr.mxu0 0.0
        %4200 = vmatpush1.msra.mxu0 0.0
        %4201 = vmatprep.subr.mxu0 0.0
        %4202 = vmatpush1.msra.mxu0 0.0
        %4203 = vmatprep.mubr.f32.mxu0 0.0
        %v4204 = vand.u32 %v3763, 4294901760
        %4205 = vmatmul.mubr.f32.gmra.mrb[0].mxu0 %v4204
        %v4206 = vpop.f32.mrb[0].mxu0
        %v4207 = vadd.f32 %v4117, %v4206
        %v4208 = vpop.f32.mrb[0].mxu0
        %4209 = vmatprep.mubr.f32.mxu0 0.0
        %v4210 = vand.u32 %v3766, 4294901760
        %4211 = vmatmul.mubr.f32.gmra.mrb[0].mxu0 %v4210
        %v4212 = vpop.f32.mrb[0].mxu0
        %v4213 = vadd.f32 %v4125, %v4212
        %v4214 = vpop.f32.mrb[0].mxu0
        %4215 = vmatprep.mubr.f32.mxu0 0.0
        %v4216 = vand.u32 %v3769, 4294901760
        %4217 = vmatmul.mubr.f32.gmra.mrb[0].mxu0 %v4216
        %v4218 = vpop.f32.mrb[0].mxu0
        %v4219 = vadd.f32 %v4133, %v4218
        %v4220 = vpop.f32.mrb[0].mxu0
        %4221 = vdwg.mxu0
        %4222 = vmatprep.subr.mxu0 0.0
        %v4223 = vand.u32 %v3772, 4294901760
        %4224 = vmatpush1.msra.mxu0 %v4223
        %4225 = vmatprep.subr.mxu0 0.0
        %4226 = vmatpush1.msra.mxu0 0.0
        %4227 = vmatprep.subr.mxu0 0.0
        %4228 = vmatpush1.msra.mxu0 0.0
        %4229 = vmatprep.subr.mxu0 0.0
        %4230 = vmatpush1.msra.mxu0 0.0
        %4231 = vmatprep.subr.mxu0 0.0
        %4232 = vmatpush1.msra.mxu0 0.0
        %4233 = vmatprep.subr.mxu0 0.0
        %4234 = vmatpush1.msra.mxu0 0.0
        %4235 = vmatprep.subr.mxu0 0.0
        %4236 = vmatpush1.msra.mxu0 0.0
        %4237 = vmatprep.subr.mxu0 0.0
        %4238 = vmatpush1.msra.mxu0 0.0
        %4239 = vmatprep.subr.mxu0 0.0
        %4240 = vmatpush1.msra.mxu0 0.0
        %4241 = vmatprep.subr.mxu0 0.0
        %4242 = vmatpush1.msra.mxu0 0.0
        %4243 = vmatprep.subr.mxu0 0.0
        %4244 = vmatpush1.msra.mxu0 0.0
        %4245 = vmatprep.subr.mxu0 0.0
        %4246 = vmatpush1.msra.mxu0 0.0
        %4247 = vmatprep.subr.mxu0 0.0
        %4248 = vmatpush1.msra.mxu0 0.0
        %4249 = vmatprep.subr.mxu0 0.0
        %4250 = vmatpush1.msra.mxu0 0.0
        %4251 = vmatprep.subr.mxu0 0.0
        %4252 = vmatpush1.msra.mxu0 0.0
        %4253 = vmatprep.subr.mxu0 0.0
        %4254 = vmatpush1.msra.mxu0 0.0
        %4255 = vmatprep.subr.mxu0 0.0
        %4256 = vmatpush1.msra.mxu0 0.0
        %4257 = vmatprep.subr.mxu0 0.0
        %4258 = vmatpush1.msra.mxu0 0.0
        %4259 = vmatprep.subr.mxu0 0.0
        %4260 = vmatpush1.msra.mxu0 0.0
        %4261 = vmatprep.subr.mxu0 0.0
        %4262 = vmatpush1.msra.mxu0 0.0
        %4263 = vmatprep.subr.mxu0 0.0
        %4264 = vmatpush1.msra.mxu0 0.0
        %4265 = vmatprep.subr.mxu0 0.0
        %4266 = vmatpush1.msra.mxu0 0.0
        %4267 = vmatprep.subr.mxu0 0.0
        %4268 = vmatpush1.msra.mxu0 0.0
        %4269 = vmatprep.subr.mxu0 0.0
        %4270 = vmatpush1.msra.mxu0 0.0
        %4271 = vmatprep.subr.mxu0 0.0
        %4272 = vmatpush1.msra.mxu0 0.0
        %4273 = vmatprep.subr.mxu0 0.0
        %4274 = vmatpush1.msra.mxu0 0.0
        %4275 = vmatprep.subr.mxu0 0.0
        %4276 = vmatpush1.msra.mxu0 0.0
        %4277 = vmatprep.subr.mxu0 0.0
        %4278 = vmatpush1.msra.mxu0 0.0
        %4279 = vmatprep.subr.mxu0 0.0
        %4280 = vmatpush1.msra.mxu0 0.0
        %4281 = vmatprep.subr.mxu0 0.0
        %4282 = vmatpush1.msra.mxu0 0.0
        %4283 = vmatprep.subr.mxu0 0.0
        %4284 = vmatpush1.msra.mxu0 0.0
        %4285 = vmatprep.subr.mxu0 0.0
        %4286 = vmatpush1.msra.mxu0 0.0
        %4287 = vmatprep.mubr.f32.mxu0 0.0
        %v4288 = vand.u32 %v3763, 4294901760
        %4289 = vmatmul.mubr.f32.gmra.mrb[0].mxu0 %v4288
        %v4290 = vpop.f32.mrb[0].mxu0
        %v4291 = vadd.f32 %v4207, %v4290
        %v4292 = vpop.f32.mrb[0].mxu0
        %4293 = vmatprep.mubr.f32.mxu0 0.0
        %v4294 = vand.u32 %v3766, 4294901760
        %4295 = vmatmul.mubr.f32.gmra.mrb[0].mxu0 %v4294
        %v4296 = vpop.f32.mrb[0].mxu0
        %v4297 = vadd.f32 %v4213, %v4296
        %v4298 = vpop.f32.mrb[0].mxu0
        %4299 = vmatprep.mubr.f32.mxu0 0.0
        %v4300 = vand.u32 %v3769, 4294901760
        %4301 = vmatmul.mubr.f32.gmra.mrb[0].mxu0 %v4300
        %v4302 = vpop.f32.mrb[0].mxu0
        %v4303 = vadd.f32 %v4219, %v4302
        %v4304 = vpop.f32.mrb[0].mxu0
        %4305 = vdwg.mxu0
        %v4306 = vsel %vm3752, %v4291, 0.0
        %v4307 = vsel %vm3753, %v4297, 0.0
        %v4308 = vsel %vm3754, %v4303, 0.0
        %v4309 = vadd.f32 %v3741, %v4306
        %v4310 = vadd.f32 %v3742, %v4307
        %v4311 = vadd.f32 %v3743, %v4308
        %v4312 = vmax.f32 %v4309, 0.0
        %v4313 = vmax.f32 %v4310, 0.0
        %v4314 = vmax.f32 %v4311, 0.0
        %4315 = vst.msk [vmem:[%s293] sm:$0xff] %vm1961, %v4312
        %4316 = vst.msk [vmem:[%s293 + $0x8] sm:$0xff] %vm1961, %v4313
        %4317 = vst.msk [vmem:[%s293 + $0x10] sm:$0xf] %vm1958, %v4314
        %p4318 = scmp.lt.s32.totalorder %s19, 1
        %s4319 = scalar_select %p4318, %s19, 1
        %s4320 = smul.addr %s4319, 3
        %s4321 = smul.addr %s4320, 8
        %s4322 = scalar_lea.vmem %s7, %s4321
        // Predicated region
        $region53: #{tpu_custom_call.1} parent=47 // pred_check
          %p4323 = pneg %p189
        $region54: #{tpu_custom_call.1} parent=47 // pred_check_branch
          %4325 = sbr.rel (%p4323) target = $region56
        $region55: #{tpu_custom_call.1} parent=47 // pred_region
          _
        $region56: #{tpu_custom_call.1} parent=47 // pred_fallthru
          _
      $region48: #{tpu_custom_call.1} parent=5 // pred_fallthru
        _
      %p4326 = scmp.le.s32.totalorder 2, %s14
      // Predicated region
      $region57: #{tpu_custom_call.1} parent=5 // pred_check
        %p4327 = pneg %p4326
      $region58: #{tpu_custom_call.1} parent=5 // pred_check_branch
        %4329 = sbr.rel (%p4327) target = $region60
      $region59: #{tpu_custom_call.1} parent=5 // pred_region
        %s4330 = ssub.s32 %s14, 2
        // Predicated region
        $region61: #{tpu_custom_call.1} parent=59 // pred_check
          %p4331 = pneg %p195
        $region62: #{tpu_custom_call.1} parent=59 // pred_check_branch
          %4333 = sbr.rel (%p4331) target = $region64
        $region63: #{tpu_custom_call.1} parent=59 // pred_region
          %p4334 = scmp.lt.s32.totalorder %s20, 1
          %s4335 = scalar_select %p4334, %s20, 1
          %s4336 = smul.addr %s4335, 3
          %s4337 = smul.addr %s4336, 8
          %s4338 = scalar_lea.vmem %s7, %s4337
        $region64: #{tpu_custom_call.1} parent=59 // pred_fallthru
          _
      $region60: #{tpu_custom_call.1} parent=5 // pred_fallthru
        _
    $region6: #{tpu_custom_call.1} parent=1 // loop_footer
      %s18 = sadd.s32 1, %s14
    $region7: #{tpu_custom_call.1} parent=1 // loop_footer_branch
      %13 = sbr.rel target = $region3
    $region8: #{tpu_custom_call.1} parent=1 // loop_exit
      _
    %4339 = vsyncpa [#allocation4], 1
    %s4340 = scalar_lea.sflag [#allocation4], 1
    %4341 = vsyncpa %s4340, 1

</llo_original>
